<compile_context>
chip_gen: v6e
topology: v6e:2x2x1
jax: 0.10.0
libtpu: 0.0.40
codegen_flags: <defaults>
</compile_context>

<pallas_src>
import numpy as np
import jax
import jax.numpy as jnp
from jax.experimental import pallas as pl
from jax.experimental.pallas import tpu as pltpu

B = 2              # batch size
L0 = 100           # input sequence length (Flatten -> 32 * 25 = 800)
C = 32             # n_filters
R = C * B          # rows of every conv activation (row = c*B + b)
W = 128            # lane-padded sequence width carried through the conv stack
L1, L2, L3 = 100, 50, 25   # valid sequence widths per conv layer
EPS = 0.8          # BatchNorm1d(32, 0.8) -> eps = 0.8
SLOPE = 0.2        # LeakyReLU negative slope
H1, H2 = 50, 15    # MLP hidden sizes
XROWS = 8          # x padded to 8 sublane rows (tile-aligned tap concat)
NG = C // 4        # 8 head groups of 4 channels (4*25 = 100 lanes per group)


# ---------------------------------------------------------------------------
# fused Pallas kernel: conv stack + BN + LeakyReLU + pools + MLP head
# ---------------------------------------------------------------------------
def disc_kernel(x_ref, cols_ref, a23_ref, ee_ref, w1p_ref, hp_ref, out_ref):
    lane = jax.lax.broadcasted_iota(jnp.int32, (R, W), 1)
    row = jax.lax.broadcasted_iota(jnp.int32, (R, W), 0)
    rowc = jax.lax.broadcasted_iota(jnp.int32, (R, 1), 0)
    even_row = (rowc & 1) == 0

    def lrelu(y):
        return jnp.where(y >= 0, y, SLOPE * y)

    def taps(x):
        # x[:, t-1], x[:, t], x[:, t+1].  Lanes >= valid length are zero in x,
        # so the circular wrap only pollutes lanes that get masked afterwards.
        return (pltpu.roll(x, shift=1, axis=1), x,
                pltpu.roll(x, shift=W - 1, axis=1))

    def pair_rows(col):
        # col (R,1): per-row scalars -> per-channel sum over the B=2 batch
        # rows, broadcast back to both rows.  XLU sublane rolls + VPU select
        # (replaces the previous MXU matvec on the BN critical path).
        ps = col + pltpu.roll(col, shift=R - 1, axis=0)      # col[r] + col[r+1]
        return jnp.where(even_row, ps, pltpu.roll(ps, shift=1, axis=0))

    def bnorm(y, l_valid, g, be):
        # train-mode BatchNorm1d (batch statistics over (batch, length)).
        # y must be zero at lanes >= l_valid.
        # NOTE: var = E[y^2] - E[y]^2 is fine at eps = 0.8.
        inv_n = 1.0 / float(B * l_valid)
        mean = pair_rows(jnp.sum(y, axis=1, keepdims=True)) * inv_n
        msq = pair_rows(jnp.sum(y * y, axis=1, keepdims=True)) * inv_n
        var = msq - mean * mean
        inv = jax.lax.rsqrt(var + EPS)
        return (y - mean) * (inv * g) + be

    def pool(y, ee):
        # MaxPool1d(2): pairwise max via a lane roll, then one even-column
        # selection matmul (also re-zeros padding lanes -> keeps the tap
        # zero-invariant for the next block).
        m = jnp.maximum(y, pltpu.roll(y, shift=W - 1, axis=1))
        return jnp.dot(m, ee, preferred_element_type=jnp.float32)

    # ---- block 1: Conv1d(1->32, k=3, pad=1) + BN + LReLU + MaxPool ---------
    x = x_ref[...]                                           # (8, W), rows>=2 zero
    t0, t1, t2 = taps(x)
    xs = jnp.concatenate([t0, t1, t2], axis=0)               # (24, W), aligned
    h = jnp.dot(cols_ref[:, 0:3 * XROWS], xs,
                preferred_element_type=jnp.float32)          # one MXU push
    h = jnp.where(lane < L1, h, 0.0)                         # (R, W)
    h = pool(lrelu(bnorm(h, L1, cols_ref[:, 24:25], cols_ref[:, 25:26])),
             ee_ref[0])                                      # valid width 50

    # ---- block 2: Conv1d(32->32) + BN + LReLU + MaxPool ---------------------
    t0, t1, t2 = taps(h)
    xs = jnp.concatenate([t0, t1, t2], axis=0)               # (3R, W)
    h = jnp.dot(a23_ref[0], xs, preferred_element_type=jnp.float32)
    h = jnp.where(lane < L2, h, 0.0)
    h = pool(lrelu(bnorm(h, L2, cols_ref[:, 26:27], cols_ref[:, 27:28])),
             ee_ref[1])                                      # valid width 25

    # ---- block 3: Conv1d(32->32) + BN + LReLU (no pool) ---------------------
    t0, t1, t2 = taps(h)
    xs = jnp.concatenate([t0, t1, t2], axis=0)
    h = jnp.dot(a23_ref[1], xs, preferred_element_type=jnp.float32)
    h = jnp.where(lane < L3, h, 0.0)
    h = lrelu(bnorm(h, L3, cols_ref[:, 28:29], cols_ref[:, 29:30]))  # (R, W)

    # ---- head: Flatten + Linear(800,50) + LReLU + Linear(50,15) + LReLU
    #            + Linear(15,1) ----------------------------------------------
    # Pack 4 channels per 25-lane band (lane rolls + row-parity selects on
    # XLU/VPU), then 8 accumulating (8,128)@(128,50) MXU pushes replace the
    # previous 32 tiny per-channel dots and the feat scratch round trip.
    hm = jnp.where(lane < L3, h, 0.0)
    band = (row >> 1) & 3                                    # channel % 4
    p = jnp.where(band == 0, hm, 0.0)
    for k in range(1, 4):
        p = p + jnp.where(band == k,
                          pltpu.roll(hm, shift=L3 * k, axis=1), 0.0)

    y = jnp.dot(p[0:8, :], w1p_ref[0], preferred_element_type=jnp.float32)
    for g in range(1, NG):                                   # back-to-back dots
        y = y + jnp.dot(p[8 * g:8 * (g + 1), :], w1p_ref[g],
                        preferred_element_type=jnp.float32)  # (8, H1)
    # rows 2k+b of y hold per-(k, batch) partial sums; reduce k with rolls.
    y2 = y + pltpu.roll(y, shift=6, axis=0)
    y4 = y2 + pltpu.roll(y2, shift=4, axis=0)
    h1 = lrelu(y4[0:B, :] + hp_ref[H1 + 3:H1 + 4, 0:H1])     # (B, 50)
    h2 = lrelu(jnp.dot(h1, hp_ref[0:H1, 0:H2],
                       preferred_element_type=jnp.float32)
               + hp_ref[H1:H1 + 1, 0:H2])                    # (B, 15)
    # Linear(15,1) as a VPU mul + lane reduce (keeps the tail off the MXU).
    out = (jnp.sum(h2 * hp_ref[H1 + 1:H1 + 2, 0:H2], axis=1, keepdims=True)
           + hp_ref[H1 + 2:H1 + 3, 0:1])                     # (B, 1)
    out_ref[...] = out


# ---------------------------------------------------------------------------
# host-side constant packing (built once)
# ---------------------------------------------------------------------------
def even_select(l_in):
    # (W, W) 0/1 matrix selecting even columns < l_in into the first l_in//2
    # output columns (zero elsewhere -> keeps the padding-lane zero invariant).
    e = np.zeros((W, W), np.float32)
    half = l_in // 2
    e[2 * np.arange(half), np.arange(half)] = 1.0
    return e


def build_consts(params):
    (w1, c1b, g1, be1, w2, c2b, g2, be2, w3, c3b, g3, be3,
     fw1, fb1, fw2, fb2, fw3, fb3) = params
    # conv biases c1b/c2b/c3b intentionally dropped: a per-channel bias before
    # a train-mode BatchNorm is exactly cancelled by the mean subtraction.
    eye = np.eye(B, dtype=np.float32)

    def conv_cat(w):
        wn = np.asarray(w, np.float32)
        return np.concatenate([np.kron(wn[:, :, k], eye) for k in range(3)],
                              axis=1)                        # (R, 3R)

    # block-1 structure matrix, one 8-row slot per tap so the in-kernel tap
    # concat stays sublane-tile aligned.
    w1n = np.asarray(w1, np.float32)
    a1c = np.zeros((R, 3 * XROWS), np.float32)
    for k in range(3):
        a1c[:, XROWS * k:XROWS * k + B] = np.kron(w1n[:, :, k], eye)

    # packed slab: block-1 matrix (cols 0..23) + 6 BN scale/shift columns.
    cols = np.zeros((R, 32), np.float32)
    cols[:, 0:3 * XROWS] = a1c
    for j, v in enumerate((g1, be1, g2, be2, g3, be3)):
        cols[:, 24 + j] = np.repeat(np.asarray(v, np.float32), B)

    a23 = np.stack([conv_cat(w2), conv_cat(w3)])             # (2, R, 3R)
    ee = np.stack([even_select(L1), even_select(L2)])        # (2, W, W)

    # head Linear(800,50) weights repacked per 4-channel group / 25-lane band.
    fw1r = np.asarray(fw1, np.float32).reshape(C, L3, H1)
    w1p = np.zeros((NG, W, H1), np.float32)
    for g in range(NG):
        for k in range(4):
            w1p[g, L3 * k:L3 * (k + 1), :] = fw1r[4 * g + k]

    # all small head params in one slab.
    hp = np.zeros((64, 64), np.float32)
    hp[0:H1, 0:H2] = np.asarray(fw2, np.float32)             # Linear(50,15) W
    hp[H1, 0:H2] = np.asarray(fb2, np.float32)               # Linear(50,15) b
    hp[H1 + 1, 0:H2] = np.asarray(fw3, np.float32).reshape(H2)  # Linear(15,1) W
    hp[H1 + 2, 0] = np.asarray(fb3, np.float32)[0]           # Linear(15,1) b
    hp[H1 + 3, 0:H1] = np.asarray(fb1, np.float32)           # Linear(800,50) b

    return tuple(jnp.asarray(a) for a in (cols, a23, ee, w1p, hp))


# ---------------------------------------------------------------------------
# wrapper: constants hoisted + jitted forward (single un-gridded pallas_call)
# ---------------------------------------------------------------------------
def build_forward(params):
    consts = build_consts(params)

    def vspec():
        return pl.BlockSpec(memory_space=pltpu.MemorySpace.VMEM)

    kernel = pl.pallas_call(
        disc_kernel,
        out_shape=jax.ShapeDtypeStruct((B, 1), jnp.float32),
        in_specs=[vspec() for _ in range(6)],
        out_specs=vspec(),
        cost_estimate=pl.CostEstimate(
            flops=11_600_000, transcendentals=3 * R, bytes_accessed=470_000),
    )

    @jax.jit
    def forward(x):
        xp = jnp.pad(jnp.asarray(x, jnp.float32),
                     ((0, XROWS - B), (0, W - L0)))          # (8, 128)
        return kernel(xp, *consts)

    return forward


# ---------------------------------------------------------------------------
# deterministic parameter init (shapes from the torch module __init__)
# ---------------------------------------------------------------------------
def init_params(key):
    ks = jax.random.split(key, 18)

    def rn(k, shape, scale=0.1):
        return scale * jax.random.normal(k, shape, jnp.float32)

    w1, c1b = rn(ks[0], (C, 1, 3)), rn(ks[1], (C,))
    g1, be1 = 1.0 + rn(ks[2], (C,)), rn(ks[3], (C,))
    w2, c2b = rn(ks[4], (C, C, 3)), rn(ks[5], (C,))
    g2, be2 = 1.0 + rn(ks[6], (C,)), rn(ks[7], (C,))
    w3, c3b = rn(ks[8], (C, C, 3)), rn(ks[9], (C,))
    g3, be3 = 1.0 + rn(ks[10], (C,)), rn(ks[11], (C,))
    fw1, fb1 = rn(ks[12], (C * L3, H1)), rn(ks[13], (H1,))
    fw2, fb2 = rn(ks[14], (H1, H2)), rn(ks[15], (H2,))
    fw3, fb3 = rn(ks[16], (H2, 1)), rn(ks[17], (1,))
    return (w1, c1b, g1, be1, w2, c2b, g2, be2, w3, c3b, g3, be3,
            fw1, fb1, fw2, fb2, fw3, fb3)


# ---------------------------------------------------------------------------
# pure-JAX reference (mirrors the torch forward, NCL layout, biases kept)
# ---------------------------------------------------------------------------
def reference_forward(x, params):
    (w1, c1b, g1, be1, w2, c2b, g2, be2, w3, c3b, g3, be3,
     fw1, fb1, fw2, fb2, fw3, fb3) = params

    def conv1d(h, w, b):
        y = jax.lax.conv_general_dilated(
            h, w, window_strides=(1,), padding=[(1, 1)],
            dimension_numbers=("NCH", "OIH", "NCH"))
        return y + b[None, :, None]

    def bn(h, g, be):
        m = jnp.mean(h, axis=(0, 2), keepdims=True)
        v = jnp.mean((h - m) ** 2, axis=(0, 2), keepdims=True)
        return (h - m) / jnp.sqrt(v + EPS) * g[None, :, None] + be[None, :, None]

    def lrelu(h):
        return jnp.where(h >= 0, h, SLOPE * h)

    def pool(h):
        return jnp.maximum(h[:, :, 0::2], h[:, :, 1::2])

    h = x[:, None, :]                                        # ExpandDimension
    h = pool(lrelu(bn(conv1d(h, w1, c1b), g1, be1)))
    h = pool(lrelu(bn(conv1d(h, w2, c2b), g2, be2)))
    h = lrelu(bn(conv1d(h, w3, c3b), g3, be3))
    flat = h.reshape(B, -1)                                  # (B, 800)
    h = lrelu(flat @ fw1 + fb1)
    h = lrelu(h @ fw2 + fb2)
    return h @ fw3 + fb3


if __name__ == "__main__":
    key = jax.random.PRNGKey(0)
    kx, kp = jax.random.split(key)
    x = jax.random.normal(kx, (B, L0), jnp.float32)
    params = init_params(kp)

    forward = build_forward(params)
    out = jax.block_until_ready(forward(x))
    assert out.shape == (B, 1)

    ref = reference_forward(x, params)
    if not np.allclose(np.asarray(out), np.asarray(ref), rtol=5e-2, atol=5e-2):
        raise AssertionError(
            f"mismatch: pallas={np.asarray(out).ravel()} ref={np.asarray(ref).ravel()}")

    print("KERNEL_OK")
</pallas_src>

<mosaic_0001>
module attributes {stable_mosaic.version = 11 : i64} {
  func.func @disc_kernel(%arg0: memref<8x128xf32, #tpu.memory_space<vmem>>, %arg1: memref<64x32xf32, #tpu.memory_space<vmem>>, %arg2: memref<2x64x192xf32, #tpu.memory_space<vmem>>, %arg3: memref<2x128x128xf32, #tpu.memory_space<vmem>>, %arg4: memref<8x128x50xf32, #tpu.memory_space<vmem>>, %arg5: memref<64x64xf32, #tpu.memory_space<vmem>>, %arg6: memref<2x1xf32, #tpu.memory_space<vmem>>) attributes {dimension_semantics = [], scalar_prefetch = 0 : i64, scratch_operands = 0 : i64, tpu.core_type = #tpu.core_type<tc>} {
    %0 = tpu.iota {dimensions = array<i32: 1>} : vector<64x128xi32>
    %1 = tpu.iota {dimensions = array<i32: 0>} : vector<64x128xi32>
    %2 = tpu.iota {dimensions = array<i32: 0>} : vector<64x1xi32>
    %c1_i32 = arith.constant 1 : i32
    %3 = vector.broadcast %c1_i32 : i32 to vector<64x1xi32>
    %4 = arith.andi %2, %3 : vector<64x1xi32>
    %c0_i32 = arith.constant 0 : i32
    %5 = vector.broadcast %c0_i32 : i32 to vector<64x1xi32>
    %6 = arith.cmpi eq, %4, %5 : vector<64x1xi32>
    %c0 = arith.constant 0 : index
    %c0_0 = arith.constant 0 : index
    %7 = vector.load %arg0[%c0, %c0_0] : memref<8x128xf32, #tpu.memory_space<vmem>>, vector<8x128xf32>
    %c1_i32_1 = arith.constant 1 : i32
    %8 = tpu.dynamic_rotate %7 by %c1_i32_1 dim 1 : vector<8x128xf32>, i32 -> vector<8x128xf32>
    %c127_i32 = arith.constant 127 : i32
    %9 = tpu.dynamic_rotate %7 by %c127_i32 dim 1 : vector<8x128xf32>, i32 -> vector<8x128xf32>
    %10 = tpu.concatenate %8, %7, %9 in 0 : vector<8x128xf32>, vector<8x128xf32>, vector<8x128xf32> -> vector<24x128xf32>
    %c0_2 = arith.constant 0 : index
    %c0_3 = arith.constant 0 : index
    %11 = vector.load %arg1[%c0_2, %c0_3] : memref<64x32xf32, #tpu.memory_space<vmem>>, vector<64x24xf32>
    %cst = arith.constant dense<0.000000e+00> : vector<64x128xf32>
    %12 = tpu.matmul %11, %10, %cst {dimension_numbers = #tpu.dot_dimension_numbers<[1], [0], [0], [1], [0, 0, 1, 1], [], []>} : vector<64x24xf32>, vector<24x128xf32>, vector<64x128xf32> -> vector<64x128xf32>
    %c100_i32 = arith.constant 100 : i32
    %13 = vector.broadcast %c100_i32 : i32 to vector<64x128xi32>
    %14 = arith.cmpi slt, %0, %13 : vector<64x128xi32>
    %cst_4 = arith.constant 0.000000e+00 : f32
    %15 = vector.broadcast %cst_4 : f32 to vector<64x128xf32>
    %16 = arith.select %14, %12, %15 : vector<64x128xi1>, vector<64x128xf32>
    %c0_5 = arith.constant 0 : index
    %c24 = arith.constant 24 : index
    %17 = vector.load %arg1[%c0_5, %c24] : memref<64x32xf32, #tpu.memory_space<vmem>>, vector<64x1xf32>
    %c0_6 = arith.constant 0 : index
    %c25 = arith.constant 25 : index
    %18 = vector.load %arg1[%c0_6, %c25] : memref<64x32xf32, #tpu.memory_space<vmem>>, vector<64x1xf32>
    %cst_7 = arith.constant dense<0.000000e+00> : vector<64xf32>
    %19 = vector.multi_reduction <add>, %16, %cst_7 [1] : vector<64x128xf32> to vector<64xf32>
    %20 = vector.shape_cast %19 : vector<64xf32> to vector<64x1xf32>
    %c63_i32 = arith.constant 63 : i32
    %21 = tpu.dynamic_rotate %20 by %c63_i32 dim 0 : vector<64x1xf32>, i32 -> vector<64x1xf32>
    %22 = arith.addf %20, %21 : vector<64x1xf32>
    %c1_i32_8 = arith.constant 1 : i32
    %23 = tpu.dynamic_rotate %22 by %c1_i32_8 dim 0 : vector<64x1xf32>, i32 -> vector<64x1xf32>
    %24 = arith.select %6, %22, %23 : vector<64x1xi1>, vector<64x1xf32>
    %cst_9 = arith.constant 5.000000e-03 : f32
    %25 = vector.broadcast %cst_9 : f32 to vector<64x1xf32>
    %26 = arith.mulf %24, %25 : vector<64x1xf32>
    %27 = arith.mulf %16, %16 : vector<64x128xf32>
    %cst_10 = arith.constant dense<0.000000e+00> : vector<64xf32>
    %28 = vector.multi_reduction <add>, %27, %cst_10 [1] : vector<64x128xf32> to vector<64xf32>
    %29 = vector.shape_cast %28 : vector<64xf32> to vector<64x1xf32>
    %c63_i32_11 = arith.constant 63 : i32
    %30 = tpu.dynamic_rotate %29 by %c63_i32_11 dim 0 : vector<64x1xf32>, i32 -> vector<64x1xf32>
    %31 = arith.addf %29, %30 : vector<64x1xf32>
    %c1_i32_12 = arith.constant 1 : i32
    %32 = tpu.dynamic_rotate %31 by %c1_i32_12 dim 0 : vector<64x1xf32>, i32 -> vector<64x1xf32>
    %33 = arith.select %6, %31, %32 : vector<64x1xi1>, vector<64x1xf32>
    %cst_13 = arith.constant 5.000000e-03 : f32
    %34 = vector.broadcast %cst_13 : f32 to vector<64x1xf32>
    %35 = arith.mulf %33, %34 : vector<64x1xf32>
    %36 = arith.mulf %26, %26 : vector<64x1xf32>
    %37 = arith.subf %35, %36 : vector<64x1xf32>
    %cst_14 = arith.constant 8.000000e-01 : f32
    %38 = vector.broadcast %cst_14 : f32 to vector<64x1xf32>
    %39 = arith.addf %37, %38 : vector<64x1xf32>
    %40 = math.rsqrt %39 : vector<64x1xf32>
    %41 = vector.broadcast %26 : vector<64x1xf32> to vector<64x128xf32>
    %42 = arith.subf %16, %41 : vector<64x128xf32>
    %43 = arith.mulf %40, %17 : vector<64x1xf32>
    %44 = vector.broadcast %43 : vector<64x1xf32> to vector<64x128xf32>
    %45 = arith.mulf %42, %44 : vector<64x128xf32>
    %46 = vector.broadcast %18 : vector<64x1xf32> to vector<64x128xf32>
    %47 = arith.addf %45, %46 : vector<64x128xf32>
    %cst_15 = arith.constant 0.000000e+00 : f32
    %48 = vector.broadcast %cst_15 : f32 to vector<64x128xf32>
    %49 = arith.cmpf oge, %47, %48 : vector<64x128xf32>
    %cst_16 = arith.constant 2.000000e-01 : f32
    %50 = vector.broadcast %cst_16 : f32 to vector<64x128xf32>
    %51 = arith.mulf %50, %47 : vector<64x128xf32>
    %52 = arith.select %49, %47, %51 : vector<64x128xi1>, vector<64x128xf32>
    %c0_17 = arith.constant 0 : index
    %c0_18 = arith.constant 0 : index
    %c0_19 = arith.constant 0 : index
    %53 = vector.load %arg3[%c0_17, %c0_18, %c0_19] : memref<2x128x128xf32, #tpu.memory_space<vmem>>, vector<1x128x128xf32>
    %54 = vector.shape_cast %53 : vector<1x128x128xf32> to vector<128x128xf32>
    %c127_i32_20 = arith.constant 127 : i32
    %55 = tpu.dynamic_rotate %52 by %c127_i32_20 dim 1 : vector<64x128xf32>, i32 -> vector<64x128xf32>
    %56 = arith.maximumf %52, %55 : vector<64x128xf32>
    %cst_21 = arith.constant dense<0.000000e+00> : vector<64x128xf32>
    %57 = tpu.matmul %56, %54, %cst_21 {dimension_numbers = #tpu.dot_dimension_numbers<[1], [0], [0], [1], [0, 0, 1, 1], [], []>} : vector<64x128xf32>, vector<128x128xf32>, vector<64x128xf32> -> vector<64x128xf32>
    %c1_i32_22 = arith.constant 1 : i32
    %58 = tpu.dynamic_rotate %57 by %c1_i32_22 dim 1 : vector<64x128xf32>, i32 -> vector<64x128xf32>
    %c127_i32_23 = arith.constant 127 : i32
    %59 = tpu.dynamic_rotate %57 by %c127_i32_23 dim 1 : vector<64x128xf32>, i32 -> vector<64x128xf32>
    %60 = tpu.concatenate %58, %57, %59 in 0 : vector<64x128xf32>, vector<64x128xf32>, vector<64x128xf32> -> vector<192x128xf32>
    %c0_24 = arith.constant 0 : index
    %c0_25 = arith.constant 0 : index
    %c0_26 = arith.constant 0 : index
    %61 = vector.load %arg2[%c0_24, %c0_25, %c0_26] : memref<2x64x192xf32, #tpu.memory_space<vmem>>, vector<1x64x192xf32>
    %62 = vector.shape_cast %61 : vector<1x64x192xf32> to vector<64x192xf32>
    %cst_27 = arith.constant dense<0.000000e+00> : vector<64x128xf32>
    %63 = tpu.matmul %62, %60, %cst_27 {dimension_numbers = #tpu.dot_dimension_numbers<[1], [0], [0], [1], [0, 0, 1, 1], [], []>} : vector<64x192xf32>, vector<192x128xf32>, vector<64x128xf32> -> vector<64x128xf32>
    %c50_i32 = arith.constant 50 : i32
    %64 = vector.broadcast %c50_i32 : i32 to vector<64x128xi32>
    %65 = arith.cmpi slt, %0, %64 : vector<64x128xi32>
    %cst_28 = arith.constant 0.000000e+00 : f32
    %66 = vector.broadcast %cst_28 : f32 to vector<64x128xf32>
    %67 = arith.select %65, %63, %66 : vector<64x128xi1>, vector<64x128xf32>
    %c0_29 = arith.constant 0 : index
    %c26 = arith.constant 26 : index
    %68 = vector.load %arg1[%c0_29, %c26] : memref<64x32xf32, #tpu.memory_space<vmem>>, vector<64x1xf32>
    %c0_30 = arith.constant 0 : index
    %c27 = arith.constant 27 : index
    %69 = vector.load %arg1[%c0_30, %c27] : memref<64x32xf32, #tpu.memory_space<vmem>>, vector<64x1xf32>
    %cst_31 = arith.constant dense<0.000000e+00> : vector<64xf32>
    %70 = vector.multi_reduction <add>, %67, %cst_31 [1] : vector<64x128xf32> to vector<64xf32>
    %71 = vector.shape_cast %70 : vector<64xf32> to vector<64x1xf32>
    %c63_i32_32 = arith.constant 63 : i32
    %72 = tpu.dynamic_rotate %71 by %c63_i32_32 dim 0 : vector<64x1xf32>, i32 -> vector<64x1xf32>
    %73 = arith.addf %71, %72 : vector<64x1xf32>
    %c1_i32_33 = arith.constant 1 : i32
    %74 = tpu.dynamic_rotate %73 by %c1_i32_33 dim 0 : vector<64x1xf32>, i32 -> vector<64x1xf32>
    %75 = arith.select %6, %73, %74 : vector<64x1xi1>, vector<64x1xf32>
    %cst_34 = arith.constant 0.00999999977 : f32
    %76 = vector.broadcast %cst_34 : f32 to vector<64x1xf32>
    %77 = arith.mulf %75, %76 : vector<64x1xf32>
    %78 = arith.mulf %67, %67 : vector<64x128xf32>
    %cst_35 = arith.constant dense<0.000000e+00> : vector<64xf32>
    %79 = vector.multi_reduction <add>, %78, %cst_35 [1] : vector<64x128xf32> to vector<64xf32>
    %80 = vector.shape_cast %79 : vector<64xf32> to vector<64x1xf32>
    %c63_i32_36 = arith.constant 63 : i32
    %81 = tpu.dynamic_rotate %80 by %c63_i32_36 dim 0 : vector<64x1xf32>, i32 -> vector<64x1xf32>
    %82 = arith.addf %80, %81 : vector<64x1xf32>
    %c1_i32_37 = arith.constant 1 : i32
    %83 = tpu.dynamic_rotate %82 by %c1_i32_37 dim 0 : vector<64x1xf32>, i32 -> vector<64x1xf32>
    %84 = arith.select %6, %82, %83 : vector<64x1xi1>, vector<64x1xf32>
    %cst_38 = arith.constant 0.00999999977 : f32
    %85 = vector.broadcast %cst_38 : f32 to vector<64x1xf32>
    %86 = arith.mulf %84, %85 : vector<64x1xf32>
    %87 = arith.mulf %77, %77 : vector<64x1xf32>
    %88 = arith.subf %86, %87 : vector<64x1xf32>
    %cst_39 = arith.constant 8.000000e-01 : f32
    %89 = vector.broadcast %cst_39 : f32 to vector<64x1xf32>
    %90 = arith.addf %88, %89 : vector<64x1xf32>
    %91 = math.rsqrt %90 : vector<64x1xf32>
    %92 = vector.broadcast %77 : vector<64x1xf32> to vector<64x128xf32>
    %93 = arith.subf %67, %92 : vector<64x128xf32>
    %94 = arith.mulf %91, %68 : vector<64x1xf32>
    %95 = vector.broadcast %94 : vector<64x1xf32> to vector<64x128xf32>
    %96 = arith.mulf %93, %95 : vector<64x128xf32>
    %97 = vector.broadcast %69 : vector<64x1xf32> to vector<64x128xf32>
    %98 = arith.addf %96, %97 : vector<64x128xf32>
    %cst_40 = arith.constant 0.000000e+00 : f32
    %99 = vector.broadcast %cst_40 : f32 to vector<64x128xf32>
    %100 = arith.cmpf oge, %98, %99 : vector<64x128xf32>
    %cst_41 = arith.constant 2.000000e-01 : f32
    %101 = vector.broadcast %cst_41 : f32 to vector<64x128xf32>
    %102 = arith.mulf %101, %98 : vector<64x128xf32>
    %103 = arith.select %100, %98, %102 : vector<64x128xi1>, vector<64x128xf32>
    %c1 = arith.constant 1 : index
    %c0_42 = arith.constant 0 : index
    %c0_43 = arith.constant 0 : index
    %104 = vector.load %arg3[%c1, %c0_42, %c0_43] : memref<2x128x128xf32, #tpu.memory_space<vmem>>, vector<1x128x128xf32>
    %105 = vector.shape_cast %104 : vector<1x128x128xf32> to vector<128x128xf32>
    %c127_i32_44 = arith.constant 127 : i32
    %106 = tpu.dynamic_rotate %103 by %c127_i32_44 dim 1 : vector<64x128xf32>, i32 -> vector<64x128xf32>
    %107 = arith.maximumf %103, %106 : vector<64x128xf32>
    %cst_45 = arith.constant dense<0.000000e+00> : vector<64x128xf32>
    %108 = tpu.matmul %107, %105, %cst_45 {dimension_numbers = #tpu.dot_dimension_numbers<[1], [0], [0], [1], [0, 0, 1, 1], [], []>} : vector<64x128xf32>, vector<128x128xf32>, vector<64x128xf32> -> vector<64x128xf32>
    %c1_i32_46 = arith.constant 1 : i32
    %109 = tpu.dynamic_rotate %108 by %c1_i32_46 dim 1 : vector<64x128xf32>, i32 -> vector<64x128xf32>
    %c127_i32_47 = arith.constant 127 : i32
    %110 = tpu.dynamic_rotate %108 by %c127_i32_47 dim 1 : vector<64x128xf32>, i32 -> vector<64x128xf32>
    %111 = tpu.concatenate %109, %108, %110 in 0 : vector<64x128xf32>, vector<64x128xf32>, vector<64x128xf32> -> vector<192x128xf32>
    %c1_48 = arith.constant 1 : index
    %c0_49 = arith.constant 0 : index
    %c0_50 = arith.constant 0 : index
    %112 = vector.load %arg2[%c1_48, %c0_49, %c0_50] : memref<2x64x192xf32, #tpu.memory_space<vmem>>, vector<1x64x192xf32>
    %113 = vector.shape_cast %112 : vector<1x64x192xf32> to vector<64x192xf32>
    %cst_51 = arith.constant dense<0.000000e+00> : vector<64x128xf32>
    %114 = tpu.matmul %113, %111, %cst_51 {dimension_numbers = #tpu.dot_dimension_numbers<[1], [0], [0], [1], [0, 0, 1, 1], [], []>} : vector<64x192xf32>, vector<192x128xf32>, vector<64x128xf32> -> vector<64x128xf32>
    %c25_i32 = arith.constant 25 : i32
    %115 = vector.broadcast %c25_i32 : i32 to vector<64x128xi32>
    %116 = arith.cmpi slt, %0, %115 : vector<64x128xi32>
    %cst_52 = arith.constant 0.000000e+00 : f32
    %117 = vector.broadcast %cst_52 : f32 to vector<64x128xf32>
    %118 = arith.select %116, %114, %117 : vector<64x128xi1>, vector<64x128xf32>
    %c0_53 = arith.constant 0 : index
    %c28 = arith.constant 28 : index
    %119 = vector.load %arg1[%c0_53, %c28] : memref<64x32xf32, #tpu.memory_space<vmem>>, vector<64x1xf32>
    %c0_54 = arith.constant 0 : index
    %c29 = arith.constant 29 : index
    %120 = vector.load %arg1[%c0_54, %c29] : memref<64x32xf32, #tpu.memory_space<vmem>>, vector<64x1xf32>
    %cst_55 = arith.constant dense<0.000000e+00> : vector<64xf32>
    %121 = vector.multi_reduction <add>, %118, %cst_55 [1] : vector<64x128xf32> to vector<64xf32>
    %122 = vector.shape_cast %121 : vector<64xf32> to vector<64x1xf32>
    %c63_i32_56 = arith.constant 63 : i32
    %123 = tpu.dynamic_rotate %122 by %c63_i32_56 dim 0 : vector<64x1xf32>, i32 -> vector<64x1xf32>
    %124 = arith.addf %122, %123 : vector<64x1xf32>
    %c1_i32_57 = arith.constant 1 : i32
    %125 = tpu.dynamic_rotate %124 by %c1_i32_57 dim 0 : vector<64x1xf32>, i32 -> vector<64x1xf32>
    %126 = arith.select %6, %124, %125 : vector<64x1xi1>, vector<64x1xf32>
    %cst_58 = arith.constant 2.000000e-02 : f32
    %127 = vector.broadcast %cst_58 : f32 to vector<64x1xf32>
    %128 = arith.mulf %126, %127 : vector<64x1xf32>
    %129 = arith.mulf %118, %118 : vector<64x128xf32>
    %cst_59 = arith.constant dense<0.000000e+00> : vector<64xf32>
    %130 = vector.multi_reduction <add>, %129, %cst_59 [1] : vector<64x128xf32> to vector<64xf32>
    %131 = vector.shape_cast %130 : vector<64xf32> to vector<64x1xf32>
    %c63_i32_60 = arith.constant 63 : i32
    %132 = tpu.dynamic_rotate %131 by %c63_i32_60 dim 0 : vector<64x1xf32>, i32 -> vector<64x1xf32>
    %133 = arith.addf %131, %132 : vector<64x1xf32>
    %c1_i32_61 = arith.constant 1 : i32
    %134 = tpu.dynamic_rotate %133 by %c1_i32_61 dim 0 : vector<64x1xf32>, i32 -> vector<64x1xf32>
    %135 = arith.select %6, %133, %134 : vector<64x1xi1>, vector<64x1xf32>
    %cst_62 = arith.constant 2.000000e-02 : f32
    %136 = vector.broadcast %cst_62 : f32 to vector<64x1xf32>
    %137 = arith.mulf %135, %136 : vector<64x1xf32>
    %138 = arith.mulf %128, %128 : vector<64x1xf32>
    %139 = arith.subf %137, %138 : vector<64x1xf32>
    %cst_63 = arith.constant 8.000000e-01 : f32
    %140 = vector.broadcast %cst_63 : f32 to vector<64x1xf32>
    %141 = arith.addf %139, %140 : vector<64x1xf32>
    %142 = math.rsqrt %141 : vector<64x1xf32>
    %143 = vector.broadcast %128 : vector<64x1xf32> to vector<64x128xf32>
    %144 = arith.subf %118, %143 : vector<64x128xf32>
    %145 = arith.mulf %142, %119 : vector<64x1xf32>
    %146 = vector.broadcast %145 : vector<64x1xf32> to vector<64x128xf32>
    %147 = arith.mulf %144, %146 : vector<64x128xf32>
    %148 = vector.broadcast %120 : vector<64x1xf32> to vector<64x128xf32>
    %149 = arith.addf %147, %148 : vector<64x128xf32>
    %cst_64 = arith.constant 0.000000e+00 : f32
    %150 = vector.broadcast %cst_64 : f32 to vector<64x128xf32>
    %151 = arith.cmpf oge, %149, %150 : vector<64x128xf32>
    %cst_65 = arith.constant 2.000000e-01 : f32
    %152 = vector.broadcast %cst_65 : f32 to vector<64x128xf32>
    %153 = arith.mulf %152, %149 : vector<64x128xf32>
    %154 = arith.select %151, %149, %153 : vector<64x128xi1>, vector<64x128xf32>
    %c25_i32_66 = arith.constant 25 : i32
    %155 = vector.broadcast %c25_i32_66 : i32 to vector<64x128xi32>
    %156 = arith.cmpi slt, %0, %155 : vector<64x128xi32>
    %cst_67 = arith.constant 0.000000e+00 : f32
    %157 = vector.broadcast %cst_67 : f32 to vector<64x128xf32>
    %158 = arith.select %156, %154, %157 : vector<64x128xi1>, vector<64x128xf32>
    %c1_i32_68 = arith.constant 1 : i32
    %159 = vector.broadcast %c1_i32_68 : i32 to vector<64x128xi32>
    %160 = arith.shrsi %1, %159 : vector<64x128xi32>
    %c3_i32 = arith.constant 3 : i32
    %161 = vector.broadcast %c3_i32 : i32 to vector<64x128xi32>
    %162 = arith.andi %160, %161 : vector<64x128xi32>
    %c0_i32_69 = arith.constant 0 : i32
    %163 = vector.broadcast %c0_i32_69 : i32 to vector<64x128xi32>
    %164 = arith.cmpi eq, %162, %163 : vector<64x128xi32>
    %cst_70 = arith.constant 0.000000e+00 : f32
    %165 = vector.broadcast %cst_70 : f32 to vector<64x128xf32>
    %166 = arith.select %164, %158, %165 : vector<64x128xi1>, vector<64x128xf32>
    %c1_i32_71 = arith.constant 1 : i32
    %167 = vector.broadcast %c1_i32_71 : i32 to vector<64x128xi32>
    %168 = arith.cmpi eq, %162, %167 : vector<64x128xi32>
    %c25_i32_72 = arith.constant 25 : i32
    %169 = tpu.dynamic_rotate %158 by %c25_i32_72 dim 1 : vector<64x128xf32>, i32 -> vector<64x128xf32>
    %cst_73 = arith.constant 0.000000e+00 : f32
    %170 = vector.broadcast %cst_73 : f32 to vector<64x128xf32>
    %171 = arith.select %168, %169, %170 : vector<64x128xi1>, vector<64x128xf32>
    %172 = arith.addf %166, %171 : vector<64x128xf32>
    %c2_i32 = arith.constant 2 : i32
    %173 = vector.broadcast %c2_i32 : i32 to vector<64x128xi32>
    %174 = arith.cmpi eq, %162, %173 : vector<64x128xi32>
    %c50_i32_74 = arith.constant 50 : i32
    %175 = tpu.dynamic_rotate %158 by %c50_i32_74 dim 1 : vector<64x128xf32>, i32 -> vector<64x128xf32>
    %cst_75 = arith.constant 0.000000e+00 : f32
    %176 = vector.broadcast %cst_75 : f32 to vector<64x128xf32>
    %177 = arith.select %174, %175, %176 : vector<64x128xi1>, vector<64x128xf32>
    %178 = arith.addf %172, %177 : vector<64x128xf32>
    %c3_i32_76 = arith.constant 3 : i32
    %179 = vector.broadcast %c3_i32_76 : i32 to vector<64x128xi32>
    %180 = arith.cmpi eq, %162, %179 : vector<64x128xi32>
    %c75_i32 = arith.constant 75 : i32
    %181 = tpu.dynamic_rotate %158 by %c75_i32 dim 1 : vector<64x128xf32>, i32 -> vector<64x128xf32>
    %cst_77 = arith.constant 0.000000e+00 : f32
    %182 = vector.broadcast %cst_77 : f32 to vector<64x128xf32>
    %183 = arith.select %180, %181, %182 : vector<64x128xi1>, vector<64x128xf32>
    %184 = arith.addf %178, %183 : vector<64x128xf32>
    %185 = vector.extract_strided_slice %184 {offsets = [0, 0], sizes = [8, 128], strides = [1, 1]} : vector<64x128xf32> to vector<8x128xf32>
    %c0_78 = arith.constant 0 : index
    %c0_79 = arith.constant 0 : index
    %c0_80 = arith.constant 0 : index
    %186 = vector.load %arg4[%c0_78, %c0_79, %c0_80] : memref<8x128x50xf32, #tpu.memory_space<vmem>>, vector<1x128x50xf32>
    %187 = vector.shape_cast %186 : vector<1x128x50xf32> to vector<128x50xf32>
    %cst_81 = arith.constant dense<0.000000e+00> : vector<8x50xf32>
    %188 = tpu.matmul %185, %187, %cst_81 {dimension_numbers = #tpu.dot_dimension_numbers<[1], [0], [0], [1], [0, 0, 1, 1], [], []>} : vector<8x128xf32>, vector<128x50xf32>, vector<8x50xf32> -> vector<8x50xf32>
    %189 = vector.extract_strided_slice %184 {offsets = [8, 0], sizes = [8, 128], strides = [1, 1]} : vector<64x128xf32> to vector<8x128xf32>
    %c1_82 = arith.constant 1 : index
    %c0_83 = arith.constant 0 : index
    %c0_84 = arith.constant 0 : index
    %190 = vector.load %arg4[%c1_82, %c0_83, %c0_84] : memref<8x128x50xf32, #tpu.memory_space<vmem>>, vector<1x128x50xf32>
    %191 = vector.shape_cast %190 : vector<1x128x50xf32> to vector<128x50xf32>
    %cst_85 = arith.constant dense<0.000000e+00> : vector<8x50xf32>
    %192 = tpu.matmul %189, %191, %cst_85 {dimension_numbers = #tpu.dot_dimension_numbers<[1], [0], [0], [1], [0, 0, 1, 1], [], []>} : vector<8x128xf32>, vector<128x50xf32>, vector<8x50xf32> -> vector<8x50xf32>
    %193 = arith.addf %188, %192 : vector<8x50xf32>
    %194 = vector.extract_strided_slice %184 {offsets = [16, 0], sizes = [8, 128], strides = [1, 1]} : vector<64x128xf32> to vector<8x128xf32>
    %c2 = arith.constant 2 : index
    %c0_86 = arith.constant 0 : index
    %c0_87 = arith.constant 0 : index
    %195 = vector.load %arg4[%c2, %c0_86, %c0_87] : memref<8x128x50xf32, #tpu.memory_space<vmem>>, vector<1x128x50xf32>
    %196 = vector.shape_cast %195 : vector<1x128x50xf32> to vector<128x50xf32>
    %cst_88 = arith.constant dense<0.000000e+00> : vector<8x50xf32>
    %197 = tpu.matmul %194, %196, %cst_88 {dimension_numbers = #tpu.dot_dimension_numbers<[1], [0], [0], [1], [0, 0, 1, 1], [], []>} : vector<8x128xf32>, vector<128x50xf32>, vector<8x50xf32> -> vector<8x50xf32>
    %198 = arith.addf %193, %197 : vector<8x50xf32>
    %199 = vector.extract_strided_slice %184 {offsets = [24, 0], sizes = [8, 128], strides = [1, 1]} : vector<64x128xf32> to vector<8x128xf32>
    %c3 = arith.constant 3 : index
    %c0_89 = arith.constant 0 : index
    %c0_90 = arith.constant 0 : index
    %200 = vector.load %arg4[%c3, %c0_89, %c0_90] : memref<8x128x50xf32, #tpu.memory_space<vmem>>, vector<1x128x50xf32>
    %201 = vector.shape_cast %200 : vector<1x128x50xf32> to vector<128x50xf32>
    %cst_91 = arith.constant dense<0.000000e+00> : vector<8x50xf32>
    %202 = tpu.matmul %199, %201, %cst_91 {dimension_numbers = #tpu.dot_dimension_numbers<[1], [0], [0], [1], [0, 0, 1, 1], [], []>} : vector<8x128xf32>, vector<128x50xf32>, vector<8x50xf32> -> vector<8x50xf32>
    %203 = arith.addf %198, %202 : vector<8x50xf32>
    %204 = vector.extract_strided_slice %184 {offsets = [32, 0], sizes = [8, 128], strides = [1, 1]} : vector<64x128xf32> to vector<8x128xf32>
    %c4 = arith.constant 4 : index
    %c0_92 = arith.constant 0 : index
    %c0_93 = arith.constant 0 : index
    %205 = vector.load %arg4[%c4, %c0_92, %c0_93] : memref<8x128x50xf32, #tpu.memory_space<vmem>>, vector<1x128x50xf32>
    %206 = vector.shape_cast %205 : vector<1x128x50xf32> to vector<128x50xf32>
    %cst_94 = arith.constant dense<0.000000e+00> : vector<8x50xf32>
    %207 = tpu.matmul %204, %206, %cst_94 {dimension_numbers = #tpu.dot_dimension_numbers<[1], [0], [0], [1], [0, 0, 1, 1], [], []>} : vector<8x128xf32>, vector<128x50xf32>, vector<8x50xf32> -> vector<8x50xf32>
    %208 = arith.addf %203, %207 : vector<8x50xf32>
    %209 = vector.extract_strided_slice %184 {offsets = [40, 0], sizes = [8, 128], strides = [1, 1]} : vector<64x128xf32> to vector<8x128xf32>
    %c5 = arith.constant 5 : index
    %c0_95 = arith.constant 0 : index
    %c0_96 = arith.constant 0 : index
    %210 = vector.load %arg4[%c5, %c0_95, %c0_96] : memref<8x128x50xf32, #tpu.memory_space<vmem>>, vector<1x128x50xf32>
    %211 = vector.shape_cast %210 : vector<1x128x50xf32> to vector<128x50xf32>
    %cst_97 = arith.constant dense<0.000000e+00> : vector<8x50xf32>
    %212 = tpu.matmul %209, %211, %cst_97 {dimension_numbers = #tpu.dot_dimension_numbers<[1], [0], [0], [1], [0, 0, 1, 1], [], []>} : vector<8x128xf32>, vector<128x50xf32>, vector<8x50xf32> -> vector<8x50xf32>
    %213 = arith.addf %208, %212 : vector<8x50xf32>
    %214 = vector.extract_strided_slice %184 {offsets = [48, 0], sizes = [8, 128], strides = [1, 1]} : vector<64x128xf32> to vector<8x128xf32>
    %c6 = arith.constant 6 : index
    %c0_98 = arith.constant 0 : index
    %c0_99 = arith.constant 0 : index
    %215 = vector.load %arg4[%c6, %c0_98, %c0_99] : memref<8x128x50xf32, #tpu.memory_space<vmem>>, vector<1x128x50xf32>
    %216 = vector.shape_cast %215 : vector<1x128x50xf32> to vector<128x50xf32>
    %cst_100 = arith.constant dense<0.000000e+00> : vector<8x50xf32>
    %217 = tpu.matmul %214, %216, %cst_100 {dimension_numbers = #tpu.dot_dimension_numbers<[1], [0], [0], [1], [0, 0, 1, 1], [], []>} : vector<8x128xf32>, vector<128x50xf32>, vector<8x50xf32> -> vector<8x50xf32>
    %218 = arith.addf %213, %217 : vector<8x50xf32>
    %219 = vector.extract_strided_slice %184 {offsets = [56, 0], sizes = [8, 128], strides = [1, 1]} : vector<64x128xf32> to vector<8x128xf32>
    %c7 = arith.constant 7 : index
    %c0_101 = arith.constant 0 : index
    %c0_102 = arith.constant 0 : index
    %220 = vector.load %arg4[%c7, %c0_101, %c0_102] : memref<8x128x50xf32, #tpu.memory_space<vmem>>, vector<1x128x50xf32>
    %221 = vector.shape_cast %220 : vector<1x128x50xf32> to vector<128x50xf32>
    %cst_103 = arith.constant dense<0.000000e+00> : vector<8x50xf32>
    %222 = tpu.matmul %219, %221, %cst_103 {dimension_numbers = #tpu.dot_dimension_numbers<[1], [0], [0], [1], [0, 0, 1, 1], [], []>} : vector<8x128xf32>, vector<128x50xf32>, vector<8x50xf32> -> vector<8x50xf32>
    %223 = arith.addf %218, %222 : vector<8x50xf32>
    %c6_i32 = arith.constant 6 : i32
    %224 = tpu.dynamic_rotate %223 by %c6_i32 dim 0 : vector<8x50xf32>, i32 -> vector<8x50xf32>
    %225 = arith.addf %223, %224 : vector<8x50xf32>
    %c4_i32 = arith.constant 4 : i32
    %226 = tpu.dynamic_rotate %225 by %c4_i32 dim 0 : vector<8x50xf32>, i32 -> vector<8x50xf32>
    %227 = arith.addf %225, %226 : vector<8x50xf32>
    %228 = vector.extract_strided_slice %227 {offsets = [0, 0], sizes = [2, 50], strides = [1, 1]} : vector<8x50xf32> to vector<2x50xf32>
    %c53 = arith.constant 53 : index
    %c0_104 = arith.constant 0 : index
    %229 = vector.load %arg5[%c53, %c0_104] : memref<64x64xf32, #tpu.memory_space<vmem>>, vector<1x50xf32>
    %230 = vector.broadcast %229 : vector<1x50xf32> to vector<2x50xf32>
    %231 = arith.addf %228, %230 : vector<2x50xf32>
    %cst_105 = arith.constant 0.000000e+00 : f32
    %232 = vector.broadcast %cst_105 : f32 to vector<2x50xf32>
    %233 = arith.cmpf oge, %231, %232 : vector<2x50xf32>
    %cst_106 = arith.constant 2.000000e-01 : f32
    %234 = vector.broadcast %cst_106 : f32 to vector<2x50xf32>
    %235 = arith.mulf %234, %231 : vector<2x50xf32>
    %236 = arith.select %233, %231, %235 : vector<2x50xi1>, vector<2x50xf32>
    %c0_107 = arith.constant 0 : index
    %c0_108 = arith.constant 0 : index
    %237 = vector.load %arg5[%c0_107, %c0_108] : memref<64x64xf32, #tpu.memory_space<vmem>>, vector<50x15xf32>
    %cst_109 = arith.constant dense<0.000000e+00> : vector<2x15xf32>
    %238 = tpu.matmul %236, %237, %cst_109 {dimension_numbers = #tpu.dot_dimension_numbers<[1], [0], [0], [1], [0, 0, 1, 1], [], []>} : vector<2x50xf32>, vector<50x15xf32>, vector<2x15xf32> -> vector<2x15xf32>
    %c50 = arith.constant 50 : index
    %c0_110 = arith.constant 0 : index
    %239 = vector.load %arg5[%c50, %c0_110] : memref<64x64xf32, #tpu.memory_space<vmem>>, vector<1x15xf32>
    %240 = vector.broadcast %239 : vector<1x15xf32> to vector<2x15xf32>
    %241 = arith.addf %238, %240 : vector<2x15xf32>
    %cst_111 = arith.constant 0.000000e+00 : f32
    %242 = vector.broadcast %cst_111 : f32 to vector<2x15xf32>
    %243 = arith.cmpf oge, %241, %242 : vector<2x15xf32>
    %cst_112 = arith.constant 2.000000e-01 : f32
    %244 = vector.broadcast %cst_112 : f32 to vector<2x15xf32>
    %245 = arith.mulf %244, %241 : vector<2x15xf32>
    %246 = arith.select %243, %241, %245 : vector<2x15xi1>, vector<2x15xf32>
    %c51 = arith.constant 51 : index
    %c0_113 = arith.constant 0 : index
    %247 = vector.load %arg5[%c51, %c0_113] : memref<64x64xf32, #tpu.memory_space<vmem>>, vector<1x15xf32>
    %248 = vector.broadcast %247 : vector<1x15xf32> to vector<2x15xf32>
    %249 = arith.mulf %246, %248 : vector<2x15xf32>
    %cst_114 = arith.constant dense<0.000000e+00> : vector<2xf32>
    %250 = vector.multi_reduction <add>, %249, %cst_114 [1] : vector<2x15xf32> to vector<2xf32>
    %251 = vector.shape_cast %250 : vector<2xf32> to vector<2x1xf32>
    %c52 = arith.constant 52 : index
    %c0_115 = arith.constant 0 : index
    %252 = vector.load %arg5[%c52, %c0_115] : memref<64x64xf32, #tpu.memory_space<vmem>>, vector<1x1xf32>
    %253 = vector.broadcast %252 : vector<1x1xf32> to vector<2x1xf32>
    %254 = arith.addf %251, %253 : vector<2x1xf32>
    %c0_116 = arith.constant 0 : index
    %c0_117 = arith.constant 0 : index
    %255 = vector.load %arg6[%c0_116, %c0_117] : memref<2x1xf32, #tpu.memory_space<vmem>>, vector<2x1xf32>
    tpu.vector_store %arg6[%c0_116, %c0_117], %254 {strides = array<i32>} : memref<2x1xf32, #tpu.memory_space<vmem>>, vector<2x1xf32>,
    return
  }
}

</mosaic_0001>

<llo_original>
// kernel: forward.1
$region0: #{forward.1}
  #allocation0 [shape = 'u32[]', space=smem, size = 0x4, offset = 0x4, fixed_abs, tag = 'smem constant byte address 0x4 - core index']
  #allocation1 [shape = 'u32[144,128]{1,0:T(1,128)}', space=vmem, size = 0x12000, scoped, tag = 'internal scratch']
  %s0 = inlined_call_operand.vmem [shape: f32[8,128], index: 0, kind: input, shape index: {}]
  %s1 = inlined_call_operand.hbm [shape: f32[64,32], index: 1, kind: input, shape index: {}]
  %s2 = inlined_call_operand.hbm [shape: f32[2,64,192], index: 2, kind: input, shape index: {}]
  %s3 = inlined_call_operand.hbm [shape: f32[2,128,128], index: 3, kind: input, shape index: {}]
  %s4 = inlined_call_operand.hbm [shape: f32[8,128,50], index: 4, kind: input, shape index: {}]
  %s5 = inlined_call_operand.hbm [shape: f32[64,64], index: 5, kind: input, shape index: {}]
  %s6 = inlined_call_operand.vmem [shape: f32[2,1], index: 6, kind: output, shape index: {}]
  %s7 = sld [smem:[#allocation0]]
  $region54: #{forward.1} parent=0
    _
  %s9 = ssub.s32 1, %s7
  %s10 = scalar_select 0, %s9, %s7
  $region1: #{forward.1} parent=0
    #allocation2 [shape = 'u8[32768]{0}', space=vmem, size = 0x8000, scoped, tag = 'input window, operand 1, single buffered']
    #allocation3 [shape = 's32[1]{0}', space=sflag, size = 0x4, scoped, tag = 'scoped memory for forward.1']
    #allocation4 [shape = 'u8[131072]{0}', space=vmem, size = 0x20000, scoped, tag = 'input window, operand 2, single buffered']
    #allocation5 [shape = 's32[1]{0}', space=sflag, size = 0x4, scoped, tag = 'scoped memory for forward.1']
    #allocation6 [shape = 'u8[131072]{0}', space=vmem, size = 0x20000, scoped, tag = 'input window, operand 3, single buffered']
    #allocation7 [shape = 'u8[524288]{0}', space=vmem, size = 0x80000, scoped, tag = 'input window, operand 4, single buffered']
    #allocation8 [shape = 's32[1]{0}', space=sflag, size = 0x4, scoped, tag = 'scoped memory for forward.1']
    #allocation9 [shape = 'u8[32768]{0}', space=vmem, size = 0x8000, scoped, tag = 'input window, operand 5, single buffered']
    %11 = vsyncpa [#allocation3], 0
    %12 = vsyncpa [#allocation5], 0
    %13 = vsyncpa [#allocation8], 0
    // Predicated region
    $region2: #{forward.1} parent=1 // pred_check
      _
    $region3: #{forward.1} parent=1 // pred_check_branch
      %15 = sbr.rel (0) target = $region5
    $region4: #{forward.1} parent=1 // pred_region
      _
    $region5: #{forward.1} parent=1 // pred_fallthru
      _
    // Predicated region
    $region6: #{forward.1} parent=1 // pred_check
      _
    $region7: #{forward.1} parent=1 // pred_check_branch
      %17 = sbr.rel (0) target = $region9
    $region8: #{forward.1} parent=1 // pred_region
      %s19 = ssub.s32 1024, 1024
      %20 = vsyncadd [#allocation3], %s19
      %s21 = sshll.u32 [#allocation2], 4
      %s22 = int_to_ptr.vmem [resolvable:$true] %s21
      %27 = dma.hbm_to_vmem [thread:$0]  %s1, 1024, %s22, [#allocation3], 128, 128, 8
    $region9: #{forward.1} parent=1 // pred_fallthru
      _
    // Predicated region
    $region10: #{forward.1} parent=1 // pred_check
      _
    $region11: #{forward.1} parent=1 // pred_check_branch
      %29 = sbr.rel (0) target = $region13
    $region12: #{forward.1} parent=1 // pred_region
      %s31 = ssub.s32 4096, 4096
      %32 = vsyncadd [#allocation5], %s31
      %s33 = sshll.u32 [#allocation4], 4
      %s34 = int_to_ptr.vmem [resolvable:$true] %s33
      %39 = dma.hbm_to_vmem [thread:$0]  %s2, 4096, %s34, [#allocation5], 256, 256, 16
    $region13: #{forward.1} parent=1 // pred_fallthru
      _
    // Predicated region
    $region14: #{forward.1} parent=1 // pred_check
      _
    $region15: #{forward.1} parent=1 // pred_check_branch
      %41 = sbr.rel (0) target = $region17
    $region16: #{forward.1} parent=1 // pred_region
      %s43 = ssub.s32 4096, 4096
      %44 = vsyncadd [#allocation5], %s43
      %s45 = sshll.u32 [#allocation6], 4
      %s46 = int_to_ptr.vmem [resolvable:$true] %s45
      %51 = dma.hbm_to_vmem [thread:$0]  %s3, 4096, %s46, [#allocation5], 128, 128, 8
    $region17: #{forward.1} parent=1 // pred_fallthru
      _
    // Predicated region
    $region18: #{forward.1} parent=1 // pred_check
      _
    $region19: #{forward.1} parent=1 // pred_check_branch
      %53 = sbr.rel (0) target = $region21
    $region20: #{forward.1} parent=1 // pred_region
      %s55 = ssub.s32 16384, 16384
      %56 = vsyncadd [#allocation8], %s55
      %s57 = sshll.u32 [#allocation7], 4
      %s58 = int_to_ptr.vmem [resolvable:$true] %s57
      %63 = dma.hbm_to_vmem [thread:$0]  %s4, 16384, %s58, [#allocation8], 128, 128, 8
    $region21: #{forward.1} parent=1 // pred_fallthru
      _
    // Predicated region
    $region22: #{forward.1} parent=1 // pred_check
      _
    $region23: #{forward.1} parent=1 // pred_check_branch
      %65 = sbr.rel (0) target = $region25
    $region24: #{forward.1} parent=1 // pred_region
      %s67 = ssub.s32 1024, 1024
      %68 = vsyncadd [#allocation8], %s67
      %s69 = sshll.u32 [#allocation9], 4
      %s70 = int_to_ptr.vmem [resolvable:$true] %s69
      %75 = dma.hbm_to_vmem [thread:$0]  %s5, 1024, %s70, [#allocation8], 128, 128, 8
    $region25: #{forward.1} parent=1 // pred_fallthru
      _
    // Predicated region
    $region26: #{forward.1} parent=1 // pred_check
      _
    $region27: #{forward.1} parent=1 // pred_check_branch
      %77 = sbr.rel (0) target = $region29
    $region28: #{forward.1} parent=1 // pred_region
      %78 = dma.done [#allocation3], 1024
    $region29: #{forward.1} parent=1 // pred_fallthru
      _
    // Predicated region
    $region30: #{forward.1} parent=1 // pred_check
      _
    $region31: #{forward.1} parent=1 // pred_check_branch
      %80 = sbr.rel (0) target = $region33
    $region32: #{forward.1} parent=1 // pred_region
      %81 = dma.done [#allocation5], 4096
    $region33: #{forward.1} parent=1 // pred_fallthru
      _
    // Predicated region
    $region34: #{forward.1} parent=1 // pred_check
      _
    $region35: #{forward.1} parent=1 // pred_check_branch
      %83 = sbr.rel (0) target = $region37
    $region36: #{forward.1} parent=1 // pred_region
      %84 = dma.done [#allocation5], 4096
    $region37: #{forward.1} parent=1 // pred_fallthru
      _
    // Predicated region
    $region38: #{forward.1} parent=1 // pred_check
      _
    $region39: #{forward.1} parent=1 // pred_check_branch
      %86 = sbr.rel (0) target = $region41
    $region40: #{forward.1} parent=1 // pred_region
      %87 = dma.done [#allocation8], 16384
    $region41: #{forward.1} parent=1 // pred_fallthru
      _
    // Predicated region
    $region42: #{forward.1} parent=1 // pred_check
      _
    $region43: #{forward.1} parent=1 // pred_check_branch
      %89 = sbr.rel (0) target = $region45
    $region44: #{forward.1} parent=1 // pred_region
      %90 = dma.done [#allocation8], 1024
    $region45: #{forward.1} parent=1 // pred_fallthru
      _
    %v91 = vlaneseq
    %v92 = vand.u32 %v91, 127
    %v93 = vlaneseq
    %v94 = vshrl.u32 %v93, 7
    %v95 = vadd.s32 %v94, 8
    %v96 = vadd.s32 %v94, 16
    %v97 = vadd.s32 %v94, 24
    %v98 = vadd.s32 %v94, 32
    %v99 = vadd.s32 %v94, 40
    %v100 = vadd.s32 %v94, 48
    %v101 = vadd.s32 %v94, 56
    %v102 = vand.u32 %v94, 1
    %v103 = vand.u32 %v95, 1
    %v104 = vand.u32 %v96, 1
    %v105 = vand.u32 %v97, 1
    %v106 = vand.u32 %v98, 1
    %v107 = vand.u32 %v99, 1
    %v108 = vand.u32 %v100, 1
    %v109 = vand.u32 %v101, 1
    %vm110 = vcmp.eq.s32.totalorder %v102, 0
    %vm111 = vcmp.eq.s32.totalorder %v103, 0
    %vm112 = vcmp.eq.s32.totalorder %v104, 0
    %vm113 = vcmp.eq.s32.totalorder %v105, 0
    %vm114 = vcmp.eq.s32.totalorder %v106, 0
    %vm115 = vcmp.eq.s32.totalorder %v107, 0
    %vm116 = vcmp.eq.s32.totalorder %v108, 0
    %vm117 = vcmp.eq.s32.totalorder %v109, 0
    %v118 = vld [vmem:[%s0] sm:$0xff]
    %119 = vrot.lane.b32.xlu0 %v118, 1
    %v120 = vpop.permute.xlu0 %119
    %121 = vrot.lane.b32.xlu0 %v118, 127
    %v122 = vpop.permute.xlu0 %121
    %v123 = vld [vmem:[#allocation2] sm:$0xff]
    %v124 = vld [vmem:[#allocation2 + $0x8] sm:$0xff]
    %v125 = vld [vmem:[#allocation2 + $0x10] sm:$0xff]
    %v126 = vld [vmem:[#allocation2 + $0x18] sm:$0xff]
    %v127 = vld [vmem:[#allocation2 + $0x20] sm:$0xff]
    %v128 = vld [vmem:[#allocation2 + $0x28] sm:$0xff]
    %v129 = vld [vmem:[#allocation2 + $0x30] sm:$0xff]
    %v130 = vld [vmem:[#allocation2 + $0x38] sm:$0xff]
    %vm131 = vcmask 195584
    %v133 = vsel %vm131, %v123, 0
    %v136 = vsel %vm131, %v124, 0
    %v139 = vsel %vm131, %v125, 0
    %v142 = vsel %vm131, %v126, 0
    %v145 = vsel %vm131, %v127, 0
    %v148 = vsel %vm131, %v128, 0
    %v151 = vsel %vm131, %v129, 0
    %v154 = vsel %vm131, %v130, 0
    %156 = vmatprep.subr.mxu0 0.0
    %157 = vmatpush1.msra.mxu0 0.0
    %158 = vmatprep.subr.mxu0 0.0
    %159 = vmatpush1.msra.mxu0 0.0
    %160 = vmatprep.subr.mxu0 0.0
    %161 = vmatpush1.msra.mxu0 0.0
    %162 = vmatprep.subr.mxu0 0.0
    %163 = vmatpush1.msra.mxu0 0.0
    %164 = vmatprep.subr.mxu0 0.0
    %165 = vmatpush1.msra.mxu0 0.0
    %166 = vmatprep.subr.mxu0 0.0
    %167 = vmatpush1.msra.mxu0 0.0
    %168 = vmatprep.subr.mxu0 0.0
    %169 = vmatpush1.msra.mxu0 0.0
    %170 = vmatprep.subr.mxu0 0.0
    %171 = vmatpush1.msra.mxu0 0.0
    %172 = vmatprep.subr.mxu0 0.0
    %173 = vmatpush1.msra.mxu0 0.0
    %174 = vmatprep.subr.mxu0 0.0
    %175 = vmatpush1.msra.mxu0 0.0
    %176 = vmatprep.subr.mxu0 0.0
    %177 = vmatpush1.msra.mxu0 0.0
    %178 = vmatprep.subr.mxu0 0.0
    %179 = vmatpush1.msra.mxu0 0.0
    %180 = vmatprep.subr.mxu0 0.0
    %181 = vmatpush1.msra.mxu0 0.0
    %182 = vmatprep.subr.mxu0 0.0
    %183 = vmatpush1.msra.mxu0 %v122
    %184 = vmatprep.subr.mxu0 0.0
    %185 = vmatpush1.msra.mxu0 %v118
    %186 = vmatprep.subr.mxu0 0.0
    %187 = vmatpush1.msra.mxu0 %v120
    %188 = vmatprep.subr.mxu0 0.0
    %189 = vmatpush2.msra.mxu0 0.0
    %190 = vmatprep.subr.mxu0 0.0
    %191 = vmatpush2.msra.mxu0 0.0
    %192 = vmatprep.subr.mxu0 0.0
    %193 = vmatpush2.msra.mxu0 0.0
    %194 = vmatprep.subr.mxu0 0.0
    %195 = vmatpush2.msra.mxu0 0.0
    %196 = vmatprep.subr.mxu0 0.0
    %197 = vmatpush2.msra.mxu0 0.0
    %198 = vmatprep.subr.mxu0 0.0
    %199 = vmatpush2.msra.mxu0 0.0
    %200 = vmatprep.subr.mxu0 0.0
    %201 = vmatpush2.msra.mxu0 0.0
    %202 = vmatprep.subr.mxu0 0.0
    %203 = vmatpush2.msra.mxu0 0.0
    %204 = vmatprep.subr.mxu0 0.0
    %205 = vmatpush2.msra.mxu0 0.0
    %206 = vmatprep.subr.mxu0 0.0
    %207 = vmatpush2.msra.mxu0 0.0
    %208 = vmatprep.subr.mxu0 0.0
    %209 = vmatpush2.msra.mxu0 0.0
    %210 = vmatprep.subr.mxu0 0.0
    %211 = vmatpush2.msra.mxu0 0.0
    %212 = vmatprep.subr.mxu0 0.0
    %213 = vmatpush2.msra.mxu0 0.0
    %214 = vmatprep.subr.mxu0 0.0
    %215 = vmatpush2.msra.mxu0 0.0
    %216 = vmatprep.subr.mxu0 0.0
    %217 = vmatpush2.msra.mxu0 0.0
    %218 = vmatprep.subr.mxu0 0.0
    %219 = vmatpush2.msra.mxu0 0.0
    %220 = vmatprep.mubr.f32.mxu0 0.0
    %221 = vmatmul.mubr.f32.gmra.mxu0 %v133
    %v222 = vpop.f32.mrf.mxu0
    %v223 = vadd.f32 0.0, %v222
    %v224 = vpop.f32.mrf.mxu0
    %225 = vmatprep.mubr.f32.mxu0 0.0
    %226 = vmatmul.mubr.f32.gmra.mxu0 %v136
    %v227 = vpop.f32.mrf.mxu0
    %v228 = vadd.f32 0.0, %v227
    %v229 = vpop.f32.mrf.mxu0
    %230 = vmatprep.mubr.f32.mxu0 0.0
    %231 = vmatmul.mubr.f32.gmra.mxu0 %v139
    %v232 = vpop.f32.mrf.mxu0
    %v233 = vadd.f32 0.0, %v232
    %v234 = vpop.f32.mrf.mxu0
    %235 = vmatprep.mubr.f32.mxu0 0.0
    %236 = vmatmul.mubr.f32.gmra.mxu0 %v142
    %v237 = vpop.f32.mrf.mxu0
    %v238 = vadd.f32 0.0, %v237
    %v239 = vpop.f32.mrf.mxu0
    %240 = vmatprep.mubr.f32.mxu0 0.0
    %241 = vmatmul.mubr.f32.gmra.mxu0 %v145
    %v242 = vpop.f32.mrf.mxu0
    %v243 = vadd.f32 0.0, %v242
    %v244 = vpop.f32.mrf.mxu0
    %245 = vmatprep.mubr.f32.mxu0 0.0
    %246 = vmatmul.mubr.f32.gmra.mxu0 %v148
    %v247 = vpop.f32.mrf.mxu0
    %v248 = vadd.f32 0.0, %v247
    %v249 = vpop.f32.mrf.mxu0
    %250 = vmatprep.mubr.f32.mxu0 0.0
    %251 = vmatmul.mubr.f32.gmra.mxu0 %v151
    %v252 = vpop.f32.mrf.mxu0
    %v253 = vadd.f32 0.0, %v252
    %v254 = vpop.f32.mrf.mxu0
    %255 = vmatprep.mubr.f32.mxu0 0.0
    %256 = vmatmul.mubr.f32.gmra.mxu0 %v154
    %v257 = vpop.f32.mrf.mxu0
    %v258 = vadd.f32 0.0, %v257
    %v259 = vpop.f32.mrf.mxu0
    %260 = vdwg.mxu0
    %vm261 = vcmp.lt.s32.totalorder %v92, 100
    %v262 = vsel %vm261, %v223, 0.0
    %v263 = vsel %vm261, %v228, 0.0
    %v264 = vsel %vm261, %v233, 0.0
    %v265 = vsel %vm261, %v238, 0.0
    %v266 = vsel %vm261, %v243, 0.0
    %v267 = vsel %vm261, %v248, 0.0
    %v268 = vsel %vm261, %v253, 0.0
    %v269 = vsel %vm261, %v258, 0.0
    %270 = vadd.xlane.f32.xlu0 %v262
    %v271 = vpop.xlane.xlu0 %270
    %272 = vadd.xlane.f32.xlu0 %v263
    %v273 = vpop.xlane.xlu0 %272
    %274 = vadd.xlane.f32.xlu0 %v264
    %v275 = vpop.xlane.xlu0 %274
    %276 = vadd.xlane.f32.xlu0 %v265
    %v277 = vpop.xlane.xlu0 %276
    %278 = vadd.xlane.f32.xlu0 %v266
    %v279 = vpop.xlane.xlu0 %278
    %280 = vadd.xlane.f32.xlu0 %v267
    %v281 = vpop.xlane.xlu0 %280
    %282 = vadd.xlane.f32.xlu0 %v268
    %v283 = vpop.xlane.xlu0 %282
    %284 = vadd.xlane.f32.xlu0 %v269
    %v285 = vpop.xlane.xlu0 %284
    %v286 = vrot.slane %v271, 1
    %v287 = vrot.slane %v273, 1
    %v288 = vrot.slane %v275, 1
    %v289 = vrot.slane %v277, 1
    %v290 = vrot.slane %v279, 1
    %v291 = vrot.slane %v281, 1
    %v292 = vrot.slane %v283, 1
    %v293 = vrot.slane %v285, 1
    %vm294 = vcmp.lt.s32.totalorder %v94, 7
    %v295 = vsel %vm294, %v292, %v293
    %v296 = vsel %vm294, %v291, %v292
    %v297 = vsel %vm294, %v290, %v291
    %v298 = vsel %vm294, %v289, %v290
    %v299 = vsel %vm294, %v288, %v289
    %v300 = vsel %vm294, %v287, %v288
    %v301 = vsel %vm294, %v286, %v287
    %v302 = vsel %vm294, %v293, %v286
    %v303 = vadd.f32 %v271, %v301
    %v304 = vadd.f32 %v273, %v300
    %v305 = vadd.f32 %v275, %v299
    %v306 = vadd.f32 %v277, %v298
    %v307 = vadd.f32 %v279, %v297
    %v308 = vadd.f32 %v281, %v296
    %v309 = vadd.f32 %v283, %v295
    %v310 = vadd.f32 %v285, %v302
    %v311 = vrot.slane %v303, 7
    %v312 = vrot.slane %v304, 7
    %v313 = vrot.slane %v305, 7
    %v314 = vrot.slane %v306, 7
    %v315 = vrot.slane %v307, 7
    %v316 = vrot.slane %v308, 7
    %v317 = vrot.slane %v309, 7
    %v318 = vrot.slane %v310, 7
    %vm319 = vcmp.lt.s32.totalorder %v94, 1
    %v320 = vsel %vm319, %v317, %v318
    %v321 = vsel %vm319, %v316, %v317
    %v322 = vsel %vm319, %v315, %v316
    %v323 = vsel %vm319, %v314, %v315
    %v324 = vsel %vm319, %v313, %v314
    %v325 = vsel %vm319, %v312, %v313
    %v326 = vsel %vm319, %v311, %v312
    %v327 = vsel %vm319, %v318, %v311
    %v328 = vsel %vm110, %v303, %v327
    %v329 = vsel %vm111, %v304, %v326
    %v330 = vsel %vm112, %v305, %v325
    %v331 = vsel %vm113, %v306, %v324
    %v332 = vsel %vm114, %v307, %v323
    %v333 = vsel %vm115, %v308, %v322
    %v334 = vsel %vm116, %v309, %v321
    %v335 = vsel %vm117, %v310, %v320
    %v336 = vmul.f32 %v328, 0.005
    %v337 = vmul.f32 %v329, 0.005
    %v338 = vmul.f32 %v330, 0.005
    %v339 = vmul.f32 %v331, 0.005
    %v340 = vmul.f32 %v332, 0.005
    %v341 = vmul.f32 %v333, 0.005
    %v342 = vmul.f32 %v334, 0.005
    %v343 = vmul.f32 %v335, 0.005
    %v344 = vmul.f32 %v262, %v262
    %v345 = vmul.f32 %v263, %v263
    %v346 = vmul.f32 %v264, %v264
    %v347 = vmul.f32 %v265, %v265
    %v348 = vmul.f32 %v266, %v266
    %v349 = vmul.f32 %v267, %v267
    %v350 = vmul.f32 %v268, %v268
    %v351 = vmul.f32 %v269, %v269
    %352 = vadd.xlane.f32.xlu0 %v344
    %v353 = vpop.xlane.xlu0 %352
    %354 = vadd.xlane.f32.xlu0 %v345
    %v355 = vpop.xlane.xlu0 %354
    %356 = vadd.xlane.f32.xlu0 %v346
    %v357 = vpop.xlane.xlu0 %356
    %358 = vadd.xlane.f32.xlu0 %v347
    %v359 = vpop.xlane.xlu0 %358
    %360 = vadd.xlane.f32.xlu0 %v348
    %v361 = vpop.xlane.xlu0 %360
    %362 = vadd.xlane.f32.xlu0 %v349
    %v363 = vpop.xlane.xlu0 %362
    %364 = vadd.xlane.f32.xlu0 %v350
    %v365 = vpop.xlane.xlu0 %364
    %366 = vadd.xlane.f32.xlu0 %v351
    %v367 = vpop.xlane.xlu0 %366
    %v368 = vrot.slane %v353, 1
    %v369 = vrot.slane %v355, 1
    %v370 = vrot.slane %v357, 1
    %v371 = vrot.slane %v359, 1
    %v372 = vrot.slane %v361, 1
    %v373 = vrot.slane %v363, 1
    %v374 = vrot.slane %v365, 1
    %v375 = vrot.slane %v367, 1
    %v376 = vsel %vm294, %v374, %v375
    %v377 = vsel %vm294, %v373, %v374
    %v378 = vsel %vm294, %v372, %v373
    %v379 = vsel %vm294, %v371, %v372
    %v380 = vsel %vm294, %v370, %v371
    %v381 = vsel %vm294, %v369, %v370
    %v382 = vsel %vm294, %v368, %v369
    %v383 = vsel %vm294, %v375, %v368
    %v384 = vadd.f32 %v353, %v382
    %v385 = vadd.f32 %v355, %v381
    %v386 = vadd.f32 %v357, %v380
    %v387 = vadd.f32 %v359, %v379
    %v388 = vadd.f32 %v361, %v378
    %v389 = vadd.f32 %v363, %v377
    %v390 = vadd.f32 %v365, %v376
    %v391 = vadd.f32 %v367, %v383
    %v392 = vrot.slane %v384, 7
    %v393 = vrot.slane %v385, 7
    %v394 = vrot.slane %v386, 7
    %v395 = vrot.slane %v387, 7
    %v396 = vrot.slane %v388, 7
    %v397 = vrot.slane %v389, 7
    %v398 = vrot.slane %v390, 7
    %v399 = vrot.slane %v391, 7
    %v400 = vsel %vm319, %v398, %v399
    %v401 = vsel %vm319, %v397, %v398
    %v402 = vsel %vm319, %v396, %v397
    %v403 = vsel %vm319, %v395, %v396
    %v404 = vsel %vm319, %v394, %v395
    %v405 = vsel %vm319, %v393, %v394
    %v406 = vsel %vm319, %v392, %v393
    %v407 = vsel %vm319, %v399, %v392
    %v408 = vsel %vm110, %v384, %v407
    %v409 = vsel %vm111, %v385, %v406
    %v410 = vsel %vm112, %v386, %v405
    %v411 = vsel %vm113, %v387, %v404
    %v412 = vsel %vm114, %v388, %v403
    %v413 = vsel %vm115, %v389, %v402
    %v414 = vsel %vm116, %v390, %v401
    %v415 = vsel %vm117, %v391, %v400
    %v416 = vmul.f32 %v408, 0.005
    %v417 = vmul.f32 %v409, 0.005
    %v418 = vmul.f32 %v410, 0.005
    %v419 = vmul.f32 %v411, 0.005
    %v420 = vmul.f32 %v412, 0.005
    %v421 = vmul.f32 %v413, 0.005
    %v422 = vmul.f32 %v414, 0.005
    %v423 = vmul.f32 %v415, 0.005
    %v424 = vmul.f32 %v336, %v336
    %v425 = vmul.f32 %v337, %v337
    %v426 = vmul.f32 %v338, %v338
    %v427 = vmul.f32 %v339, %v339
    %v428 = vmul.f32 %v340, %v340
    %v429 = vmul.f32 %v341, %v341
    %v430 = vmul.f32 %v342, %v342
    %v431 = vmul.f32 %v343, %v343
    %v432 = vsub.f32 %v416, %v424
    %v433 = vsub.f32 %v417, %v425
    %v434 = vsub.f32 %v418, %v426
    %v435 = vsub.f32 %v419, %v427
    %v436 = vsub.f32 %v420, %v428
    %v437 = vsub.f32 %v421, %v429
    %v438 = vsub.f32 %v422, %v430
    %v439 = vsub.f32 %v423, %v431
    %v440 = vadd.f32 %v432, 0.8
    %v441 = vadd.f32 %v433, 0.8
    %v442 = vadd.f32 %v434, 0.8
    %v443 = vadd.f32 %v435, 0.8
    %v444 = vadd.f32 %v436, 0.8
    %v445 = vadd.f32 %v437, 0.8
    %v446 = vadd.f32 %v438, 0.8
    %v447 = vadd.f32 %v439, 0.8
    %v448 = vrsqrt.pop %v440
    %v449 = vrsqrt.pop %v441
    %v450 = vrsqrt.pop %v442
    %v451 = vrsqrt.pop %v443
    %v452 = vrsqrt.pop %v444
    %v453 = vrsqrt.pop %v445
    %v454 = vrsqrt.pop %v446
    %v455 = vrsqrt.pop %v447
    %457 = vset.pattern.permute.xlu0 0
    %458 = vperm.xlu0 %457, %v336
    %v459 = vpop.permute.xlu0 %458
    %462 = vset.pattern.permute.xlu0 0
    %463 = vperm.xlu0 %462, %v337
    %v464 = vpop.permute.xlu0 %463
    %467 = vset.pattern.permute.xlu0 0
    %468 = vperm.xlu0 %467, %v338
    %v469 = vpop.permute.xlu0 %468
    %472 = vset.pattern.permute.xlu0 0
    %473 = vperm.xlu0 %472, %v339
    %v474 = vpop.permute.xlu0 %473
    %477 = vset.pattern.permute.xlu0 0
    %478 = vperm.xlu0 %477, %v340
    %v479 = vpop.permute.xlu0 %478
    %482 = vset.pattern.permute.xlu0 0
    %483 = vperm.xlu0 %482, %v341
    %v484 = vpop.permute.xlu0 %483
    %487 = vset.pattern.permute.xlu0 0
    %488 = vperm.xlu0 %487, %v342
    %v489 = vpop.permute.xlu0 %488
    %492 = vset.pattern.permute.xlu0 0
    %493 = vperm.xlu0 %492, %v343
    %v494 = vpop.permute.xlu0 %493
    %v496 = vsub.f32 %v262, %v459
    %v497 = vsub.f32 %v263, %v464
    %v498 = vsub.f32 %v264, %v469
    %v499 = vsub.f32 %v265, %v474
    %v500 = vsub.f32 %v266, %v479
    %v501 = vsub.f32 %v267, %v484
    %v502 = vsub.f32 %v268, %v489
    %v503 = vsub.f32 %v269, %v494
    %504 = vrot.lane.b32.xlu0 %v123, 104
    %v505 = vpop.permute.xlu0 %504
    %506 = vrot.lane.b32.xlu0 %v124, 104
    %v507 = vpop.permute.xlu0 %506
    %508 = vrot.lane.b32.xlu0 %v125, 104
    %v509 = vpop.permute.xlu0 %508
    %510 = vrot.lane.b32.xlu0 %v126, 104
    %v511 = vpop.permute.xlu0 %510
    %512 = vrot.lane.b32.xlu0 %v127, 104
    %v513 = vpop.permute.xlu0 %512
    %514 = vrot.lane.b32.xlu0 %v128, 104
    %v515 = vpop.permute.xlu0 %514
    %516 = vrot.lane.b32.xlu0 %v129, 104
    %v517 = vpop.permute.xlu0 %516
    %518 = vrot.lane.b32.xlu0 %v130, 104
    %v519 = vpop.permute.xlu0 %518
    %v528 = vmul.f32 %v448, %v505
    %v529 = vmul.f32 %v449, %v507
    %v530 = vmul.f32 %v450, %v509
    %v531 = vmul.f32 %v451, %v511
    %v532 = vmul.f32 %v452, %v513
    %v533 = vmul.f32 %v453, %v515
    %v534 = vmul.f32 %v454, %v517
    %v535 = vmul.f32 %v455, %v519
    %537 = vset.pattern.permute.xlu0 0
    %538 = vperm.xlu0 %537, %v528
    %v539 = vpop.permute.xlu0 %538
    %542 = vset.pattern.permute.xlu0 0
    %543 = vperm.xlu0 %542, %v529
    %v544 = vpop.permute.xlu0 %543
    %547 = vset.pattern.permute.xlu0 0
    %548 = vperm.xlu0 %547, %v530
    %v549 = vpop.permute.xlu0 %548
    %552 = vset.pattern.permute.xlu0 0
    %553 = vperm.xlu0 %552, %v531
    %v554 = vpop.permute.xlu0 %553
    %557 = vset.pattern.permute.xlu0 0
    %558 = vperm.xlu0 %557, %v532
    %v559 = vpop.permute.xlu0 %558
    %562 = vset.pattern.permute.xlu0 0
    %563 = vperm.xlu0 %562, %v533
    %v564 = vpop.permute.xlu0 %563
    %567 = vset.pattern.permute.xlu0 0
    %568 = vperm.xlu0 %567, %v534
    %v569 = vpop.permute.xlu0 %568
    %572 = vset.pattern.permute.xlu0 0
    %573 = vperm.xlu0 %572, %v535
    %v574 = vpop.permute.xlu0 %573
    %v576 = vmul.f32 %v496, %v539
    %v577 = vmul.f32 %v497, %v544
    %v578 = vmul.f32 %v498, %v549
    %v579 = vmul.f32 %v499, %v554
    %v580 = vmul.f32 %v500, %v559
    %v581 = vmul.f32 %v501, %v564
    %v582 = vmul.f32 %v502, %v569
    %v583 = vmul.f32 %v503, %v574
    %584 = vset.pattern.permute.xlu0 25
    %585 = vperm.xlu0 %584, %v123
    %v586 = vpop.permute.xlu0 %585
    %588 = vset.pattern.permute.xlu0 25
    %589 = vperm.xlu0 %588, %v124
    %v590 = vpop.permute.xlu0 %589
    %592 = vset.pattern.permute.xlu0 25
    %593 = vperm.xlu0 %592, %v125
    %v594 = vpop.permute.xlu0 %593
    %596 = vset.pattern.permute.xlu0 25
    %597 = vperm.xlu0 %596, %v126
    %v598 = vpop.permute.xlu0 %597
    %600 = vset.pattern.permute.xlu0 25
    %601 = vperm.xlu0 %600, %v127
    %v602 = vpop.permute.xlu0 %601
    %604 = vset.pattern.permute.xlu0 25
    %605 = vperm.xlu0 %604, %v128
    %v606 = vpop.permute.xlu0 %605
    %608 = vset.pattern.permute.xlu0 25
    %609 = vperm.xlu0 %608, %v129
    %v610 = vpop.permute.xlu0 %609
    %612 = vset.pattern.permute.xlu0 25
    %613 = vperm.xlu0 %612, %v130
    %v614 = vpop.permute.xlu0 %613
    %v616 = vadd.f32 %v576, %v586
    %v617 = vadd.f32 %v577, %v590
    %v618 = vadd.f32 %v578, %v594
    %v619 = vadd.f32 %v579, %v598
    %v620 = vadd.f32 %v580, %v602
    %v621 = vadd.f32 %v581, %v606
    %v622 = vadd.f32 %v582, %v610
    %v623 = vadd.f32 %v583, %v614
    %vm624 = vcmp.ge.f32.partialorder %v616, 0.0
    %vm625 = vcmp.ge.f32.partialorder %v617, 0.0
    %vm626 = vcmp.ge.f32.partialorder %v618, 0.0
    %vm627 = vcmp.ge.f32.partialorder %v619, 0.0
    %vm628 = vcmp.ge.f32.partialorder %v620, 0.0
    %vm629 = vcmp.ge.f32.partialorder %v621, 0.0
    %vm630 = vcmp.ge.f32.partialorder %v622, 0.0
    %vm631 = vcmp.ge.f32.partialorder %v623, 0.0
    %v632 = vmul.f32 %v616, 0.2
    %v633 = vmul.f32 %v617, 0.2
    %v634 = vmul.f32 %v618, 0.2
    %v635 = vmul.f32 %v619, 0.2
    %v636 = vmul.f32 %v620, 0.2
    %v637 = vmul.f32 %v621, 0.2
    %v638 = vmul.f32 %v622, 0.2
    %v639 = vmul.f32 %v623, 0.2
    %v640 = vsel %vm624, %v616, %v632
    %v641 = vsel %vm625, %v617, %v633
    %v642 = vsel %vm626, %v618, %v634
    %v643 = vsel %vm627, %v619, %v635
    %v644 = vsel %vm628, %v620, %v636
    %v645 = vsel %vm629, %v621, %v637
    %v646 = vsel %vm630, %v622, %v638
    %v647 = vsel %vm631, %v623, %v639
    %v648 = vld [vmem:[#allocation6] sm:$0xff]
    %v649 = vld [vmem:[#allocation6 + $0x8] sm:$0xff]
    %v650 = vld [vmem:[#allocation6 + $0x10] sm:$0xff]
    %v651 = vld [vmem:[#allocation6 + $0x18] sm:$0xff]
    %v652 = vld [vmem:[#allocation6 + $0x20] sm:$0xff]
    %v653 = vld [vmem:[#allocation6 + $0x28] sm:$0xff]
    %v654 = vld [vmem:[#allocation6 + $0x30] sm:$0xff]
    %v655 = vld [vmem:[#allocation6 + $0x38] sm:$0xff]
    %v656 = vld [vmem:[#allocation6 + $0x40] sm:$0xff]
    %v657 = vld [vmem:[#allocation6 + $0x48] sm:$0xff]
    %v658 = vld [vmem:[#allocation6 + $0x50] sm:$0xff]
    %v659 = vld [vmem:[#allocation6 + $0x58] sm:$0xff]
    %v660 = vld [vmem:[#allocation6 + $0x60] sm:$0xff]
    %v661 = vld [vmem:[#allocation6 + $0x68] sm:$0xff]
    %v662 = vld [vmem:[#allocation6 + $0x70] sm:$0xff]
    %v663 = vld [vmem:[#allocation6 + $0x78] sm:$0xff]
    %664 = vrot.lane.b32.xlu0 %v640, 127
    %v665 = vpop.permute.xlu0 %664
    %666 = vrot.lane.b32.xlu0 %v641, 127
    %v667 = vpop.permute.xlu0 %666
    %668 = vrot.lane.b32.xlu0 %v642, 127
    %v669 = vpop.permute.xlu0 %668
    %670 = vrot.lane.b32.xlu0 %v643, 127
    %v671 = vpop.permute.xlu0 %670
    %672 = vrot.lane.b32.xlu0 %v644, 127
    %v673 = vpop.permute.xlu0 %672
    %674 = vrot.lane.b32.xlu0 %v645, 127
    %v675 = vpop.permute.xlu0 %674
    %676 = vrot.lane.b32.xlu0 %v646, 127
    %v677 = vpop.permute.xlu0 %676
    %678 = vrot.lane.b32.xlu0 %v647, 127
    %v679 = vpop.permute.xlu0 %678
    %v680 = vmax.f32 %v640, %v665
    %v681 = vmax.f32 %v641, %v667
    %v682 = vmax.f32 %v642, %v669
    %v683 = vmax.f32 %v643, %v671
    %v684 = vmax.f32 %v644, %v673
    %v685 = vmax.f32 %v645, %v675
    %v686 = vmax.f32 %v646, %v677
    %v687 = vmax.f32 %v647, %v679
    %688 = vmatprep.subr.mxu0 0.0
    %689 = vmatpush1.msra.mxu0 %v663
    %690 = vmatprep.subr.mxu0 0.0
    %691 = vmatpush1.msra.mxu0 %v662
    %692 = vmatprep.subr.mxu0 0.0
    %693 = vmatpush1.msra.mxu0 %v661
    %694 = vmatprep.subr.mxu0 0.0
    %695 = vmatpush1.msra.mxu0 %v660
    %696 = vmatprep.subr.mxu0 0.0
    %697 = vmatpush1.msra.mxu0 %v659
    %698 = vmatprep.subr.mxu0 0.0
    %699 = vmatpush1.msra.mxu0 %v658
    %700 = vmatprep.subr.mxu0 0.0
    %701 = vmatpush1.msra.mxu0 %v657
    %702 = vmatprep.subr.mxu0 0.0
    %703 = vmatpush1.msra.mxu0 %v656
    %704 = vmatprep.subr.mxu0 0.0
    %705 = vmatpush1.msra.mxu0 %v655
    %706 = vmatprep.subr.mxu0 0.0
    %707 = vmatpush1.msra.mxu0 %v654
    %708 = vmatprep.subr.mxu0 0.0
    %709 = vmatpush1.msra.mxu0 %v653
    %710 = vmatprep.subr.mxu0 0.0
    %711 = vmatpush1.msra.mxu0 %v652
    %712 = vmatprep.subr.mxu0 0.0
    %713 = vmatpush1.msra.mxu0 %v651
    %714 = vmatprep.subr.mxu0 0.0
    %715 = vmatpush1.msra.mxu0 %v650
    %716 = vmatprep.subr.mxu0 0.0
    %717 = vmatpush1.msra.mxu0 %v649
    %718 = vmatprep.subr.mxu0 0.0
    %719 = vmatpush1.msra.mxu0 %v648
    %720 = vmatprep.subr.mxu0 0.0
    %721 = vmatpush2.msra.mxu0 0.0
    %722 = vmatprep.subr.mxu0 0.0
    %723 = vmatpush2.msra.mxu0 0.0
    %724 = vmatprep.subr.mxu0 0.0
    %725 = vmatpush2.msra.mxu0 0.0
    %726 = vmatprep.subr.mxu0 0.0
    %727 = vmatpush2.msra.mxu0 0.0
    %728 = vmatprep.subr.mxu0 0.0
    %729 = vmatpush2.msra.mxu0 0.0
    %730 = vmatprep.subr.mxu0 0.0
    %731 = vmatpush2.msra.mxu0 0.0
    %732 = vmatprep.subr.mxu0 0.0
    %733 = vmatpush2.msra.mxu0 0.0
    %734 = vmatprep.subr.mxu0 0.0
    %735 = vmatpush2.msra.mxu0 0.0
    %736 = vmatprep.subr.mxu0 0.0
    %737 = vmatpush2.msra.mxu0 0.0
    %738 = vmatprep.subr.mxu0 0.0
    %739 = vmatpush2.msra.mxu0 0.0
    %740 = vmatprep.subr.mxu0 0.0
    %741 = vmatpush2.msra.mxu0 0.0
    %742 = vmatprep.subr.mxu0 0.0
    %743 = vmatpush2.msra.mxu0 0.0
    %744 = vmatprep.subr.mxu0 0.0
    %745 = vmatpush2.msra.mxu0 0.0
    %746 = vmatprep.subr.mxu0 0.0
    %747 = vmatpush2.msra.mxu0 0.0
    %748 = vmatprep.subr.mxu0 0.0
    %749 = vmatpush2.msra.mxu0 0.0
    %750 = vmatprep.subr.mxu0 0.0
    %751 = vmatpush2.msra.mxu0 0.0
    %752 = vmatprep.mubr.f32.mxu0 0.0
    %753 = vmatmul.mubr.f32.gmra.mxu0 %v680
    %v754 = vpop.f32.mrf.mxu0
    %v755 = vadd.f32 0.0, %v754
    %v756 = vpop.f32.mrf.mxu0
    %757 = vmatprep.mubr.f32.mxu0 0.0
    %758 = vmatmul.mubr.f32.gmra.mxu0 %v681
    %v759 = vpop.f32.mrf.mxu0
    %v760 = vadd.f32 0.0, %v759
    %v761 = vpop.f32.mrf.mxu0
    %762 = vmatprep.mubr.f32.mxu0 0.0
    %763 = vmatmul.mubr.f32.gmra.mxu0 %v682
    %v764 = vpop.f32.mrf.mxu0
    %v765 = vadd.f32 0.0, %v764
    %v766 = vpop.f32.mrf.mxu0
    %767 = vmatprep.mubr.f32.mxu0 0.0
    %768 = vmatmul.mubr.f32.gmra.mxu0 %v683
    %v769 = vpop.f32.mrf.mxu0
    %v770 = vadd.f32 0.0, %v769
    %v771 = vpop.f32.mrf.mxu0
    %772 = vmatprep.mubr.f32.mxu0 0.0
    %773 = vmatmul.mubr.f32.gmra.mxu0 %v684
    %v774 = vpop.f32.mrf.mxu0
    %v775 = vadd.f32 0.0, %v774
    %v776 = vpop.f32.mrf.mxu0
    %777 = vmatprep.mubr.f32.mxu0 0.0
    %778 = vmatmul.mubr.f32.gmra.mxu0 %v685
    %v779 = vpop.f32.mrf.mxu0
    %v780 = vadd.f32 0.0, %v779
    %v781 = vpop.f32.mrf.mxu0
    %782 = vmatprep.mubr.f32.mxu0 0.0
    %783 = vmatmul.mubr.f32.gmra.mxu0 %v686
    %v784 = vpop.f32.mrf.mxu0
    %v785 = vadd.f32 0.0, %v784
    %v786 = vpop.f32.mrf.mxu0
    %787 = vmatprep.mubr.f32.mxu0 0.0
    %788 = vmatmul.mubr.f32.gmra.mxu0 %v687
    %v789 = vpop.f32.mrf.mxu0
    %v790 = vadd.f32 0.0, %v789
    %v791 = vpop.f32.mrf.mxu0
    %792 = vdwg.mxu0
    %793 = vrot.lane.b32.xlu0 %v755, 1
    %v794 = vpop.permute.xlu0 %793
    %795 = vrot.lane.b32.xlu0 %v760, 1
    %v796 = vpop.permute.xlu0 %795
    %797 = vrot.lane.b32.xlu0 %v765, 1
    %v798 = vpop.permute.xlu0 %797
    %799 = vrot.lane.b32.xlu0 %v770, 1
    %v800 = vpop.permute.xlu0 %799
    %801 = vrot.lane.b32.xlu0 %v775, 1
    %v802 = vpop.permute.xlu0 %801
    %803 = vrot.lane.b32.xlu0 %v780, 1
    %v804 = vpop.permute.xlu0 %803
    %805 = vrot.lane.b32.xlu0 %v785, 1
    %v806 = vpop.permute.xlu0 %805
    %807 = vrot.lane.b32.xlu0 %v790, 1
    %v808 = vpop.permute.xlu0 %807
    %809 = vrot.lane.b32.xlu0 %v755, 127
    %v810 = vpop.permute.xlu0 %809
    %811 = vrot.lane.b32.xlu0 %v760, 127
    %v812 = vpop.permute.xlu0 %811
    %813 = vrot.lane.b32.xlu0 %v765, 127
    %v814 = vpop.permute.xlu0 %813
    %815 = vrot.lane.b32.xlu0 %v770, 127
    %v816 = vpop.permute.xlu0 %815
    %817 = vrot.lane.b32.xlu0 %v775, 127
    %v818 = vpop.permute.xlu0 %817
    %819 = vrot.lane.b32.xlu0 %v780, 127
    %v820 = vpop.permute.xlu0 %819
    %821 = vrot.lane.b32.xlu0 %v785, 127
    %v822 = vpop.permute.xlu0 %821
    %823 = vrot.lane.b32.xlu0 %v790, 127
    %v824 = vpop.permute.xlu0 %823
    %v825 = vld [vmem:[#allocation4] sm:$0xff]
    %v826 = vld [vmem:[#allocation4 + $0x8] sm:$0xff]
    %v827 = vld [vmem:[#allocation4 + $0x10] sm:$0xff]
    %v828 = vld [vmem:[#allocation4 + $0x18] sm:$0xff]
    %v829 = vld [vmem:[#allocation4 + $0x20] sm:$0xff]
    %v830 = vld [vmem:[#allocation4 + $0x28] sm:$0xff]
    %v831 = vld [vmem:[#allocation4 + $0x30] sm:$0xff]
    %v832 = vld [vmem:[#allocation4 + $0x38] sm:$0xff]
    %v833 = vld [vmem:[#allocation4 + $0x40] sm:$0xff]
    %v834 = vld [vmem:[#allocation4 + $0x48] sm:$0xff]
    %v835 = vld [vmem:[#allocation4 + $0x50] sm:$0xff]
    %v836 = vld [vmem:[#allocation4 + $0x58] sm:$0xff]
    %v837 = vld [vmem:[#allocation4 + $0x60] sm:$0xff]
    %v838 = vld [vmem:[#allocation4 + $0x68] sm:$0xff]
    %v839 = vld [vmem:[#allocation4 + $0x70] sm:$0xff]
    %v840 = vld [vmem:[#allocation4 + $0x78] sm:$0xff]
    %vm841 = vcmask 523264
    %v843 = vsel %vm841, %v826, 0
    %v846 = vsel %vm841, %v828, 0
    %v849 = vsel %vm841, %v830, 0
    %v852 = vsel %vm841, %v832, 0
    %v855 = vsel %vm841, %v834, 0
    %v858 = vsel %vm841, %v836, 0
    %v861 = vsel %vm841, %v838, 0
    %v864 = vsel %vm841, %v840, 0
    %866 = vmatprep.subr.mxu0 0.0
    %867 = vmatpush1.msra.mxu0 %v790
    %868 = vmatprep.subr.mxu0 0.0
    %869 = vmatpush1.msra.mxu0 %v785
    %870 = vmatprep.subr.mxu0 0.0
    %871 = vmatpush1.msra.mxu0 %v780
    %872 = vmatprep.subr.mxu0 0.0
    %873 = vmatpush1.msra.mxu0 %v775
    %874 = vmatprep.subr.mxu0 0.0
    %875 = vmatpush1.msra.mxu0 %v770
    %876 = vmatprep.subr.mxu0 0.0
    %877 = vmatpush1.msra.mxu0 %v765
    %878 = vmatprep.subr.mxu0 0.0
    %879 = vmatpush1.msra.mxu0 %v760
    %880 = vmatprep.subr.mxu0 0.0
    %881 = vmatpush1.msra.mxu0 %v755
    %882 = vmatprep.subr.mxu0 0.0
    %883 = vmatpush1.msra.mxu0 %v808
    %884 = vmatprep.subr.mxu0 0.0
    %885 = vmatpush1.msra.mxu0 %v806
    %886 = vmatprep.subr.mxu0 0.0
    %887 = vmatpush1.msra.mxu0 %v804
    %888 = vmatprep.subr.mxu0 0.0
    %889 = vmatpush1.msra.mxu0 %v802
    %890 = vmatprep.subr.mxu0 0.0
    %891 = vmatpush1.msra.mxu0 %v800
    %892 = vmatprep.subr.mxu0 0.0
    %893 = vmatpush1.msra.mxu0 %v798
    %894 = vmatprep.subr.mxu0 0.0
    %895 = vmatpush1.msra.mxu0 %v796
    %896 = vmatprep.subr.mxu0 0.0
    %897 = vmatpush1.msra.mxu0 %v794
    %898 = vmatprep.subr.mxu0 0.0
    %899 = vmatpush2.msra.mxu0 0.0
    %900 = vmatprep.subr.mxu0 0.0
    %901 = vmatpush2.msra.mxu0 0.0
    %902 = vmatprep.subr.mxu0 0.0
    %903 = vmatpush2.msra.mxu0 0.0
    %904 = vmatprep.subr.mxu0 0.0
    %905 = vmatpush2.msra.mxu0 0.0
    %906 = vmatprep.subr.mxu0 0.0
    %907 = vmatpush2.msra.mxu0 0.0
    %908 = vmatprep.subr.mxu0 0.0
    %909 = vmatpush2.msra.mxu0 0.0
    %910 = vmatprep.subr.mxu0 0.0
    %911 = vmatpush2.msra.mxu0 0.0
    %912 = vmatprep.subr.mxu0 0.0
    %913 = vmatpush2.msra.mxu0 0.0
    %914 = vmatprep.subr.mxu0 0.0
    %915 = vmatpush2.msra.mxu0 %v824
    %916 = vmatprep.subr.mxu0 0.0
    %917 = vmatpush2.msra.mxu0 %v822
    %918 = vmatprep.subr.mxu0 0.0
    %919 = vmatpush2.msra.mxu0 %v820
    %920 = vmatprep.subr.mxu0 0.0
    %921 = vmatpush2.msra.mxu0 %v818
    %922 = vmatprep.subr.mxu0 0.0
    %923 = vmatpush2.msra.mxu0 %v816
    %924 = vmatprep.subr.mxu0 0.0
    %925 = vmatpush2.msra.mxu0 %v814
    %926 = vmatprep.subr.mxu0 0.0
    %927 = vmatpush2.msra.mxu0 %v812
    %928 = vmatprep.subr.mxu0 0.0
    %929 = vmatpush2.msra.mxu0 %v810
    %930 = vmatprep.mubr.f32.mxu0 %v843
    %931 = vmatmul.mubr.f32.gmra.mxu0 %v825
    %v932 = vpop.f32.mrf.mxu0
    %v933 = vadd.f32 0.0, %v932
    %v934 = vpop.f32.mrf.mxu0
    %935 = vmatprep.mubr.f32.mxu0 %v846
    %936 = vmatmul.mubr.f32.gmra.mxu0 %v827
    %v937 = vpop.f32.mrf.mxu0
    %v938 = vadd.f32 0.0, %v937
    %v939 = vpop.f32.mrf.mxu0
    %940 = vmatprep.mubr.f32.mxu0 %v849
    %941 = vmatmul.mubr.f32.gmra.mxu0 %v829
    %v942 = vpop.f32.mrf.mxu0
    %v943 = vadd.f32 0.0, %v942
    %v944 = vpop.f32.mrf.mxu0
    %945 = vmatprep.mubr.f32.mxu0 %v852
    %946 = vmatmul.mubr.f32.gmra.mxu0 %v831
    %v947 = vpop.f32.mrf.mxu0
    %v948 = vadd.f32 0.0, %v947
    %v949 = vpop.f32.mrf.mxu0
    %950 = vmatprep.mubr.f32.mxu0 %v855
    %951 = vmatmul.mubr.f32.gmra.mxu0 %v833
    %v952 = vpop.f32.mrf.mxu0
    %v953 = vadd.f32 0.0, %v952
    %v954 = vpop.f32.mrf.mxu0
    %955 = vmatprep.mubr.f32.mxu0 %v858
    %956 = vmatmul.mubr.f32.gmra.mxu0 %v835
    %v957 = vpop.f32.mrf.mxu0
    %v958 = vadd.f32 0.0, %v957
    %v959 = vpop.f32.mrf.mxu0
    %960 = vmatprep.mubr.f32.mxu0 %v861
    %961 = vmatmul.mubr.f32.gmra.mxu0 %v837
    %v962 = vpop.f32.mrf.mxu0
    %v963 = vadd.f32 0.0, %v962
    %v964 = vpop.f32.mrf.mxu0
    %965 = vmatprep.mubr.f32.mxu0 %v864
    %966 = vmatmul.mubr.f32.gmra.mxu0 %v839
    %v967 = vpop.f32.mrf.mxu0
    %v968 = vadd.f32 0.0, %v967
    %v969 = vpop.f32.mrf.mxu0
    %970 = vdwg.mxu0
    %vm971 = vcmp.lt.s32.totalorder %v92, 50
    %v972 = vsel %vm971, %v933, 0.0
    %v973 = vsel %vm971, %v938, 0.0
    %v974 = vsel %vm971, %v943, 0.0
    %v975 = vsel %vm971, %v948, 0.0
    %v976 = vsel %vm971, %v953, 0.0
    %v977 = vsel %vm971, %v958, 0.0
    %v978 = vsel %vm971, %v963, 0.0
    %v979 = vsel %vm971, %v968, 0.0
    %980 = vadd.xlane.f32.xlu0 %v972
    %v981 = vpop.xlane.xlu0 %980
    %982 = vadd.xlane.f32.xlu0 %v973
    %v983 = vpop.xlane.xlu0 %982
    %984 = vadd.xlane.f32.xlu0 %v974
    %v985 = vpop.xlane.xlu0 %984
    %986 = vadd.xlane.f32.xlu0 %v975
    %v987 = vpop.xlane.xlu0 %986
    %988 = vadd.xlane.f32.xlu0 %v976
    %v989 = vpop.xlane.xlu0 %988
    %990 = vadd.xlane.f32.xlu0 %v977
    %v991 = vpop.xlane.xlu0 %990
    %992 = vadd.xlane.f32.xlu0 %v978
    %v993 = vpop.xlane.xlu0 %992
    %994 = vadd.xlane.f32.xlu0 %v979
    %v995 = vpop.xlane.xlu0 %994
    %v996 = vrot.slane %v981, 1
    %v997 = vrot.slane %v983, 1
    %v998 = vrot.slane %v985, 1
    %v999 = vrot.slane %v987, 1
    %v1000 = vrot.slane %v989, 1
    %v1001 = vrot.slane %v991, 1
    %v1002 = vrot.slane %v993, 1
    %v1003 = vrot.slane %v995, 1
    %v1004 = vsel %vm294, %v1002, %v1003
    %v1005 = vsel %vm294, %v1001, %v1002
    %v1006 = vsel %vm294, %v1000, %v1001
    %v1007 = vsel %vm294, %v999, %v1000
    %v1008 = vsel %vm294, %v998, %v999
    %v1009 = vsel %vm294, %v997, %v998
    %v1010 = vsel %vm294, %v996, %v997
    %v1011 = vsel %vm294, %v1003, %v996
    %v1012 = vadd.f32 %v981, %v1010
    %v1013 = vadd.f32 %v983, %v1009
    %v1014 = vadd.f32 %v985, %v1008
    %v1015 = vadd.f32 %v987, %v1007
    %v1016 = vadd.f32 %v989, %v1006
    %v1017 = vadd.f32 %v991, %v1005
    %v1018 = vadd.f32 %v993, %v1004
    %v1019 = vadd.f32 %v995, %v1011
    %v1020 = vrot.slane %v1012, 7
    %v1021 = vrot.slane %v1013, 7
    %v1022 = vrot.slane %v1014, 7
    %v1023 = vrot.slane %v1015, 7
    %v1024 = vrot.slane %v1016, 7
    %v1025 = vrot.slane %v1017, 7
    %v1026 = vrot.slane %v1018, 7
    %v1027 = vrot.slane %v1019, 7
    %v1028 = vsel %vm319, %v1026, %v1027
    %v1029 = vsel %vm319, %v1025, %v1026
    %v1030 = vsel %vm319, %v1024, %v1025
    %v1031 = vsel %vm319, %v1023, %v1024
    %v1032 = vsel %vm319, %v1022, %v1023
    %v1033 = vsel %vm319, %v1021, %v1022
    %v1034 = vsel %vm319, %v1020, %v1021
    %v1035 = vsel %vm319, %v1027, %v1020
    %v1036 = vsel %vm110, %v1012, %v1035
    %v1037 = vsel %vm111, %v1013, %v1034
    %v1038 = vsel %vm112, %v1014, %v1033
    %v1039 = vsel %vm113, %v1015, %v1032
    %v1040 = vsel %vm114, %v1016, %v1031
    %v1041 = vsel %vm115, %v1017, %v1030
    %v1042 = vsel %vm116, %v1018, %v1029
    %v1043 = vsel %vm117, %v1019, %v1028
    %v1044 = vmul.f32 %v1036, 0.01
    %v1045 = vmul.f32 %v1037, 0.01
    %v1046 = vmul.f32 %v1038, 0.01
    %v1047 = vmul.f32 %v1039, 0.01
    %v1048 = vmul.f32 %v1040, 0.01
    %v1049 = vmul.f32 %v1041, 0.01
    %v1050 = vmul.f32 %v1042, 0.01
    %v1051 = vmul.f32 %v1043, 0.01
    %v1052 = vmul.f32 %v972, %v972
    %v1053 = vmul.f32 %v973, %v973
    %v1054 = vmul.f32 %v974, %v974
    %v1055 = vmul.f32 %v975, %v975
    %v1056 = vmul.f32 %v976, %v976
    %v1057 = vmul.f32 %v977, %v977
    %v1058 = vmul.f32 %v978, %v978
    %v1059 = vmul.f32 %v979, %v979
    %1060 = vadd.xlane.f32.xlu0 %v1052
    %v1061 = vpop.xlane.xlu0 %1060
    %1062 = vadd.xlane.f32.xlu0 %v1053
    %v1063 = vpop.xlane.xlu0 %1062
    %1064 = vadd.xlane.f32.xlu0 %v1054
    %v1065 = vpop.xlane.xlu0 %1064
    %1066 = vadd.xlane.f32.xlu0 %v1055
    %v1067 = vpop.xlane.xlu0 %1066
    %1068 = vadd.xlane.f32.xlu0 %v1056
    %v1069 = vpop.xlane.xlu0 %1068
    %1070 = vadd.xlane.f32.xlu0 %v1057
    %v1071 = vpop.xlane.xlu0 %1070
    %1072 = vadd.xlane.f32.xlu0 %v1058
    %v1073 = vpop.xlane.xlu0 %1072
    %1074 = vadd.xlane.f32.xlu0 %v1059
    %v1075 = vpop.xlane.xlu0 %1074
    %v1076 = vrot.slane %v1061, 1
    %v1077 = vrot.slane %v1063, 1
    %v1078 = vrot.slane %v1065, 1
    %v1079 = vrot.slane %v1067, 1
    %v1080 = vrot.slane %v1069, 1
    %v1081 = vrot.slane %v1071, 1
    %v1082 = vrot.slane %v1073, 1
    %v1083 = vrot.slane %v1075, 1
    %v1084 = vsel %vm294, %v1082, %v1083
    %v1085 = vsel %vm294, %v1081, %v1082
    %v1086 = vsel %vm294, %v1080, %v1081
    %v1087 = vsel %vm294, %v1079, %v1080
    %v1088 = vsel %vm294, %v1078, %v1079
    %v1089 = vsel %vm294, %v1077, %v1078
    %v1090 = vsel %vm294, %v1076, %v1077
    %v1091 = vsel %vm294, %v1083, %v1076
    %v1092 = vadd.f32 %v1061, %v1090
    %v1093 = vadd.f32 %v1063, %v1089
    %v1094 = vadd.f32 %v1065, %v1088
    %v1095 = vadd.f32 %v1067, %v1087
    %v1096 = vadd.f32 %v1069, %v1086
    %v1097 = vadd.f32 %v1071, %v1085
    %v1098 = vadd.f32 %v1073, %v1084
    %v1099 = vadd.f32 %v1075, %v1091
    %v1100 = vrot.slane %v1092, 7
    %v1101 = vrot.slane %v1093, 7
    %v1102 = vrot.slane %v1094, 7
    %v1103 = vrot.slane %v1095, 7
    %v1104 = vrot.slane %v1096, 7
    %v1105 = vrot.slane %v1097, 7
    %v1106 = vrot.slane %v1098, 7
    %v1107 = vrot.slane %v1099, 7
    %v1108 = vsel %vm319, %v1106, %v1107
    %v1109 = vsel %vm319, %v1105, %v1106
    %v1110 = vsel %vm319, %v1104, %v1105
    %v1111 = vsel %vm319, %v1103, %v1104
    %v1112 = vsel %vm319, %v1102, %v1103
    %v1113 = vsel %vm319, %v1101, %v1102
    %v1114 = vsel %vm319, %v1100, %v1101
    %v1115 = vsel %vm319, %v1107, %v1100
    %v1116 = vsel %vm110, %v1092, %v1115
    %v1117 = vsel %vm111, %v1093, %v1114
    %v1118 = vsel %vm112, %v1094, %v1113
    %v1119 = vsel %vm113, %v1095, %v1112
    %v1120 = vsel %vm114, %v1096, %v1111
    %v1121 = vsel %vm115, %v1097, %v1110
    %v1122 = vsel %vm116, %v1098, %v1109
    %v1123 = vsel %vm117, %v1099, %v1108
    %v1124 = vmul.f32 %v1116, 0.01
    %v1125 = vmul.f32 %v1117, 0.01
    %v1126 = vmul.f32 %v1118, 0.01
    %v1127 = vmul.f32 %v1119, 0.01
    %v1128 = vmul.f32 %v1120, 0.01
    %v1129 = vmul.f32 %v1121, 0.01
    %v1130 = vmul.f32 %v1122, 0.01
    %v1131 = vmul.f32 %v1123, 0.01
    %v1132 = vmul.f32 %v1044, %v1044
    %v1133 = vmul.f32 %v1045, %v1045
    %v1134 = vmul.f32 %v1046, %v1046
    %v1135 = vmul.f32 %v1047, %v1047
    %v1136 = vmul.f32 %v1048, %v1048
    %v1137 = vmul.f32 %v1049, %v1049
    %v1138 = vmul.f32 %v1050, %v1050
    %v1139 = vmul.f32 %v1051, %v1051
    %v1140 = vsub.f32 %v1124, %v1132
    %v1141 = vsub.f32 %v1125, %v1133
    %v1142 = vsub.f32 %v1126, %v1134
    %v1143 = vsub.f32 %v1127, %v1135
    %v1144 = vsub.f32 %v1128, %v1136
    %v1145 = vsub.f32 %v1129, %v1137
    %v1146 = vsub.f32 %v1130, %v1138
    %v1147 = vsub.f32 %v1131, %v1139
    %v1148 = vadd.f32 %v1140, 0.8
    %v1149 = vadd.f32 %v1141, 0.8
    %v1150 = vadd.f32 %v1142, 0.8
    %v1151 = vadd.f32 %v1143, 0.8
    %v1152 = vadd.f32 %v1144, 0.8
    %v1153 = vadd.f32 %v1145, 0.8
    %v1154 = vadd.f32 %v1146, 0.8
    %v1155 = vadd.f32 %v1147, 0.8
    %v1156 = vrsqrt.pop %v1148
    %v1157 = vrsqrt.pop %v1149
    %v1158 = vrsqrt.pop %v1150
    %v1159 = vrsqrt.pop %v1151
    %v1160 = vrsqrt.pop %v1152
    %v1161 = vrsqrt.pop %v1153
    %v1162 = vrsqrt.pop %v1154
    %v1163 = vrsqrt.pop %v1155
    %1165 = vset.pattern.permute.xlu0 0
    %1166 = vperm.xlu0 %1165, %v1044
    %v1167 = vpop.permute.xlu0 %1166
    %1170 = vset.pattern.permute.xlu0 0
    %1171 = vperm.xlu0 %1170, %v1045
    %v1172 = vpop.permute.xlu0 %1171
    %1175 = vset.pattern.permute.xlu0 0
    %1176 = vperm.xlu0 %1175, %v1046
    %v1177 = vpop.permute.xlu0 %1176
    %1180 = vset.pattern.permute.xlu0 0
    %1181 = vperm.xlu0 %1180, %v1047
    %v1182 = vpop.permute.xlu0 %1181
    %1185 = vset.pattern.permute.xlu0 0
    %1186 = vperm.xlu0 %1185, %v1048
    %v1187 = vpop.permute.xlu0 %1186
    %1190 = vset.pattern.permute.xlu0 0
    %1191 = vperm.xlu0 %1190, %v1049
    %v1192 = vpop.permute.xlu0 %1191
    %1195 = vset.pattern.permute.xlu0 0
    %1196 = vperm.xlu0 %1195, %v1050
    %v1197 = vpop.permute.xlu0 %1196
    %1200 = vset.pattern.permute.xlu0 0
    %1201 = vperm.xlu0 %1200, %v1051
    %v1202 = vpop.permute.xlu0 %1201
    %v1204 = vsub.f32 %v972, %v1167
    %v1205 = vsub.f32 %v973, %v1172
    %v1206 = vsub.f32 %v974, %v1177
    %v1207 = vsub.f32 %v975, %v1182
    %v1208 = vsub.f32 %v976, %v1187
    %v1209 = vsub.f32 %v977, %v1192
    %v1210 = vsub.f32 %v978, %v1197
    %v1211 = vsub.f32 %v979, %v1202
    %1212 = vrot.lane.b32.xlu0 %v123, 102
    %v1213 = vpop.permute.xlu0 %1212
    %1214 = vrot.lane.b32.xlu0 %v124, 102
    %v1215 = vpop.permute.xlu0 %1214
    %1216 = vrot.lane.b32.xlu0 %v125, 102
    %v1217 = vpop.permute.xlu0 %1216
    %1218 = vrot.lane.b32.xlu0 %v126, 102
    %v1219 = vpop.permute.xlu0 %1218
    %1220 = vrot.lane.b32.xlu0 %v127, 102
    %v1221 = vpop.permute.xlu0 %1220
    %1222 = vrot.lane.b32.xlu0 %v128, 102
    %v1223 = vpop.permute.xlu0 %1222
    %1224 = vrot.lane.b32.xlu0 %v129, 102
    %v1225 = vpop.permute.xlu0 %1224
    %1226 = vrot.lane.b32.xlu0 %v130, 102
    %v1227 = vpop.permute.xlu0 %1226
    %v1236 = vmul.f32 %v1156, %v1213
    %v1237 = vmul.f32 %v1157, %v1215
    %v1238 = vmul.f32 %v1158, %v1217
    %v1239 = vmul.f32 %v1159, %v1219
    %v1240 = vmul.f32 %v1160, %v1221
    %v1241 = vmul.f32 %v1161, %v1223
    %v1242 = vmul.f32 %v1162, %v1225
    %v1243 = vmul.f32 %v1163, %v1227
    %1245 = vset.pattern.permute.xlu0 0
    %1246 = vperm.xlu0 %1245, %v1236
    %v1247 = vpop.permute.xlu0 %1246
    %1250 = vset.pattern.permute.xlu0 0
    %1251 = vperm.xlu0 %1250, %v1237
    %v1252 = vpop.permute.xlu0 %1251
    %1255 = vset.pattern.permute.xlu0 0
    %1256 = vperm.xlu0 %1255, %v1238
    %v1257 = vpop.permute.xlu0 %1256
    %1260 = vset.pattern.permute.xlu0 0
    %1261 = vperm.xlu0 %1260, %v1239
    %v1262 = vpop.permute.xlu0 %1261
    %1265 = vset.pattern.permute.xlu0 0
    %1266 = vperm.xlu0 %1265, %v1240
    %v1267 = vpop.permute.xlu0 %1266
    %1270 = vset.pattern.permute.xlu0 0
    %1271 = vperm.xlu0 %1270, %v1241
    %v1272 = vpop.permute.xlu0 %1271
    %1275 = vset.pattern.permute.xlu0 0
    %1276 = vperm.xlu0 %1275, %v1242
    %v1277 = vpop.permute.xlu0 %1276
    %1280 = vset.pattern.permute.xlu0 0
    %1281 = vperm.xlu0 %1280, %v1243
    %v1282 = vpop.permute.xlu0 %1281
    %v1284 = vmul.f32 %v1204, %v1247
    %v1285 = vmul.f32 %v1205, %v1252
    %v1286 = vmul.f32 %v1206, %v1257
    %v1287 = vmul.f32 %v1207, %v1262
    %v1288 = vmul.f32 %v1208, %v1267
    %v1289 = vmul.f32 %v1209, %v1272
    %v1290 = vmul.f32 %v1210, %v1277
    %v1291 = vmul.f32 %v1211, %v1282
    %1292 = vset.pattern.permute.xlu0 27
    %1293 = vperm.xlu0 %1292, %v123
    %v1294 = vpop.permute.xlu0 %1293
    %1296 = vset.pattern.permute.xlu0 27
    %1297 = vperm.xlu0 %1296, %v124
    %v1298 = vpop.permute.xlu0 %1297
    %1300 = vset.pattern.permute.xlu0 27
    %1301 = vperm.xlu0 %1300, %v125
    %v1302 = vpop.permute.xlu0 %1301
    %1304 = vset.pattern.permute.xlu0 27
    %1305 = vperm.xlu0 %1304, %v126
    %v1306 = vpop.permute.xlu0 %1305
    %1308 = vset.pattern.permute.xlu0 27
    %1309 = vperm.xlu0 %1308, %v127
    %v1310 = vpop.permute.xlu0 %1309
    %1312 = vset.pattern.permute.xlu0 27
    %1313 = vperm.xlu0 %1312, %v128
    %v1314 = vpop.permute.xlu0 %1313
    %1316 = vset.pattern.permute.xlu0 27
    %1317 = vperm.xlu0 %1316, %v129
    %v1318 = vpop.permute.xlu0 %1317
    %1320 = vset.pattern.permute.xlu0 27
    %1321 = vperm.xlu0 %1320, %v130
    %v1322 = vpop.permute.xlu0 %1321
    %v1324 = vadd.f32 %v1284, %v1294
    %v1325 = vadd.f32 %v1285, %v1298
    %v1326 = vadd.f32 %v1286, %v1302
    %v1327 = vadd.f32 %v1287, %v1306
    %v1328 = vadd.f32 %v1288, %v1310
    %v1329 = vadd.f32 %v1289, %v1314
    %v1330 = vadd.f32 %v1290, %v1318
    %v1331 = vadd.f32 %v1291, %v1322
    %vm1332 = vcmp.ge.f32.partialorder %v1324, 0.0
    %vm1333 = vcmp.ge.f32.partialorder %v1325, 0.0
    %vm1334 = vcmp.ge.f32.partialorder %v1326, 0.0
    %vm1335 = vcmp.ge.f32.partialorder %v1327, 0.0
    %vm1336 = vcmp.ge.f32.partialorder %v1328, 0.0
    %vm1337 = vcmp.ge.f32.partialorder %v1329, 0.0
    %vm1338 = vcmp.ge.f32.partialorder %v1330, 0.0
    %vm1339 = vcmp.ge.f32.partialorder %v1331, 0.0
    %v1340 = vmul.f32 %v1324, 0.2
    %v1341 = vmul.f32 %v1325, 0.2
    %v1342 = vmul.f32 %v1326, 0.2
    %v1343 = vmul.f32 %v1327, 0.2
    %v1344 = vmul.f32 %v1328, 0.2
    %v1345 = vmul.f32 %v1329, 0.2
    %v1346 = vmul.f32 %v1330, 0.2
    %v1347 = vmul.f32 %v1331, 0.2
    %v1348 = vsel %vm1332, %v1324, %v1340
    %v1349 = vsel %vm1333, %v1325, %v1341
    %v1350 = vsel %vm1334, %v1326, %v1342
    %v1351 = vsel %vm1335, %v1327, %v1343
    %v1352 = vsel %vm1336, %v1328, %v1344
    %v1353 = vsel %vm1337, %v1329, %v1345
    %v1354 = vsel %vm1338, %v1330, %v1346
    %v1355 = vsel %vm1339, %v1331, %v1347
    %s1356 = scalar_lea.vmem [#allocation6], 128
    %v1357 = vld [vmem:[%s1356] sm:$0xff]
    %v1358 = vld [vmem:[%s1356 + $0x8] sm:$0xff]
    %v1359 = vld [vmem:[%s1356 + $0x10] sm:$0xff]
    %v1360 = vld [vmem:[%s1356 + $0x18] sm:$0xff]
    %v1361 = vld [vmem:[%s1356 + $0x20] sm:$0xff]
    %v1362 = vld [vmem:[%s1356 + $0x28] sm:$0xff]
    %v1363 = vld [vmem:[%s1356 + $0x30] sm:$0xff]
    %v1364 = vld [vmem:[%s1356 + $0x38] sm:$0xff]
    %v1365 = vld [vmem:[%s1356 + $0x40] sm:$0xff]
    %v1366 = vld [vmem:[%s1356 + $0x48] sm:$0xff]
    %v1367 = vld [vmem:[%s1356 + $0x50] sm:$0xff]
    %v1368 = vld [vmem:[%s1356 + $0x58] sm:$0xff]
    %v1369 = vld [vmem:[%s1356 + $0x60] sm:$0xff]
    %v1370 = vld [vmem:[%s1356 + $0x68] sm:$0xff]
    %v1371 = vld [vmem:[%s1356 + $0x70] sm:$0xff]
    %v1372 = vld [vmem:[%s1356 + $0x78] sm:$0xff]
    %1373 = vrot.lane.b32.xlu0 %v1348, 127
    %v1374 = vpop.permute.xlu0 %1373
    %1375 = vrot.lane.b32.xlu0 %v1349, 127
    %v1376 = vpop.permute.xlu0 %1375
    %1377 = vrot.lane.b32.xlu0 %v1350, 127
    %v1378 = vpop.permute.xlu0 %1377
    %1379 = vrot.lane.b32.xlu0 %v1351, 127
    %v1380 = vpop.permute.xlu0 %1379
    %1381 = vrot.lane.b32.xlu0 %v1352, 127
    %v1382 = vpop.permute.xlu0 %1381
    %1383 = vrot.lane.b32.xlu0 %v1353, 127
    %v1384 = vpop.permute.xlu0 %1383
    %1385 = vrot.lane.b32.xlu0 %v1354, 127
    %v1386 = vpop.permute.xlu0 %1385
    %1387 = vrot.lane.b32.xlu0 %v1355, 127
    %v1388 = vpop.permute.xlu0 %1387
    %v1389 = vmax.f32 %v1348, %v1374
    %v1390 = vmax.f32 %v1349, %v1376
    %v1391 = vmax.f32 %v1350, %v1378
    %v1392 = vmax.f32 %v1351, %v1380
    %v1393 = vmax.f32 %v1352, %v1382
    %v1394 = vmax.f32 %v1353, %v1384
    %v1395 = vmax.f32 %v1354, %v1386
    %v1396 = vmax.f32 %v1355, %v1388
    %1397 = vmatprep.subr.mxu0 0.0
    %1398 = vmatpush1.msra.mxu0 %v1372
    %1399 = vmatprep.subr.mxu0 0.0
    %1400 = vmatpush1.msra.mxu0 %v1371
    %1401 = vmatprep.subr.mxu0 0.0
    %1402 = vmatpush1.msra.mxu0 %v1370
    %1403 = vmatprep.subr.mxu0 0.0
    %1404 = vmatpush1.msra.mxu0 %v1369
    %1405 = vmatprep.subr.mxu0 0.0
    %1406 = vmatpush1.msra.mxu0 %v1368
    %1407 = vmatprep.subr.mxu0 0.0
    %1408 = vmatpush1.msra.mxu0 %v1367
    %1409 = vmatprep.subr.mxu0 0.0
    %1410 = vmatpush1.msra.mxu0 %v1366
    %1411 = vmatprep.subr.mxu0 0.0
    %1412 = vmatpush1.msra.mxu0 %v1365
    %1413 = vmatprep.subr.mxu0 0.0
    %1414 = vmatpush1.msra.mxu0 %v1364
    %1415 = vmatprep.subr.mxu0 0.0
    %1416 = vmatpush1.msra.mxu0 %v1363
    %1417 = vmatprep.subr.mxu0 0.0
    %1418 = vmatpush1.msra.mxu0 %v1362
    %1419 = vmatprep.subr.mxu0 0.0
    %1420 = vmatpush1.msra.mxu0 %v1361
    %1421 = vmatprep.subr.mxu0 0.0
    %1422 = vmatpush1.msra.mxu0 %v1360
    %1423 = vmatprep.subr.mxu0 0.0
    %1424 = vmatpush1.msra.mxu0 %v1359
    %1425 = vmatprep.subr.mxu0 0.0
    %1426 = vmatpush1.msra.mxu0 %v1358
    %1427 = vmatprep.subr.mxu0 0.0
    %1428 = vmatpush1.msra.mxu0 %v1357
    %1429 = vmatprep.subr.mxu0 0.0
    %1430 = vmatpush2.msra.mxu0 0.0
    %1431 = vmatprep.subr.mxu0 0.0
    %1432 = vmatpush2.msra.mxu0 0.0
    %1433 = vmatprep.subr.mxu0 0.0
    %1434 = vmatpush2.msra.mxu0 0.0
    %1435 = vmatprep.subr.mxu0 0.0
    %1436 = vmatpush2.msra.mxu0 0.0
    %1437 = vmatprep.subr.mxu0 0.0
    %1438 = vmatpush2.msra.mxu0 0.0
    %1439 = vmatprep.subr.mxu0 0.0
    %1440 = vmatpush2.msra.mxu0 0.0
    %1441 = vmatprep.subr.mxu0 0.0
    %1442 = vmatpush2.msra.mxu0 0.0
    %1443 = vmatprep.subr.mxu0 0.0
    %1444 = vmatpush2.msra.mxu0 0.0
    %1445 = vmatprep.subr.mxu0 0.0
    %1446 = vmatpush2.msra.mxu0 0.0
    %1447 = vmatprep.subr.mxu0 0.0
    %1448 = vmatpush2.msra.mxu0 0.0
    %1449 = vmatprep.subr.mxu0 0.0
    %1450 = vmatpush2.msra.mxu0 0.0
    %1451 = vmatprep.subr.mxu0 0.0
    %1452 = vmatpush2.msra.mxu0 0.0
    %1453 = vmatprep.subr.mxu0 0.0
    %1454 = vmatpush2.msra.mxu0 0.0
    %1455 = vmatprep.subr.mxu0 0.0
    %1456 = vmatpush2.msra.mxu0 0.0
    %1457 = vmatprep.subr.mxu0 0.0
    %1458 = vmatpush2.msra.mxu0 0.0
    %1459 = vmatprep.subr.mxu0 0.0
    %1460 = vmatpush2.msra.mxu0 0.0
    %1461 = vmatprep.mubr.f32.mxu0 0.0
    %1462 = vmatmul.mubr.f32.gmra.mxu0 %v1389
    %v1463 = vpop.f32.mrf.mxu0
    %v1464 = vadd.f32 0.0, %v1463
    %v1465 = vpop.f32.mrf.mxu0
    %1466 = vmatprep.mubr.f32.mxu0 0.0
    %1467 = vmatmul.mubr.f32.gmra.mxu0 %v1390
    %v1468 = vpop.f32.mrf.mxu0
    %v1469 = vadd.f32 0.0, %v1468
    %v1470 = vpop.f32.mrf.mxu0
    %1471 = vmatprep.mubr.f32.mxu0 0.0
    %1472 = vmatmul.mubr.f32.gmra.mxu0 %v1391
    %v1473 = vpop.f32.mrf.mxu0
    %v1474 = vadd.f32 0.0, %v1473
    %v1475 = vpop.f32.mrf.mxu0
    %1476 = vmatprep.mubr.f32.mxu0 0.0
    %1477 = vmatmul.mubr.f32.gmra.mxu0 %v1392
    %v1478 = vpop.f32.mrf.mxu0
    %v1479 = vadd.f32 0.0, %v1478
    %v1480 = vpop.f32.mrf.mxu0
    %1481 = vmatprep.mubr.f32.mxu0 0.0
    %1482 = vmatmul.mubr.f32.gmra.mxu0 %v1393
    %v1483 = vpop.f32.mrf.mxu0
    %v1484 = vadd.f32 0.0, %v1483
    %v1485 = vpop.f32.mrf.mxu0
    %1486 = vmatprep.mubr.f32.mxu0 0.0
    %1487 = vmatmul.mubr.f32.gmra.mxu0 %v1394
    %v1488 = vpop.f32.mrf.mxu0
    %v1489 = vadd.f32 0.0, %v1488
    %v1490 = vpop.f32.mrf.mxu0
    %1491 = vmatprep.mubr.f32.mxu0 0.0
    %1492 = vmatmul.mubr.f32.gmra.mxu0 %v1395
    %v1493 = vpop.f32.mrf.mxu0
    %v1494 = vadd.f32 0.0, %v1493
    %v1495 = vpop.f32.mrf.mxu0
    %1496 = vmatprep.mubr.f32.mxu0 0.0
    %1497 = vmatmul.mubr.f32.gmra.mxu0 %v1396
    %v1498 = vpop.f32.mrf.mxu0
    %v1499 = vadd.f32 0.0, %v1498
    %v1500 = vpop.f32.mrf.mxu0
    %1501 = vdwg.mxu0
    %1502 = vrot.lane.b32.xlu0 %v1464, 1
    %v1503 = vpop.permute.xlu0 %1502
    %1504 = vrot.lane.b32.xlu0 %v1469, 1
    %v1505 = vpop.permute.xlu0 %1504
    %1506 = vrot.lane.b32.xlu0 %v1474, 1
    %v1507 = vpop.permute.xlu0 %1506
    %1508 = vrot.lane.b32.xlu0 %v1479, 1
    %v1509 = vpop.permute.xlu0 %1508
    %1510 = vrot.lane.b32.xlu0 %v1484, 1
    %v1511 = vpop.permute.xlu0 %1510
    %1512 = vrot.lane.b32.xlu0 %v1489, 1
    %v1513 = vpop.permute.xlu0 %1512
    %1514 = vrot.lane.b32.xlu0 %v1494, 1
    %v1515 = vpop.permute.xlu0 %1514
    %1516 = vrot.lane.b32.xlu0 %v1499, 1
    %v1517 = vpop.permute.xlu0 %1516
    %1518 = vrot.lane.b32.xlu0 %v1464, 127
    %v1519 = vpop.permute.xlu0 %1518
    %1520 = vrot.lane.b32.xlu0 %v1469, 127
    %v1521 = vpop.permute.xlu0 %1520
    %1522 = vrot.lane.b32.xlu0 %v1474, 127
    %v1523 = vpop.permute.xlu0 %1522
    %1524 = vrot.lane.b32.xlu0 %v1479, 127
    %v1525 = vpop.permute.xlu0 %1524
    %1526 = vrot.lane.b32.xlu0 %v1484, 127
    %v1527 = vpop.permute.xlu0 %1526
    %1528 = vrot.lane.b32.xlu0 %v1489, 127
    %v1529 = vpop.permute.xlu0 %1528
    %1530 = vrot.lane.b32.xlu0 %v1494, 127
    %v1531 = vpop.permute.xlu0 %1530
    %1532 = vrot.lane.b32.xlu0 %v1499, 127
    %v1533 = vpop.permute.xlu0 %1532
    %s1534 = scalar_lea.vmem [#allocation4], 128
    %v1535 = vld [vmem:[%s1534] sm:$0xff]
    %v1536 = vld [vmem:[%s1534 + $0x8] sm:$0xff]
    %v1537 = vld [vmem:[%s1534 + $0x10] sm:$0xff]
    %v1538 = vld [vmem:[%s1534 + $0x18] sm:$0xff]
    %v1539 = vld [vmem:[%s1534 + $0x20] sm:$0xff]
    %v1540 = vld [vmem:[%s1534 + $0x28] sm:$0xff]
    %v1541 = vld [vmem:[%s1534 + $0x30] sm:$0xff]
    %v1542 = vld [vmem:[%s1534 + $0x38] sm:$0xff]
    %v1543 = vld [vmem:[%s1534 + $0x40] sm:$0xff]
    %v1544 = vld [vmem:[%s1534 + $0x48] sm:$0xff]
    %v1545 = vld [vmem:[%s1534 + $0x50] sm:$0xff]
    %v1546 = vld [vmem:[%s1534 + $0x58] sm:$0xff]
    %v1547 = vld [vmem:[%s1534 + $0x60] sm:$0xff]
    %v1548 = vld [vmem:[%s1534 + $0x68] sm:$0xff]
    %v1549 = vld [vmem:[%s1534 + $0x70] sm:$0xff]
    %v1550 = vld [vmem:[%s1534 + $0x78] sm:$0xff]
    %v1552 = vsel %vm841, %v1536, 0
    %v1555 = vsel %vm841, %v1538, 0
    %v1558 = vsel %vm841, %v1540, 0
    %v1561 = vsel %vm841, %v1542, 0
    %v1564 = vsel %vm841, %v1544, 0
    %v1567 = vsel %vm841, %v1546, 0
    %v1570 = vsel %vm841, %v1548, 0
    %v1573 = vsel %vm841, %v1550, 0
    %1575 = vmatprep.subr.mxu0 0.0
    %1576 = vmatpush1.msra.mxu0 %v1499
    %1577 = vmatprep.subr.mxu0 0.0
    %1578 = vmatpush1.msra.mxu0 %v1494
    %1579 = vmatprep.subr.mxu0 0.0
    %1580 = vmatpush1.msra.mxu0 %v1489
    %1581 = vmatprep.subr.mxu0 0.0
    %1582 = vmatpush1.msra.mxu0 %v1484
    %1583 = vmatprep.subr.mxu0 0.0
    %1584 = vmatpush1.msra.mxu0 %v1479
    %1585 = vmatprep.subr.mxu0 0.0
    %1586 = vmatpush1.msra.mxu0 %v1474
    %1587 = vmatprep.subr.mxu0 0.0
    %1588 = vmatpush1.msra.mxu0 %v1469
    %1589 = vmatprep.subr.mxu0 0.0
    %1590 = vmatpush1.msra.mxu0 %v1464
    %1591 = vmatprep.subr.mxu0 0.0
    %1592 = vmatpush1.msra.mxu0 %v1517
    %1593 = vmatprep.subr.mxu0 0.0
    %1594 = vmatpush1.msra.mxu0 %v1515
    %1595 = vmatprep.subr.mxu0 0.0
    %1596 = vmatpush1.msra.mxu0 %v1513
    %1597 = vmatprep.subr.mxu0 0.0
    %1598 = vmatpush1.msra.mxu0 %v1511
    %1599 = vmatprep.subr.mxu0 0.0
    %1600 = vmatpush1.msra.mxu0 %v1509
    %1601 = vmatprep.subr.mxu0 0.0
    %1602 = vmatpush1.msra.mxu0 %v1507
    %1603 = vmatprep.subr.mxu0 0.0
    %1604 = vmatpush1.msra.mxu0 %v1505
    %1605 = vmatprep.subr.mxu0 0.0
    %1606 = vmatpush1.msra.mxu0 %v1503
    %1607 = vmatprep.subr.mxu0 0.0
    %1608 = vmatpush2.msra.mxu0 0.0
    %1609 = vmatprep.subr.mxu0 0.0
    %1610 = vmatpush2.msra.mxu0 0.0
    %1611 = vmatprep.subr.mxu0 0.0
    %1612 = vmatpush2.msra.mxu0 0.0
    %1613 = vmatprep.subr.mxu0 0.0
    %1614 = vmatpush2.msra.mxu0 0.0
    %1615 = vmatprep.subr.mxu0 0.0
    %1616 = vmatpush2.msra.mxu0 0.0
    %1617 = vmatprep.subr.mxu0 0.0
    %1618 = vmatpush2.msra.mxu0 0.0
    %1619 = vmatprep.subr.mxu0 0.0
    %1620 = vmatpush2.msra.mxu0 0.0
    %1621 = vmatprep.subr.mxu0 0.0
    %1622 = vmatpush2.msra.mxu0 0.0
    %1623 = vmatprep.subr.mxu0 0.0
    %1624 = vmatpush2.msra.mxu0 %v1533
    %1625 = vmatprep.subr.mxu0 0.0
    %1626 = vmatpush2.msra.mxu0 %v1531
    %1627 = vmatprep.subr.mxu0 0.0
    %1628 = vmatpush2.msra.mxu0 %v1529
    %1629 = vmatprep.subr.mxu0 0.0
    %1630 = vmatpush2.msra.mxu0 %v1527
    %1631 = vmatprep.subr.mxu0 0.0
    %1632 = vmatpush2.msra.mxu0 %v1525
    %1633 = vmatprep.subr.mxu0 0.0
    %1634 = vmatpush2.msra.mxu0 %v1523
    %1635 = vmatprep.subr.mxu0 0.0
    %1636 = vmatpush2.msra.mxu0 %v1521
    %1637 = vmatprep.subr.mxu0 0.0
    %1638 = vmatpush2.msra.mxu0 %v1519
    %1639 = vmatprep.mubr.f32.mxu0 %v1552
    %1640 = vmatmul.mubr.f32.gmra.mxu0 %v1535
    %v1641 = vpop.f32.mrf.mxu0
    %v1642 = vadd.f32 0.0, %v1641
    %v1643 = vpop.f32.mrf.mxu0
    %1644 = vmatprep.mubr.f32.mxu0 %v1555
    %1645 = vmatmul.mubr.f32.gmra.mxu0 %v1537
    %v1646 = vpop.f32.mrf.mxu0
    %v1647 = vadd.f32 0.0, %v1646
    %v1648 = vpop.f32.mrf.mxu0
    %1649 = vmatprep.mubr.f32.mxu0 %v1558
    %1650 = vmatmul.mubr.f32.gmra.mxu0 %v1539
    %v1651 = vpop.f32.mrf.mxu0
    %v1652 = vadd.f32 0.0, %v1651
    %v1653 = vpop.f32.mrf.mxu0
    %1654 = vmatprep.mubr.f32.mxu0 %v1561
    %1655 = vmatmul.mubr.f32.gmra.mxu0 %v1541
    %v1656 = vpop.f32.mrf.mxu0
    %v1657 = vadd.f32 0.0, %v1656
    %v1658 = vpop.f32.mrf.mxu0
    %1659 = vmatprep.mubr.f32.mxu0 %v1564
    %1660 = vmatmul.mubr.f32.gmra.mxu0 %v1543
    %v1661 = vpop.f32.mrf.mxu0
    %v1662 = vadd.f32 0.0, %v1661
    %v1663 = vpop.f32.mrf.mxu0
    %1664 = vmatprep.mubr.f32.mxu0 %v1567
    %1665 = vmatmul.mubr.f32.gmra.mxu0 %v1545
    %v1666 = vpop.f32.mrf.mxu0
    %v1667 = vadd.f32 0.0, %v1666
    %v1668 = vpop.f32.mrf.mxu0
    %1669 = vmatprep.mubr.f32.mxu0 %v1570
    %1670 = vmatmul.mubr.f32.gmra.mxu0 %v1547
    %v1671 = vpop.f32.mrf.mxu0
    %v1672 = vadd.f32 0.0, %v1671
    %v1673 = vpop.f32.mrf.mxu0
    %1674 = vmatprep.mubr.f32.mxu0 %v1573
    %1675 = vmatmul.mubr.f32.gmra.mxu0 %v1549
    %v1676 = vpop.f32.mrf.mxu0
    %v1677 = vadd.f32 0.0, %v1676
    %v1678 = vpop.f32.mrf.mxu0
    %1679 = vdwg.mxu0
    %vm1680 = vcmp.lt.s32.totalorder %v92, 25
    %v1681 = vsel %vm1680, %v1642, 0.0
    %v1682 = vsel %vm1680, %v1647, 0.0
    %v1683 = vsel %vm1680, %v1652, 0.0
    %v1684 = vsel %vm1680, %v1657, 0.0
    %v1685 = vsel %vm1680, %v1662, 0.0
    %v1686 = vsel %vm1680, %v1667, 0.0
    %v1687 = vsel %vm1680, %v1672, 0.0
    %v1688 = vsel %vm1680, %v1677, 0.0
    %1689 = vadd.xlane.f32.xlu0 %v1681
    %v1690 = vpop.xlane.xlu0 %1689
    %1691 = vadd.xlane.f32.xlu0 %v1682
    %v1692 = vpop.xlane.xlu0 %1691
    %1693 = vadd.xlane.f32.xlu0 %v1683
    %v1694 = vpop.xlane.xlu0 %1693
    %1695 = vadd.xlane.f32.xlu0 %v1684
    %v1696 = vpop.xlane.xlu0 %1695
    %1697 = vadd.xlane.f32.xlu0 %v1685
    %v1698 = vpop.xlane.xlu0 %1697
    %1699 = vadd.xlane.f32.xlu0 %v1686
    %v1700 = vpop.xlane.xlu0 %1699
    %1701 = vadd.xlane.f32.xlu0 %v1687
    %v1702 = vpop.xlane.xlu0 %1701
    %1703 = vadd.xlane.f32.xlu0 %v1688
    %v1704 = vpop.xlane.xlu0 %1703
    %v1705 = vrot.slane %v1690, 1
    %v1706 = vrot.slane %v1692, 1
    %v1707 = vrot.slane %v1694, 1
    %v1708 = vrot.slane %v1696, 1
    %v1709 = vrot.slane %v1698, 1
    %v1710 = vrot.slane %v1700, 1
    %v1711 = vrot.slane %v1702, 1
    %v1712 = vrot.slane %v1704, 1
    %v1713 = vsel %vm294, %v1711, %v1712
    %v1714 = vsel %vm294, %v1710, %v1711
    %v1715 = vsel %vm294, %v1709, %v1710
    %v1716 = vsel %vm294, %v1708, %v1709
    %v1717 = vsel %vm294, %v1707, %v1708
    %v1718 = vsel %vm294, %v1706, %v1707
    %v1719 = vsel %vm294, %v1705, %v1706
    %v1720 = vsel %vm294, %v1712, %v1705
    %v1721 = vadd.f32 %v1690, %v1719
    %v1722 = vadd.f32 %v1692, %v1718
    %v1723 = vadd.f32 %v1694, %v1717
    %v1724 = vadd.f32 %v1696, %v1716
    %v1725 = vadd.f32 %v1698, %v1715
    %v1726 = vadd.f32 %v1700, %v1714
    %v1727 = vadd.f32 %v1702, %v1713
    %v1728 = vadd.f32 %v1704, %v1720
    %v1729 = vrot.slane %v1721, 7
    %v1730 = vrot.slane %v1722, 7
    %v1731 = vrot.slane %v1723, 7
    %v1732 = vrot.slane %v1724, 7
    %v1733 = vrot.slane %v1725, 7
    %v1734 = vrot.slane %v1726, 7
    %v1735 = vrot.slane %v1727, 7
    %v1736 = vrot.slane %v1728, 7
    %v1737 = vsel %vm319, %v1735, %v1736
    %v1738 = vsel %vm319, %v1734, %v1735
    %v1739 = vsel %vm319, %v1733, %v1734
    %v1740 = vsel %vm319, %v1732, %v1733
    %v1741 = vsel %vm319, %v1731, %v1732
    %v1742 = vsel %vm319, %v1730, %v1731
    %v1743 = vsel %vm319, %v1729, %v1730
    %v1744 = vsel %vm319, %v1736, %v1729
    %v1745 = vsel %vm110, %v1721, %v1744
    %v1746 = vsel %vm111, %v1722, %v1743
    %v1747 = vsel %vm112, %v1723, %v1742
    %v1748 = vsel %vm113, %v1724, %v1741
    %v1749 = vsel %vm114, %v1725, %v1740
    %v1750 = vsel %vm115, %v1726, %v1739
    %v1751 = vsel %vm116, %v1727, %v1738
    %v1752 = vsel %vm117, %v1728, %v1737
    %v1753 = vmul.f32 %v1745, 0.02
    %v1754 = vmul.f32 %v1746, 0.02
    %v1755 = vmul.f32 %v1747, 0.02
    %v1756 = vmul.f32 %v1748, 0.02
    %v1757 = vmul.f32 %v1749, 0.02
    %v1758 = vmul.f32 %v1750, 0.02
    %v1759 = vmul.f32 %v1751, 0.02
    %v1760 = vmul.f32 %v1752, 0.02
    %v1761 = vmul.f32 %v1681, %v1681
    %v1762 = vmul.f32 %v1682, %v1682
    %v1763 = vmul.f32 %v1683, %v1683
    %v1764 = vmul.f32 %v1684, %v1684
    %v1765 = vmul.f32 %v1685, %v1685
    %v1766 = vmul.f32 %v1686, %v1686
    %v1767 = vmul.f32 %v1687, %v1687
    %v1768 = vmul.f32 %v1688, %v1688
    %1769 = vadd.xlane.f32.xlu0 %v1761
    %v1770 = vpop.xlane.xlu0 %1769
    %1771 = vadd.xlane.f32.xlu0 %v1762
    %v1772 = vpop.xlane.xlu0 %1771
    %1773 = vadd.xlane.f32.xlu0 %v1763
    %v1774 = vpop.xlane.xlu0 %1773
    %1775 = vadd.xlane.f32.xlu0 %v1764
    %v1776 = vpop.xlane.xlu0 %1775
    %1777 = vadd.xlane.f32.xlu0 %v1765
    %v1778 = vpop.xlane.xlu0 %1777
    %1779 = vadd.xlane.f32.xlu0 %v1766
    %v1780 = vpop.xlane.xlu0 %1779
    %1781 = vadd.xlane.f32.xlu0 %v1767
    %v1782 = vpop.xlane.xlu0 %1781
    %1783 = vadd.xlane.f32.xlu0 %v1768
    %v1784 = vpop.xlane.xlu0 %1783
    %v1785 = vrot.slane %v1770, 1
    %v1786 = vrot.slane %v1772, 1
    %v1787 = vrot.slane %v1774, 1
    %v1788 = vrot.slane %v1776, 1
    %v1789 = vrot.slane %v1778, 1
    %v1790 = vrot.slane %v1780, 1
    %v1791 = vrot.slane %v1782, 1
    %v1792 = vrot.slane %v1784, 1
    %v1793 = vsel %vm294, %v1791, %v1792
    %v1794 = vsel %vm294, %v1790, %v1791
    %v1795 = vsel %vm294, %v1789, %v1790
    %v1796 = vsel %vm294, %v1788, %v1789
    %v1797 = vsel %vm294, %v1787, %v1788
    %v1798 = vsel %vm294, %v1786, %v1787
    %v1799 = vsel %vm294, %v1785, %v1786
    %v1800 = vsel %vm294, %v1792, %v1785
    %v1801 = vadd.f32 %v1770, %v1799
    %v1802 = vadd.f32 %v1772, %v1798
    %v1803 = vadd.f32 %v1774, %v1797
    %v1804 = vadd.f32 %v1776, %v1796
    %v1805 = vadd.f32 %v1778, %v1795
    %v1806 = vadd.f32 %v1780, %v1794
    %v1807 = vadd.f32 %v1782, %v1793
    %v1808 = vadd.f32 %v1784, %v1800
    %v1809 = vrot.slane %v1801, 7
    %v1810 = vrot.slane %v1802, 7
    %v1811 = vrot.slane %v1803, 7
    %v1812 = vrot.slane %v1804, 7
    %v1813 = vrot.slane %v1805, 7
    %v1814 = vrot.slane %v1806, 7
    %v1815 = vrot.slane %v1807, 7
    %v1816 = vrot.slane %v1808, 7
    %v1817 = vsel %vm319, %v1815, %v1816
    %v1818 = vsel %vm319, %v1814, %v1815
    %v1819 = vsel %vm319, %v1813, %v1814
    %v1820 = vsel %vm319, %v1812, %v1813
    %v1821 = vsel %vm319, %v1811, %v1812
    %v1822 = vsel %vm319, %v1810, %v1811
    %v1823 = vsel %vm319, %v1809, %v1810
    %v1824 = vsel %vm319, %v1816, %v1809
    %v1825 = vsel %vm110, %v1801, %v1824
    %v1826 = vsel %vm111, %v1802, %v1823
    %v1827 = vsel %vm112, %v1803, %v1822
    %v1828 = vsel %vm113, %v1804, %v1821
    %v1829 = vsel %vm114, %v1805, %v1820
    %v1830 = vsel %vm115, %v1806, %v1819
    %v1831 = vsel %vm116, %v1807, %v1818
    %v1832 = vsel %vm117, %v1808, %v1817
    %v1833 = vmul.f32 %v1825, 0.02
    %v1834 = vmul.f32 %v1826, 0.02
    %v1835 = vmul.f32 %v1827, 0.02
    %v1836 = vmul.f32 %v1828, 0.02
    %v1837 = vmul.f32 %v1829, 0.02
    %v1838 = vmul.f32 %v1830, 0.02
    %v1839 = vmul.f32 %v1831, 0.02
    %v1840 = vmul.f32 %v1832, 0.02
    %v1841 = vmul.f32 %v1753, %v1753
    %v1842 = vmul.f32 %v1754, %v1754
    %v1843 = vmul.f32 %v1755, %v1755
    %v1844 = vmul.f32 %v1756, %v1756
    %v1845 = vmul.f32 %v1757, %v1757
    %v1846 = vmul.f32 %v1758, %v1758
    %v1847 = vmul.f32 %v1759, %v1759
    %v1848 = vmul.f32 %v1760, %v1760
    %v1849 = vsub.f32 %v1833, %v1841
    %v1850 = vsub.f32 %v1834, %v1842
    %v1851 = vsub.f32 %v1835, %v1843
    %v1852 = vsub.f32 %v1836, %v1844
    %v1853 = vsub.f32 %v1837, %v1845
    %v1854 = vsub.f32 %v1838, %v1846
    %v1855 = vsub.f32 %v1839, %v1847
    %v1856 = vsub.f32 %v1840, %v1848
    %v1857 = vadd.f32 %v1849, 0.8
    %v1858 = vadd.f32 %v1850, 0.8
    %v1859 = vadd.f32 %v1851, 0.8
    %v1860 = vadd.f32 %v1852, 0.8
    %v1861 = vadd.f32 %v1853, 0.8
    %v1862 = vadd.f32 %v1854, 0.8
    %v1863 = vadd.f32 %v1855, 0.8
    %v1864 = vadd.f32 %v1856, 0.8
    %v1865 = vrsqrt.pop %v1857
    %v1866 = vrsqrt.pop %v1858
    %v1867 = vrsqrt.pop %v1859
    %v1868 = vrsqrt.pop %v1860
    %v1869 = vrsqrt.pop %v1861
    %v1870 = vrsqrt.pop %v1862
    %v1871 = vrsqrt.pop %v1863
    %v1872 = vrsqrt.pop %v1864
    %1874 = vset.pattern.permute.xlu0 0
    %1875 = vperm.xlu0 %1874, %v1753
    %v1876 = vpop.permute.xlu0 %1875
    %1879 = vset.pattern.permute.xlu0 0
    %1880 = vperm.xlu0 %1879, %v1754
    %v1881 = vpop.permute.xlu0 %1880
    %1884 = vset.pattern.permute.xlu0 0
    %1885 = vperm.xlu0 %1884, %v1755
    %v1886 = vpop.permute.xlu0 %1885
    %1889 = vset.pattern.permute.xlu0 0
    %1890 = vperm.xlu0 %1889, %v1756
    %v1891 = vpop.permute.xlu0 %1890
    %1894 = vset.pattern.permute.xlu0 0
    %1895 = vperm.xlu0 %1894, %v1757
    %v1896 = vpop.permute.xlu0 %1895
    %1899 = vset.pattern.permute.xlu0 0
    %1900 = vperm.xlu0 %1899, %v1758
    %v1901 = vpop.permute.xlu0 %1900
    %1904 = vset.pattern.permute.xlu0 0
    %1905 = vperm.xlu0 %1904, %v1759
    %v1906 = vpop.permute.xlu0 %1905
    %1909 = vset.pattern.permute.xlu0 0
    %1910 = vperm.xlu0 %1909, %v1760
    %v1911 = vpop.permute.xlu0 %1910
    %v1913 = vsub.f32 %v1681, %v1876
    %v1914 = vsub.f32 %v1682, %v1881
    %v1915 = vsub.f32 %v1683, %v1886
    %v1916 = vsub.f32 %v1684, %v1891
    %v1917 = vsub.f32 %v1685, %v1896
    %v1918 = vsub.f32 %v1686, %v1901
    %v1919 = vsub.f32 %v1687, %v1906
    %v1920 = vsub.f32 %v1688, %v1911
    %1921 = vrot.lane.b32.xlu0 %v123, 100
    %v1922 = vpop.permute.xlu0 %1921
    %1923 = vrot.lane.b32.xlu0 %v124, 100
    %v1924 = vpop.permute.xlu0 %1923
    %1925 = vrot.lane.b32.xlu0 %v125, 100
    %v1926 = vpop.permute.xlu0 %1925
    %1927 = vrot.lane.b32.xlu0 %v126, 100
    %v1928 = vpop.permute.xlu0 %1927
    %1929 = vrot.lane.b32.xlu0 %v127, 100
    %v1930 = vpop.permute.xlu0 %1929
    %1931 = vrot.lane.b32.xlu0 %v128, 100
    %v1932 = vpop.permute.xlu0 %1931
    %1933 = vrot.lane.b32.xlu0 %v129, 100
    %v1934 = vpop.permute.xlu0 %1933
    %1935 = vrot.lane.b32.xlu0 %v130, 100
    %v1936 = vpop.permute.xlu0 %1935
    %v1945 = vmul.f32 %v1865, %v1922
    %v1946 = vmul.f32 %v1866, %v1924
    %v1947 = vmul.f32 %v1867, %v1926
    %v1948 = vmul.f32 %v1868, %v1928
    %v1949 = vmul.f32 %v1869, %v1930
    %v1950 = vmul.f32 %v1870, %v1932
    %v1951 = vmul.f32 %v1871, %v1934
    %v1952 = vmul.f32 %v1872, %v1936
    %1954 = vset.pattern.permute.xlu0 0
    %1955 = vperm.xlu0 %1954, %v1945
    %v1956 = vpop.permute.xlu0 %1955
    %1959 = vset.pattern.permute.xlu0 0
    %1960 = vperm.xlu0 %1959, %v1946
    %v1961 = vpop.permute.xlu0 %1960
    %1964 = vset.pattern.permute.xlu0 0
    %1965 = vperm.xlu0 %1964, %v1947
    %v1966 = vpop.permute.xlu0 %1965
    %1969 = vset.pattern.permute.xlu0 0
    %1970 = vperm.xlu0 %1969, %v1948
    %v1971 = vpop.permute.xlu0 %1970
    %1974 = vset.pattern.permute.xlu0 0
    %1975 = vperm.xlu0 %1974, %v1949
    %v1976 = vpop.permute.xlu0 %1975
    %1979 = vset.pattern.permute.xlu0 0
    %1980 = vperm.xlu0 %1979, %v1950
    %v1981 = vpop.permute.xlu0 %1980
    %1984 = vset.pattern.permute.xlu0 0
    %1985 = vperm.xlu0 %1984, %v1951
    %v1986 = vpop.permute.xlu0 %1985
    %1989 = vset.pattern.permute.xlu0 0
    %1990 = vperm.xlu0 %1989, %v1952
    %v1991 = vpop.permute.xlu0 %1990
    %v1993 = vmul.f32 %v1913, %v1956
    %v1994 = vmul.f32 %v1914, %v1961
    %v1995 = vmul.f32 %v1915, %v1966
    %v1996 = vmul.f32 %v1916, %v1971
    %v1997 = vmul.f32 %v1917, %v1976
    %v1998 = vmul.f32 %v1918, %v1981
    %v1999 = vmul.f32 %v1919, %v1986
    %v2000 = vmul.f32 %v1920, %v1991
    %2001 = vset.pattern.permute.xlu0 29
    %2002 = vperm.xlu0 %2001, %v123
    %v2003 = vpop.permute.xlu0 %2002
    %2005 = vset.pattern.permute.xlu0 29
    %2006 = vperm.xlu0 %2005, %v124
    %v2007 = vpop.permute.xlu0 %2006
    %2009 = vset.pattern.permute.xlu0 29
    %2010 = vperm.xlu0 %2009, %v125
    %v2011 = vpop.permute.xlu0 %2010
    %2013 = vset.pattern.permute.xlu0 29
    %2014 = vperm.xlu0 %2013, %v126
    %v2015 = vpop.permute.xlu0 %2014
    %2017 = vset.pattern.permute.xlu0 29
    %2018 = vperm.xlu0 %2017, %v127
    %v2019 = vpop.permute.xlu0 %2018
    %2021 = vset.pattern.permute.xlu0 29
    %2022 = vperm.xlu0 %2021, %v128
    %v2023 = vpop.permute.xlu0 %2022
    %2025 = vset.pattern.permute.xlu0 29
    %2026 = vperm.xlu0 %2025, %v129
    %v2027 = vpop.permute.xlu0 %2026
    %2029 = vset.pattern.permute.xlu0 29
    %2030 = vperm.xlu0 %2029, %v130
    %v2031 = vpop.permute.xlu0 %2030
    %v2033 = vadd.f32 %v1993, %v2003
    %v2034 = vadd.f32 %v1994, %v2007
    %v2035 = vadd.f32 %v1995, %v2011
    %v2036 = vadd.f32 %v1996, %v2015
    %v2037 = vadd.f32 %v1997, %v2019
    %v2038 = vadd.f32 %v1998, %v2023
    %v2039 = vadd.f32 %v1999, %v2027
    %v2040 = vadd.f32 %v2000, %v2031
    %vm2041 = vcmp.ge.f32.partialorder %v2033, 0.0
    %vm2042 = vcmp.ge.f32.partialorder %v2034, 0.0
    %vm2043 = vcmp.ge.f32.partialorder %v2035, 0.0
    %vm2044 = vcmp.ge.f32.partialorder %v2036, 0.0
    %vm2045 = vcmp.ge.f32.partialorder %v2037, 0.0
    %vm2046 = vcmp.ge.f32.partialorder %v2038, 0.0
    %vm2047 = vcmp.ge.f32.partialorder %v2039, 0.0
    %vm2048 = vcmp.ge.f32.partialorder %v2040, 0.0
    %v2049 = vmul.f32 %v2033, 0.2
    %v2050 = vmul.f32 %v2034, 0.2
    %v2051 = vmul.f32 %v2035, 0.2
    %v2052 = vmul.f32 %v2036, 0.2
    %v2053 = vmul.f32 %v2037, 0.2
    %v2054 = vmul.f32 %v2038, 0.2
    %v2055 = vmul.f32 %v2039, 0.2
    %v2056 = vmul.f32 %v2040, 0.2
    %v2057 = vsel %vm2041, %v2033, %v2049
    %v2058 = vsel %vm2042, %v2034, %v2050
    %v2059 = vsel %vm2043, %v2035, %v2051
    %v2060 = vsel %vm2044, %v2036, %v2052
    %v2061 = vsel %vm2045, %v2037, %v2053
    %v2062 = vsel %vm2046, %v2038, %v2054
    %v2063 = vsel %vm2047, %v2039, %v2055
    %v2064 = vsel %vm2048, %v2040, %v2056
    %v2065 = vsel %vm1680, %v2057, 0.0
    %v2066 = vsel %vm1680, %v2058, 0.0
    %v2067 = vsel %vm1680, %v2059, 0.0
    %v2068 = vsel %vm1680, %v2060, 0.0
    %v2069 = vsel %vm1680, %v2061, 0.0
    %v2070 = vsel %vm1680, %v2062, 0.0
    %v2071 = vsel %vm1680, %v2063, 0.0
    %v2072 = vsel %vm1680, %v2064, 0.0
    %v2073 = vshra.s32 %v94, 1
    %v2074 = vshra.s32 %v95, 1
    %v2075 = vshra.s32 %v96, 1
    %v2076 = vshra.s32 %v97, 1
    %v2077 = vshra.s32 %v98, 1
    %v2078 = vshra.s32 %v99, 1
    %v2079 = vshra.s32 %v100, 1
    %v2080 = vshra.s32 %v101, 1
    %v2081 = vand.u32 %v2073, 3
    %v2082 = vand.u32 %v2074, 3
    %v2083 = vand.u32 %v2075, 3
    %v2084 = vand.u32 %v2076, 3
    %v2085 = vand.u32 %v2077, 3
    %v2086 = vand.u32 %v2078, 3
    %v2087 = vand.u32 %v2079, 3
    %v2088 = vand.u32 %v2080, 3
    %vm2089 = vcmp.eq.s32.totalorder %v2081, 0
    %vm2090 = vcmp.eq.s32.totalorder %v2082, 0
    %vm2091 = vcmp.eq.s32.totalorder %v2083, 0
    %vm2092 = vcmp.eq.s32.totalorder %v2084, 0
    %vm2093 = vcmp.eq.s32.totalorder %v2085, 0
    %vm2094 = vcmp.eq.s32.totalorder %v2086, 0
    %vm2095 = vcmp.eq.s32.totalorder %v2087, 0
    %vm2096 = vcmp.eq.s32.totalorder %v2088, 0
    %v2097 = vsel %vm2089, %v2065, 0.0
    %v2098 = vsel %vm2090, %v2066, 0.0
    %v2099 = vsel %vm2091, %v2067, 0.0
    %v2100 = vsel %vm2092, %v2068, 0.0
    %v2101 = vsel %vm2093, %v2069, 0.0
    %v2102 = vsel %vm2094, %v2070, 0.0
    %v2103 = vsel %vm2095, %v2071, 0.0
    %v2104 = vsel %vm2096, %v2072, 0.0
    %vm2105 = vcmp.eq.s32.totalorder %v2081, 1
    %vm2106 = vcmp.eq.s32.totalorder %v2082, 1
    %vm2107 = vcmp.eq.s32.totalorder %v2083, 1
    %vm2108 = vcmp.eq.s32.totalorder %v2084, 1
    %vm2109 = vcmp.eq.s32.totalorder %v2085, 1
    %vm2110 = vcmp.eq.s32.totalorder %v2086, 1
    %vm2111 = vcmp.eq.s32.totalorder %v2087, 1
    %vm2112 = vcmp.eq.s32.totalorder %v2088, 1
    %2113 = vrot.lane.b32.xlu0 %v2065, 25
    %v2114 = vpop.permute.xlu0 %2113
    %2115 = vrot.lane.b32.xlu0 %v2066, 25
    %v2116 = vpop.permute.xlu0 %2115
    %2117 = vrot.lane.b32.xlu0 %v2067, 25
    %v2118 = vpop.permute.xlu0 %2117
    %2119 = vrot.lane.b32.xlu0 %v2068, 25
    %v2120 = vpop.permute.xlu0 %2119
    %2121 = vrot.lane.b32.xlu0 %v2069, 25
    %v2122 = vpop.permute.xlu0 %2121
    %2123 = vrot.lane.b32.xlu0 %v2070, 25
    %v2124 = vpop.permute.xlu0 %2123
    %2125 = vrot.lane.b32.xlu0 %v2071, 25
    %v2126 = vpop.permute.xlu0 %2125
    %2127 = vrot.lane.b32.xlu0 %v2072, 25
    %v2128 = vpop.permute.xlu0 %2127
    %v2129 = vsel %vm2105, %v2114, 0.0
    %v2130 = vsel %vm2106, %v2116, 0.0
    %v2131 = vsel %vm2107, %v2118, 0.0
    %v2132 = vsel %vm2108, %v2120, 0.0
    %v2133 = vsel %vm2109, %v2122, 0.0
    %v2134 = vsel %vm2110, %v2124, 0.0
    %v2135 = vsel %vm2111, %v2126, 0.0
    %v2136 = vsel %vm2112, %v2128, 0.0
    %v2137 = vadd.f32 %v2097, %v2129
    %v2138 = vadd.f32 %v2098, %v2130
    %v2139 = vadd.f32 %v2099, %v2131
    %v2140 = vadd.f32 %v2100, %v2132
    %v2141 = vadd.f32 %v2101, %v2133
    %v2142 = vadd.f32 %v2102, %v2134
    %v2143 = vadd.f32 %v2103, %v2135
    %v2144 = vadd.f32 %v2104, %v2136
    %vm2145 = vcmp.eq.s32.totalorder %v2081, 2
    %vm2146 = vcmp.eq.s32.totalorder %v2082, 2
    %vm2147 = vcmp.eq.s32.totalorder %v2083, 2
    %vm2148 = vcmp.eq.s32.totalorder %v2084, 2
    %vm2149 = vcmp.eq.s32.totalorder %v2085, 2
    %vm2150 = vcmp.eq.s32.totalorder %v2086, 2
    %vm2151 = vcmp.eq.s32.totalorder %v2087, 2
    %vm2152 = vcmp.eq.s32.totalorder %v2088, 2
    %2153 = vrot.lane.b32.xlu0 %v2065, 50
    %v2154 = vpop.permute.xlu0 %2153
    %2155 = vrot.lane.b32.xlu0 %v2066, 50
    %v2156 = vpop.permute.xlu0 %2155
    %2157 = vrot.lane.b32.xlu0 %v2067, 50
    %v2158 = vpop.permute.xlu0 %2157
    %2159 = vrot.lane.b32.xlu0 %v2068, 50
    %v2160 = vpop.permute.xlu0 %2159
    %2161 = vrot.lane.b32.xlu0 %v2069, 50
    %v2162 = vpop.permute.xlu0 %2161
    %2163 = vrot.lane.b32.xlu0 %v2070, 50
    %v2164 = vpop.permute.xlu0 %2163
    %2165 = vrot.lane.b32.xlu0 %v2071, 50
    %v2166 = vpop.permute.xlu0 %2165
    %2167 = vrot.lane.b32.xlu0 %v2072, 50
    %v2168 = vpop.permute.xlu0 %2167
    %v2169 = vsel %vm2145, %v2154, 0.0
    %v2170 = vsel %vm2146, %v2156, 0.0
    %v2171 = vsel %vm2147, %v2158, 0.0
    %v2172 = vsel %vm2148, %v2160, 0.0
    %v2173 = vsel %vm2149, %v2162, 0.0
    %v2174 = vsel %vm2150, %v2164, 0.0
    %v2175 = vsel %vm2151, %v2166, 0.0
    %v2176 = vsel %vm2152, %v2168, 0.0
    %v2177 = vadd.f32 %v2137, %v2169
    %v2178 = vadd.f32 %v2138, %v2170
    %v2179 = vadd.f32 %v2139, %v2171
    %v2180 = vadd.f32 %v2140, %v2172
    %v2181 = vadd.f32 %v2141, %v2173
    %v2182 = vadd.f32 %v2142, %v2174
    %v2183 = vadd.f32 %v2143, %v2175
    %v2184 = vadd.f32 %v2144, %v2176
    %vm2185 = vcmp.eq.s32.totalorder %v2081, 3
    %vm2186 = vcmp.eq.s32.totalorder %v2082, 3
    %vm2187 = vcmp.eq.s32.totalorder %v2083, 3
    %vm2188 = vcmp.eq.s32.totalorder %v2084, 3
    %vm2189 = vcmp.eq.s32.totalorder %v2085, 3
    %vm2190 = vcmp.eq.s32.totalorder %v2086, 3
    %vm2191 = vcmp.eq.s32.totalorder %v2087, 3
    %vm2192 = vcmp.eq.s32.totalorder %v2088, 3
    %2193 = vrot.lane.b32.xlu0 %v2065, 75
    %v2194 = vpop.permute.xlu0 %2193
    %2195 = vrot.lane.b32.xlu0 %v2066, 75
    %v2196 = vpop.permute.xlu0 %2195
    %2197 = vrot.lane.b32.xlu0 %v2067, 75
    %v2198 = vpop.permute.xlu0 %2197
    %2199 = vrot.lane.b32.xlu0 %v2068, 75
    %v2200 = vpop.permute.xlu0 %2199
    %2201 = vrot.lane.b32.xlu0 %v2069, 75
    %v2202 = vpop.permute.xlu0 %2201
    %2203 = vrot.lane.b32.xlu0 %v2070, 75
    %v2204 = vpop.permute.xlu0 %2203
    %2205 = vrot.lane.b32.xlu0 %v2071, 75
    %v2206 = vpop.permute.xlu0 %2205
    %2207 = vrot.lane.b32.xlu0 %v2072, 75
    %v2208 = vpop.permute.xlu0 %2207
    %v2209 = vsel %vm2185, %v2194, 0.0
    %v2210 = vsel %vm2186, %v2196, 0.0
    %v2211 = vsel %vm2187, %v2198, 0.0
    %v2212 = vsel %vm2188, %v2200, 0.0
    %v2213 = vsel %vm2189, %v2202, 0.0
    %v2214 = vsel %vm2190, %v2204, 0.0
    %v2215 = vsel %vm2191, %v2206, 0.0
    %v2216 = vsel %vm2192, %v2208, 0.0
    %v2217 = vadd.f32 %v2177, %v2209
    %v2218 = vadd.f32 %v2178, %v2210
    %v2219 = vadd.f32 %v2179, %v2211
    %v2220 = vadd.f32 %v2180, %v2212
    %v2221 = vadd.f32 %v2181, %v2213
    %v2222 = vadd.f32 %v2182, %v2214
    %v2223 = vadd.f32 %v2183, %v2215
    %v2224 = vadd.f32 %v2184, %v2216
    %v2225 = vld [vmem:[#allocation7] sm:$0xff]
    %v2226 = vld [vmem:[#allocation7 + $0x8] sm:$0xff]
    %v2227 = vld [vmem:[#allocation7 + $0x10] sm:$0xff]
    %v2228 = vld [vmem:[#allocation7 + $0x18] sm:$0xff]
    %v2229 = vld [vmem:[#allocation7 + $0x20] sm:$0xff]
    %v2230 = vld [vmem:[#allocation7 + $0x28] sm:$0xff]
    %v2231 = vld [vmem:[#allocation7 + $0x30] sm:$0xff]
    %v2232 = vld [vmem:[#allocation7 + $0x38] sm:$0xff]
    %v2233 = vld [vmem:[#allocation7 + $0x40] sm:$0xff]
    %v2234 = vld [vmem:[#allocation7 + $0x48] sm:$0xff]
    %v2235 = vld [vmem:[#allocation7 + $0x50] sm:$0xff]
    %v2236 = vld [vmem:[#allocation7 + $0x58] sm:$0xff]
    %v2237 = vld [vmem:[#allocation7 + $0x60] sm:$0xff]
    %v2238 = vld [vmem:[#allocation7 + $0x68] sm:$0xff]
    %v2239 = vld [vmem:[#allocation7 + $0x70] sm:$0xff]
    %v2240 = vld [vmem:[#allocation7 + $0x78] sm:$0xff]
    %s2241 = scalar_lea.vmem [#allocation7], 128
    %v2242 = vld [vmem:[%s2241] sm:$0xff]
    %v2243 = vld [vmem:[%s2241 + $0x8] sm:$0xff]
    %v2244 = vld [vmem:[%s2241 + $0x10] sm:$0xff]
    %v2245 = vld [vmem:[%s2241 + $0x18] sm:$0xff]
    %v2246 = vld [vmem:[%s2241 + $0x20] sm:$0xff]
    %v2247 = vld [vmem:[%s2241 + $0x28] sm:$0xff]
    %v2248 = vld [vmem:[%s2241 + $0x30] sm:$0xff]
    %v2249 = vld [vmem:[%s2241 + $0x38] sm:$0xff]
    %v2250 = vld [vmem:[%s2241 + $0x40] sm:$0xff]
    %v2251 = vld [vmem:[%s2241 + $0x48] sm:$0xff]
    %v2252 = vld [vmem:[%s2241 + $0x50] sm:$0xff]
    %v2253 = vld [vmem:[%s2241 + $0x58] sm:$0xff]
    %v2254 = vld [vmem:[%s2241 + $0x60] sm:$0xff]
    %v2255 = vld [vmem:[%s2241 + $0x68] sm:$0xff]
    %v2256 = vld [vmem:[%s2241 + $0x70] sm:$0xff]
    %v2257 = vld [vmem:[%s2241 + $0x78] sm:$0xff]
    %2258 = vmatprep.subr.mxu0 0.0
    %2259 = vmatpush1.msra.mxu0 %v2257
    %2260 = vmatprep.subr.mxu0 0.0
    %2261 = vmatpush1.msra.mxu0 %v2256
    %2262 = vmatprep.subr.mxu0 0.0
    %2263 = vmatpush1.msra.mxu0 %v2255
    %2264 = vmatprep.subr.mxu0 0.0
    %2265 = vmatpush1.msra.mxu0 %v2254
    %2266 = vmatprep.subr.mxu0 0.0
    %2267 = vmatpush1.msra.mxu0 %v2253
    %2268 = vmatprep.subr.mxu0 0.0
    %2269 = vmatpush1.msra.mxu0 %v2252
    %2270 = vmatprep.subr.mxu0 0.0
    %2271 = vmatpush1.msra.mxu0 %v2251
    %2272 = vmatprep.subr.mxu0 0.0
    %2273 = vmatpush1.msra.mxu0 %v2250
    %2274 = vmatprep.subr.mxu0 0.0
    %2275 = vmatpush1.msra.mxu0 %v2249
    %2276 = vmatprep.subr.mxu0 0.0
    %2277 = vmatpush1.msra.mxu0 %v2248
    %2278 = vmatprep.subr.mxu0 0.0
    %2279 = vmatpush1.msra.mxu0 %v2247
    %2280 = vmatprep.subr.mxu0 0.0
    %2281 = vmatpush1.msra.mxu0 %v2246
    %2282 = vmatprep.subr.mxu0 0.0
    %2283 = vmatpush1.msra.mxu0 %v2245
    %2284 = vmatprep.subr.mxu0 0.0
    %2285 = vmatpush1.msra.mxu0 %v2244
    %2286 = vmatprep.subr.mxu0 0.0
    %2287 = vmatpush1.msra.mxu0 %v2243
    %2288 = vmatprep.subr.mxu0 0.0
    %2289 = vmatpush1.msra.mxu0 %v2242
    %2290 = vmatprep.subr.mxu0 0.0
    %2291 = vmatpush2.msra.mxu0 0.0
    %2292 = vmatprep.subr.mxu0 0.0
    %2293 = vmatpush2.msra.mxu0 0.0
    %2294 = vmatprep.subr.mxu0 0.0
    %2295 = vmatpush2.msra.mxu0 0.0
    %2296 = vmatprep.subr.mxu0 0.0
    %2297 = vmatpush2.msra.mxu0 0.0
    %2298 = vmatprep.subr.mxu0 0.0
    %2299 = vmatpush2.msra.mxu0 0.0
    %2300 = vmatprep.subr.mxu0 0.0
    %2301 = vmatpush2.msra.mxu0 0.0
    %2302 = vmatprep.subr.mxu0 0.0
    %2303 = vmatpush2.msra.mxu0 0.0
    %2304 = vmatprep.subr.mxu0 0.0
    %2305 = vmatpush2.msra.mxu0 0.0
    %2306 = vmatprep.subr.mxu0 0.0
    %2307 = vmatpush2.msra.mxu0 0.0
    %2308 = vmatprep.subr.mxu0 0.0
    %2309 = vmatpush2.msra.mxu0 0.0
    %2310 = vmatprep.subr.mxu0 0.0
    %2311 = vmatpush2.msra.mxu0 0.0
    %2312 = vmatprep.subr.mxu0 0.0
    %2313 = vmatpush2.msra.mxu0 0.0
    %2314 = vmatprep.subr.mxu0 0.0
    %2315 = vmatpush2.msra.mxu0 0.0
    %2316 = vmatprep.subr.mxu0 0.0
    %2317 = vmatpush2.msra.mxu0 0.0
    %2318 = vmatprep.subr.mxu0 0.0
    %2319 = vmatpush2.msra.mxu0 0.0
    %2320 = vmatprep.subr.mxu0 0.0
    %2321 = vmatpush2.msra.mxu0 0.0
    %2322 = vmatprep.mubr.f32.mxu0 0.0
    %2323 = vmatmul.mubr.f32.gmra.mxu0 %v2218
    %v2324 = vpop.f32.mrf.mxu0
    %v2325 = vadd.f32 0.0, %v2324
    %v2326 = vpop.f32.mrf.mxu0
    %2327 = vdwg.mxu0
    %2328 = vmatprep.subr.mxu0 0.0
    %2329 = vmatpush1.msra.mxu0 %v2240
    %2330 = vmatprep.subr.mxu0 0.0
    %2331 = vmatpush1.msra.mxu0 %v2239
    %2332 = vmatprep.subr.mxu0 0.0
    %2333 = vmatpush1.msra.mxu0 %v2238
    %2334 = vmatprep.subr.mxu0 0.0
    %2335 = vmatpush1.msra.mxu0 %v2237
    %2336 = vmatprep.subr.mxu0 0.0
    %2337 = vmatpush1.msra.mxu0 %v2236
    %2338 = vmatprep.subr.mxu0 0.0
    %2339 = vmatpush1.msra.mxu0 %v2235
    %2340 = vmatprep.subr.mxu0 0.0
    %2341 = vmatpush1.msra.mxu0 %v2234
    %2342 = vmatprep.subr.mxu0 0.0
    %2343 = vmatpush1.msra.mxu0 %v2233
    %2344 = vmatprep.subr.mxu0 0.0
    %2345 = vmatpush1.msra.mxu0 %v2232
    %2346 = vmatprep.subr.mxu0 0.0
    %2347 = vmatpush1.msra.mxu0 %v2231
    %2348 = vmatprep.subr.mxu0 0.0
    %2349 = vmatpush1.msra.mxu0 %v2230
    %2350 = vmatprep.subr.mxu0 0.0
    %2351 = vmatpush1.msra.mxu0 %v2229
    %2352 = vmatprep.subr.mxu0 0.0
    %2353 = vmatpush1.msra.mxu0 %v2228
    %2354 = vmatprep.subr.mxu0 0.0
    %2355 = vmatpush1.msra.mxu0 %v2227
    %2356 = vmatprep.subr.mxu0 0.0
    %2357 = vmatpush1.msra.mxu0 %v2226
    %2358 = vmatprep.subr.mxu0 0.0
    %2359 = vmatpush1.msra.mxu0 %v2225
    %2360 = vmatprep.subr.mxu0 0.0
    %2361 = vmatpush2.msra.mxu0 0.0
    %2362 = vmatprep.subr.mxu0 0.0
    %2363 = vmatpush2.msra.mxu0 0.0
    %2364 = vmatprep.subr.mxu0 0.0
    %2365 = vmatpush2.msra.mxu0 0.0
    %2366 = vmatprep.subr.mxu0 0.0
    %2367 = vmatpush2.msra.mxu0 0.0
    %2368 = vmatprep.subr.mxu0 0.0
    %2369 = vmatpush2.msra.mxu0 0.0
    %2370 = vmatprep.subr.mxu0 0.0
    %2371 = vmatpush2.msra.mxu0 0.0
    %2372 = vmatprep.subr.mxu0 0.0
    %2373 = vmatpush2.msra.mxu0 0.0
    %2374 = vmatprep.subr.mxu0 0.0
    %2375 = vmatpush2.msra.mxu0 0.0
    %2376 = vmatprep.subr.mxu0 0.0
    %2377 = vmatpush2.msra.mxu0 0.0
    %2378 = vmatprep.subr.mxu0 0.0
    %2379 = vmatpush2.msra.mxu0 0.0
    %2380 = vmatprep.subr.mxu0 0.0
    %2381 = vmatpush2.msra.mxu0 0.0
    %2382 = vmatprep.subr.mxu0 0.0
    %2383 = vmatpush2.msra.mxu0 0.0
    %2384 = vmatprep.subr.mxu0 0.0
    %2385 = vmatpush2.msra.mxu0 0.0
    %2386 = vmatprep.subr.mxu0 0.0
    %2387 = vmatpush2.msra.mxu0 0.0
    %2388 = vmatprep.subr.mxu0 0.0
    %2389 = vmatpush2.msra.mxu0 0.0
    %2390 = vmatprep.subr.mxu0 0.0
    %2391 = vmatpush2.msra.mxu0 0.0
    %2392 = vmatprep.mubr.f32.mxu0 0.0
    %2393 = vmatmul.mubr.f32.gmra.mxu0 %v2217
    %v2394 = vpop.f32.mrf.mxu0
    %v2395 = vadd.f32 %v2325, %v2394
    %v2396 = vpop.f32.mrf.mxu0
    %2397 = vdwg.mxu0
    %s2398 = scalar_lea.vmem [#allocation7], 256
    %v2399 = vld [vmem:[%s2398] sm:$0xff]
    %v2400 = vld [vmem:[%s2398 + $0x8] sm:$0xff]
    %v2401 = vld [vmem:[%s2398 + $0x10] sm:$0xff]
    %v2402 = vld [vmem:[%s2398 + $0x18] sm:$0xff]
    %v2403 = vld [vmem:[%s2398 + $0x20] sm:$0xff]
    %v2404 = vld [vmem:[%s2398 + $0x28] sm:$0xff]
    %v2405 = vld [vmem:[%s2398 + $0x30] sm:$0xff]
    %v2406 = vld [vmem:[%s2398 + $0x38] sm:$0xff]
    %v2407 = vld [vmem:[%s2398 + $0x40] sm:$0xff]
    %v2408 = vld [vmem:[%s2398 + $0x48] sm:$0xff]
    %v2409 = vld [vmem:[%s2398 + $0x50] sm:$0xff]
    %v2410 = vld [vmem:[%s2398 + $0x58] sm:$0xff]
    %v2411 = vld [vmem:[%s2398 + $0x60] sm:$0xff]
    %v2412 = vld [vmem:[%s2398 + $0x68] sm:$0xff]
    %v2413 = vld [vmem:[%s2398 + $0x70] sm:$0xff]
    %v2414 = vld [vmem:[%s2398 + $0x78] sm:$0xff]
    %2415 = vmatprep.subr.mxu0 0.0
    %2416 = vmatpush1.msra.mxu0 %v2414
    %2417 = vmatprep.subr.mxu0 0.0
    %2418 = vmatpush1.msra.mxu0 %v2413
    %2419 = vmatprep.subr.mxu0 0.0
    %2420 = vmatpush1.msra.mxu0 %v2412
    %2421 = vmatprep.subr.mxu0 0.0
    %2422 = vmatpush1.msra.mxu0 %v2411
    %2423 = vmatprep.subr.mxu0 0.0
    %2424 = vmatpush1.msra.mxu0 %v2410
    %2425 = vmatprep.subr.mxu0 0.0
    %2426 = vmatpush1.msra.mxu0 %v2409
    %2427 = vmatprep.subr.mxu0 0.0
    %2428 = vmatpush1.msra.mxu0 %v2408
    %2429 = vmatprep.subr.mxu0 0.0
    %2430 = vmatpush1.msra.mxu0 %v2407
    %2431 = vmatprep.subr.mxu0 0.0
    %2432 = vmatpush1.msra.mxu0 %v2406
    %2433 = vmatprep.subr.mxu0 0.0
    %2434 = vmatpush1.msra.mxu0 %v2405
    %2435 = vmatprep.subr.mxu0 0.0
    %2436 = vmatpush1.msra.mxu0 %v2404
    %2437 = vmatprep.subr.mxu0 0.0
    %2438 = vmatpush1.msra.mxu0 %v2403
    %2439 = vmatprep.subr.mxu0 0.0
    %2440 = vmatpush1.msra.mxu0 %v2402
    %2441 = vmatprep.subr.mxu0 0.0
    %2442 = vmatpush1.msra.mxu0 %v2401
    %2443 = vmatprep.subr.mxu0 0.0
    %2444 = vmatpush1.msra.mxu0 %v2400
    %2445 = vmatprep.subr.mxu0 0.0
    %2446 = vmatpush1.msra.mxu0 %v2399
    %2447 = vmatprep.subr.mxu0 0.0
    %2448 = vmatpush2.msra.mxu0 0.0
    %2449 = vmatprep.subr.mxu0 0.0
    %2450 = vmatpush2.msra.mxu0 0.0
    %2451 = vmatprep.subr.mxu0 0.0
    %2452 = vmatpush2.msra.mxu0 0.0
    %2453 = vmatprep.subr.mxu0 0.0
    %2454 = vmatpush2.msra.mxu0 0.0
    %2455 = vmatprep.subr.mxu0 0.0
    %2456 = vmatpush2.msra.mxu0 0.0
    %2457 = vmatprep.subr.mxu0 0.0
    %2458 = vmatpush2.msra.mxu0 0.0
    %2459 = vmatprep.subr.mxu0 0.0
    %2460 = vmatpush2.msra.mxu0 0.0
    %2461 = vmatprep.subr.mxu0 0.0
    %2462 = vmatpush2.msra.mxu0 0.0
    %2463 = vmatprep.subr.mxu0 0.0
    %2464 = vmatpush2.msra.mxu0 0.0
    %2465 = vmatprep.subr.mxu0 0.0
    %2466 = vmatpush2.msra.mxu0 0.0
    %2467 = vmatprep.subr.mxu0 0.0
    %2468 = vmatpush2.msra.mxu0 0.0
    %2469 = vmatprep.subr.mxu0 0.0
    %2470 = vmatpush2.msra.mxu0 0.0
    %2471 = vmatprep.subr.mxu0 0.0
    %2472 = vmatpush2.msra.mxu0 0.0
    %2473 = vmatprep.subr.mxu0 0.0
    %2474 = vmatpush2.msra.mxu0 0.0
    %2475 = vmatprep.subr.mxu0 0.0
    %2476 = vmatpush2.msra.mxu0 0.0
    %2477 = vmatprep.subr.mxu0 0.0
    %2478 = vmatpush2.msra.mxu0 0.0
    %2479 = vmatprep.mubr.f32.mxu0 0.0
    %2480 = vmatmul.mubr.f32.gmra.mxu0 %v2219
    %v2481 = vpop.f32.mrf.mxu0
    %v2482 = vadd.f32 0.0, %v2481
    %v2483 = vpop.f32.mrf.mxu0
    %2484 = vdwg.mxu0
    %v2485 = vadd.f32 %v2395, %v2482
    %s2486 = scalar_lea.vmem [#allocation7], 384
    %v2487 = vld [vmem:[%s2486] sm:$0xff]
    %v2488 = vld [vmem:[%s2486 + $0x8] sm:$0xff]
    %v2489 = vld [vmem:[%s2486 + $0x10] sm:$0xff]
    %v2490 = vld [vmem:[%s2486 + $0x18] sm:$0xff]
    %v2491 = vld [vmem:[%s2486 + $0x20] sm:$0xff]
    %v2492 = vld [vmem:[%s2486 + $0x28] sm:$0xff]
    %v2493 = vld [vmem:[%s2486 + $0x30] sm:$0xff]
    %v2494 = vld [vmem:[%s2486 + $0x38] sm:$0xff]
    %v2495 = vld [vmem:[%s2486 + $0x40] sm:$0xff]
    %v2496 = vld [vmem:[%s2486 + $0x48] sm:$0xff]
    %v2497 = vld [vmem:[%s2486 + $0x50] sm:$0xff]
    %v2498 = vld [vmem:[%s2486 + $0x58] sm:$0xff]
    %v2499 = vld [vmem:[%s2486 + $0x60] sm:$0xff]
    %v2500 = vld [vmem:[%s2486 + $0x68] sm:$0xff]
    %v2501 = vld [vmem:[%s2486 + $0x70] sm:$0xff]
    %v2502 = vld [vmem:[%s2486 + $0x78] sm:$0xff]
    %2503 = vmatprep.subr.mxu0 0.0
    %2504 = vmatpush1.msra.mxu0 %v2502
    %2505 = vmatprep.subr.mxu0 0.0
    %2506 = vmatpush1.msra.mxu0 %v2501
    %2507 = vmatprep.subr.mxu0 0.0
    %2508 = vmatpush1.msra.mxu0 %v2500
    %2509 = vmatprep.subr.mxu0 0.0
    %2510 = vmatpush1.msra.mxu0 %v2499
    %2511 = vmatprep.subr.mxu0 0.0
    %2512 = vmatpush1.msra.mxu0 %v2498
    %2513 = vmatprep.subr.mxu0 0.0
    %2514 = vmatpush1.msra.mxu0 %v2497
    %2515 = vmatprep.subr.mxu0 0.0
    %2516 = vmatpush1.msra.mxu0 %v2496
    %2517 = vmatprep.subr.mxu0 0.0
    %2518 = vmatpush1.msra.mxu0 %v2495
    %2519 = vmatprep.subr.mxu0 0.0
    %2520 = vmatpush1.msra.mxu0 %v2494
    %2521 = vmatprep.subr.mxu0 0.0
    %2522 = vmatpush1.msra.mxu0 %v2493
    %2523 = vmatprep.subr.mxu0 0.0
    %2524 = vmatpush1.msra.mxu0 %v2492
    %2525 = vmatprep.subr.mxu0 0.0
    %2526 = vmatpush1.msra.mxu0 %v2491
    %2527 = vmatprep.subr.mxu0 0.0
    %2528 = vmatpush1.msra.mxu0 %v2490
    %2529 = vmatprep.subr.mxu0 0.0
    %2530 = vmatpush1.msra.mxu0 %v2489
    %2531 = vmatprep.subr.mxu0 0.0
    %2532 = vmatpush1.msra.mxu0 %v2488
    %2533 = vmatprep.subr.mxu0 0.0
    %2534 = vmatpush1.msra.mxu0 %v2487
    %2535 = vmatprep.subr.mxu0 0.0
    %2536 = vmatpush2.msra.mxu0 0.0
    %2537 = vmatprep.subr.mxu0 0.0
    %2538 = vmatpush2.msra.mxu0 0.0
    %2539 = vmatprep.subr.mxu0 0.0
    %2540 = vmatpush2.msra.mxu0 0.0
    %2541 = vmatprep.subr.mxu0 0.0
    %2542 = vmatpush2.msra.mxu0 0.0
    %2543 = vmatprep.subr.mxu0 0.0
    %2544 = vmatpush2.msra.mxu0 0.0
    %2545 = vmatprep.subr.mxu0 0.0
    %2546 = vmatpush2.msra.mxu0 0.0
    %2547 = vmatprep.subr.mxu0 0.0
    %2548 = vmatpush2.msra.mxu0 0.0
    %2549 = vmatprep.subr.mxu0 0.0
    %2550 = vmatpush2.msra.mxu0 0.0
    %2551 = vmatprep.subr.mxu0 0.0
    %2552 = vmatpush2.msra.mxu0 0.0
    %2553 = vmatprep.subr.mxu0 0.0
    %2554 = vmatpush2.msra.mxu0 0.0
    %2555 = vmatprep.subr.mxu0 0.0
    %2556 = vmatpush2.msra.mxu0 0.0
    %2557 = vmatprep.subr.mxu0 0.0
    %2558 = vmatpush2.msra.mxu0 0.0
    %2559 = vmatprep.subr.mxu0 0.0
    %2560 = vmatpush2.msra.mxu0 0.0
    %2561 = vmatprep.subr.mxu0 0.0
    %2562 = vmatpush2.msra.mxu0 0.0
    %2563 = vmatprep.subr.mxu0 0.0
    %2564 = vmatpush2.msra.mxu0 0.0
    %2565 = vmatprep.subr.mxu0 0.0
    %2566 = vmatpush2.msra.mxu0 0.0
    %2567 = vmatprep.mubr.f32.mxu0 0.0
    %2568 = vmatmul.mubr.f32.gmra.mxu0 %v2220
    %v2569 = vpop.f32.mrf.mxu0
    %v2570 = vadd.f32 0.0, %v2569
    %v2571 = vpop.f32.mrf.mxu0
    %2572 = vdwg.mxu0
    %v2573 = vadd.f32 %v2485, %v2570
    %s2574 = scalar_lea.vmem [#allocation7], 512
    %v2575 = vld [vmem:[%s2574] sm:$0xff]
    %v2576 = vld [vmem:[%s2574 + $0x8] sm:$0xff]
    %v2577 = vld [vmem:[%s2574 + $0x10] sm:$0xff]
    %v2578 = vld [vmem:[%s2574 + $0x18] sm:$0xff]
    %v2579 = vld [vmem:[%s2574 + $0x20] sm:$0xff]
    %v2580 = vld [vmem:[%s2574 + $0x28] sm:$0xff]
    %v2581 = vld [vmem:[%s2574 + $0x30] sm:$0xff]
    %v2582 = vld [vmem:[%s2574 + $0x38] sm:$0xff]
    %v2583 = vld [vmem:[%s2574 + $0x40] sm:$0xff]
    %v2584 = vld [vmem:[%s2574 + $0x48] sm:$0xff]
    %v2585 = vld [vmem:[%s2574 + $0x50] sm:$0xff]
    %v2586 = vld [vmem:[%s2574 + $0x58] sm:$0xff]
    %v2587 = vld [vmem:[%s2574 + $0x60] sm:$0xff]
    %v2588 = vld [vmem:[%s2574 + $0x68] sm:$0xff]
    %v2589 = vld [vmem:[%s2574 + $0x70] sm:$0xff]
    %v2590 = vld [vmem:[%s2574 + $0x78] sm:$0xff]
    %2591 = vmatprep.subr.mxu0 0.0
    %2592 = vmatpush1.msra.mxu0 %v2590
    %2593 = vmatprep.subr.mxu0 0.0
    %2594 = vmatpush1.msra.mxu0 %v2589
    %2595 = vmatprep.subr.mxu0 0.0
    %2596 = vmatpush1.msra.mxu0 %v2588
    %2597 = vmatprep.subr.mxu0 0.0
    %2598 = vmatpush1.msra.mxu0 %v2587
    %2599 = vmatprep.subr.mxu0 0.0
    %2600 = vmatpush1.msra.mxu0 %v2586
    %2601 = vmatprep.subr.mxu0 0.0
    %2602 = vmatpush1.msra.mxu0 %v2585
    %2603 = vmatprep.subr.mxu0 0.0
    %2604 = vmatpush1.msra.mxu0 %v2584
    %2605 = vmatprep.subr.mxu0 0.0
    %2606 = vmatpush1.msra.mxu0 %v2583
    %2607 = vmatprep.subr.mxu0 0.0
    %2608 = vmatpush1.msra.mxu0 %v2582
    %2609 = vmatprep.subr.mxu0 0.0
    %2610 = vmatpush1.msra.mxu0 %v2581
    %2611 = vmatprep.subr.mxu0 0.0
    %2612 = vmatpush1.msra.mxu0 %v2580
    %2613 = vmatprep.subr.mxu0 0.0
    %2614 = vmatpush1.msra.mxu0 %v2579
    %2615 = vmatprep.subr.mxu0 0.0
    %2616 = vmatpush1.msra.mxu0 %v2578
    %2617 = vmatprep.subr.mxu0 0.0
    %2618 = vmatpush1.msra.mxu0 %v2577
    %2619 = vmatprep.subr.mxu0 0.0
    %2620 = vmatpush1.msra.mxu0 %v2576
    %2621 = vmatprep.subr.mxu0 0.0
    %2622 = vmatpush1.msra.mxu0 %v2575
    %2623 = vmatprep.subr.mxu0 0.0
    %2624 = vmatpush2.msra.mxu0 0.0
    %2625 = vmatprep.subr.mxu0 0.0
    %2626 = vmatpush2.msra.mxu0 0.0
    %2627 = vmatprep.subr.mxu0 0.0
    %2628 = vmatpush2.msra.mxu0 0.0
    %2629 = vmatprep.subr.mxu0 0.0
    %2630 = vmatpush2.msra.mxu0 0.0
    %2631 = vmatprep.subr.mxu0 0.0
    %2632 = vmatpush2.msra.mxu0 0.0
    %2633 = vmatprep.subr.mxu0 0.0
    %2634 = vmatpush2.msra.mxu0 0.0
    %2635 = vmatprep.subr.mxu0 0.0
    %2636 = vmatpush2.msra.mxu0 0.0
    %2637 = vmatprep.subr.mxu0 0.0
    %2638 = vmatpush2.msra.mxu0 0.0
    %2639 = vmatprep.subr.mxu0 0.0
    %2640 = vmatpush2.msra.mxu0 0.0
    %2641 = vmatprep.subr.mxu0 0.0
    %2642 = vmatpush2.msra.mxu0 0.0
    %2643 = vmatprep.subr.mxu0 0.0
    %2644 = vmatpush2.msra.mxu0 0.0
    %2645 = vmatprep.subr.mxu0 0.0
    %2646 = vmatpush2.msra.mxu0 0.0
    %2647 = vmatprep.subr.mxu0 0.0
    %2648 = vmatpush2.msra.mxu0 0.0
    %2649 = vmatprep.subr.mxu0 0.0
    %2650 = vmatpush2.msra.mxu0 0.0
    %2651 = vmatprep.subr.mxu0 0.0
    %2652 = vmatpush2.msra.mxu0 0.0
    %2653 = vmatprep.subr.mxu0 0.0
    %2654 = vmatpush2.msra.mxu0 0.0
    %2655 = vmatprep.mubr.f32.mxu0 0.0
    %2656 = vmatmul.mubr.f32.gmra.mxu0 %v2221
    %v2657 = vpop.f32.mrf.mxu0
    %v2658 = vadd.f32 0.0, %v2657
    %v2659 = vpop.f32.mrf.mxu0
    %2660 = vdwg.mxu0
    %v2661 = vadd.f32 %v2573, %v2658
    %s2662 = scalar_lea.vmem [#allocation7], 640
    %v2663 = vld [vmem:[%s2662] sm:$0xff]
    %v2664 = vld [vmem:[%s2662 + $0x8] sm:$0xff]
    %v2665 = vld [vmem:[%s2662 + $0x10] sm:$0xff]
    %v2666 = vld [vmem:[%s2662 + $0x18] sm:$0xff]
    %v2667 = vld [vmem:[%s2662 + $0x20] sm:$0xff]
    %v2668 = vld [vmem:[%s2662 + $0x28] sm:$0xff]
    %v2669 = vld [vmem:[%s2662 + $0x30] sm:$0xff]
    %v2670 = vld [vmem:[%s2662 + $0x38] sm:$0xff]
    %v2671 = vld [vmem:[%s2662 + $0x40] sm:$0xff]
    %v2672 = vld [vmem:[%s2662 + $0x48] sm:$0xff]
    %v2673 = vld [vmem:[%s2662 + $0x50] sm:$0xff]
    %v2674 = vld [vmem:[%s2662 + $0x58] sm:$0xff]
    %v2675 = vld [vmem:[%s2662 + $0x60] sm:$0xff]
    %v2676 = vld [vmem:[%s2662 + $0x68] sm:$0xff]
    %v2677 = vld [vmem:[%s2662 + $0x70] sm:$0xff]
    %v2678 = vld [vmem:[%s2662 + $0x78] sm:$0xff]
    %2679 = vmatprep.subr.mxu0 0.0
    %2680 = vmatpush1.msra.mxu0 %v2678
    %2681 = vmatprep.subr.mxu0 0.0
    %2682 = vmatpush1.msra.mxu0 %v2677
    %2683 = vmatprep.subr.mxu0 0.0
    %2684 = vmatpush1.msra.mxu0 %v2676
    %2685 = vmatprep.subr.mxu0 0.0
    %2686 = vmatpush1.msra.mxu0 %v2675
    %2687 = vmatprep.subr.mxu0 0.0
    %2688 = vmatpush1.msra.mxu0 %v2674
    %2689 = vmatprep.subr.mxu0 0.0
    %2690 = vmatpush1.msra.mxu0 %v2673
    %2691 = vmatprep.subr.mxu0 0.0
    %2692 = vmatpush1.msra.mxu0 %v2672
    %2693 = vmatprep.subr.mxu0 0.0
    %2694 = vmatpush1.msra.mxu0 %v2671
    %2695 = vmatprep.subr.mxu0 0.0
    %2696 = vmatpush1.msra.mxu0 %v2670
    %2697 = vmatprep.subr.mxu0 0.0
    %2698 = vmatpush1.msra.mxu0 %v2669
    %2699 = vmatprep.subr.mxu0 0.0
    %2700 = vmatpush1.msra.mxu0 %v2668
    %2701 = vmatprep.subr.mxu0 0.0
    %2702 = vmatpush1.msra.mxu0 %v2667
    %2703 = vmatprep.subr.mxu0 0.0
    %2704 = vmatpush1.msra.mxu0 %v2666
    %2705 = vmatprep.subr.mxu0 0.0
    %2706 = vmatpush1.msra.mxu0 %v2665
    %2707 = vmatprep.subr.mxu0 0.0
    %2708 = vmatpush1.msra.mxu0 %v2664
    %2709 = vmatprep.subr.mxu0 0.0
    %2710 = vmatpush1.msra.mxu0 %v2663
    %2711 = vmatprep.subr.mxu0 0.0
    %2712 = vmatpush2.msra.mxu0 0.0
    %2713 = vmatprep.subr.mxu0 0.0
    %2714 = vmatpush2.msra.mxu0 0.0
    %2715 = vmatprep.subr.mxu0 0.0
    %2716 = vmatpush2.msra.mxu0 0.0
    %2717 = vmatprep.subr.mxu0 0.0
    %2718 = vmatpush2.msra.mxu0 0.0
    %2719 = vmatprep.subr.mxu0 0.0
    %2720 = vmatpush2.msra.mxu0 0.0
    %2721 = vmatprep.subr.mxu0 0.0
    %2722 = vmatpush2.msra.mxu0 0.0
    %2723 = vmatprep.subr.mxu0 0.0
    %2724 = vmatpush2.msra.mxu0 0.0
    %2725 = vmatprep.subr.mxu0 0.0
    %2726 = vmatpush2.msra.mxu0 0.0
    %2727 = vmatprep.subr.mxu0 0.0
    %2728 = vmatpush2.msra.mxu0 0.0
    %2729 = vmatprep.subr.mxu0 0.0
    %2730 = vmatpush2.msra.mxu0 0.0
    %2731 = vmatprep.subr.mxu0 0.0
    %2732 = vmatpush2.msra.mxu0 0.0
    %2733 = vmatprep.subr.mxu0 0.0
    %2734 = vmatpush2.msra.mxu0 0.0
    %2735 = vmatprep.subr.mxu0 0.0
    %2736 = vmatpush2.msra.mxu0 0.0
    %2737 = vmatprep.subr.mxu0 0.0
    %2738 = vmatpush2.msra.mxu0 0.0
    %2739 = vmatprep.subr.mxu0 0.0
    %2740 = vmatpush2.msra.mxu0 0.0
    %2741 = vmatprep.subr.mxu0 0.0
    %2742 = vmatpush2.msra.mxu0 0.0
    %2743 = vmatprep.mubr.f32.mxu0 0.0
    %2744 = vmatmul.mubr.f32.gmra.mxu0 %v2222
    %v2745 = vpop.f32.mrf.mxu0
    %v2746 = vadd.f32 0.0, %v2745
    %v2747 = vpop.f32.mrf.mxu0
    %2748 = vdwg.mxu0
    %v2749 = vadd.f32 %v2661, %v2746
    %s2750 = scalar_lea.vmem [#allocation7], 768
    %v2751 = vld [vmem:[%s2750] sm:$0xff]
    %v2752 = vld [vmem:[%s2750 + $0x8] sm:$0xff]
    %v2753 = vld [vmem:[%s2750 + $0x10] sm:$0xff]
    %v2754 = vld [vmem:[%s2750 + $0x18] sm:$0xff]
    %v2755 = vld [vmem:[%s2750 + $0x20] sm:$0xff]
    %v2756 = vld [vmem:[%s2750 + $0x28] sm:$0xff]
    %v2757 = vld [vmem:[%s2750 + $0x30] sm:$0xff]
    %v2758 = vld [vmem:[%s2750 + $0x38] sm:$0xff]
    %v2759 = vld [vmem:[%s2750 + $0x40] sm:$0xff]
    %v2760 = vld [vmem:[%s2750 + $0x48] sm:$0xff]
    %v2761 = vld [vmem:[%s2750 + $0x50] sm:$0xff]
    %v2762 = vld [vmem:[%s2750 + $0x58] sm:$0xff]
    %v2763 = vld [vmem:[%s2750 + $0x60] sm:$0xff]
    %v2764 = vld [vmem:[%s2750 + $0x68] sm:$0xff]
    %v2765 = vld [vmem:[%s2750 + $0x70] sm:$0xff]
    %v2766 = vld [vmem:[%s2750 + $0x78] sm:$0xff]
    %2767 = vmatprep.subr.mxu0 0.0
    %2768 = vmatpush1.msra.mxu0 %v2766
    %2769 = vmatprep.subr.mxu0 0.0
    %2770 = vmatpush1.msra.mxu0 %v2765
    %2771 = vmatprep.subr.mxu0 0.0
    %2772 = vmatpush1.msra.mxu0 %v2764
    %2773 = vmatprep.subr.mxu0 0.0
    %2774 = vmatpush1.msra.mxu0 %v2763
    %2775 = vmatprep.subr.mxu0 0.0
    %2776 = vmatpush1.msra.mxu0 %v2762
    %2777 = vmatprep.subr.mxu0 0.0
    %2778 = vmatpush1.msra.mxu0 %v2761
    %2779 = vmatprep.subr.mxu0 0.0
    %2780 = vmatpush1.msra.mxu0 %v2760
    %2781 = vmatprep.subr.mxu0 0.0
    %2782 = vmatpush1.msra.mxu0 %v2759
    %2783 = vmatprep.subr.mxu0 0.0
    %2784 = vmatpush1.msra.mxu0 %v2758
    %2785 = vmatprep.subr.mxu0 0.0
    %2786 = vmatpush1.msra.mxu0 %v2757
    %2787 = vmatprep.subr.mxu0 0.0
    %2788 = vmatpush1.msra.mxu0 %v2756
    %2789 = vmatprep.subr.mxu0 0.0
    %2790 = vmatpush1.msra.mxu0 %v2755
    %2791 = vmatprep.subr.mxu0 0.0
    %2792 = vmatpush1.msra.mxu0 %v2754
    %2793 = vmatprep.subr.mxu0 0.0
    %2794 = vmatpush1.msra.mxu0 %v2753
    %2795 = vmatprep.subr.mxu0 0.0
    %2796 = vmatpush1.msra.mxu0 %v2752
    %2797 = vmatprep.subr.mxu0 0.0
    %2798 = vmatpush1.msra.mxu0 %v2751
    %2799 = vmatprep.subr.mxu0 0.0
    %2800 = vmatpush2.msra.mxu0 0.0
    %2801 = vmatprep.subr.mxu0 0.0
    %2802 = vmatpush2.msra.mxu0 0.0
    %2803 = vmatprep.subr.mxu0 0.0
    %2804 = vmatpush2.msra.mxu0 0.0
    %2805 = vmatprep.subr.mxu0 0.0
    %2806 = vmatpush2.msra.mxu0 0.0
    %2807 = vmatprep.subr.mxu0 0.0
    %2808 = vmatpush2.msra.mxu0 0.0
    %2809 = vmatprep.subr.mxu0 0.0
    %2810 = vmatpush2.msra.mxu0 0.0
    %2811 = vmatprep.subr.mxu0 0.0
    %2812 = vmatpush2.msra.mxu0 0.0
    %2813 = vmatprep.subr.mxu0 0.0
    %2814 = vmatpush2.msra.mxu0 0.0
    %2815 = vmatprep.subr.mxu0 0.0
    %2816 = vmatpush2.msra.mxu0 0.0
    %2817 = vmatprep.subr.mxu0 0.0
    %2818 = vmatpush2.msra.mxu0 0.0
    %2819 = vmatprep.subr.mxu0 0.0
    %2820 = vmatpush2.msra.mxu0 0.0
    %2821 = vmatprep.subr.mxu0 0.0
    %2822 = vmatpush2.msra.mxu0 0.0
    %2823 = vmatprep.subr.mxu0 0.0
    %2824 = vmatpush2.msra.mxu0 0.0
    %2825 = vmatprep.subr.mxu0 0.0
    %2826 = vmatpush2.msra.mxu0 0.0
    %2827 = vmatprep.subr.mxu0 0.0
    %2828 = vmatpush2.msra.mxu0 0.0
    %2829 = vmatprep.subr.mxu0 0.0
    %2830 = vmatpush2.msra.mxu0 0.0
    %2831 = vmatprep.mubr.f32.mxu0 0.0
    %2832 = vmatmul.mubr.f32.gmra.mxu0 %v2223
    %v2833 = vpop.f32.mrf.mxu0
    %v2834 = vadd.f32 0.0, %v2833
    %v2835 = vpop.f32.mrf.mxu0
    %2836 = vdwg.mxu0
    %v2837 = vadd.f32 %v2749, %v2834
    %s2838 = scalar_lea.vmem [#allocation7], 896
    %v2839 = vld [vmem:[%s2838] sm:$0xff]
    %v2840 = vld [vmem:[%s2838 + $0x8] sm:$0xff]
    %v2841 = vld [vmem:[%s2838 + $0x10] sm:$0xff]
    %v2842 = vld [vmem:[%s2838 + $0x18] sm:$0xff]
    %v2843 = vld [vmem:[%s2838 + $0x20] sm:$0xff]
    %v2844 = vld [vmem:[%s2838 + $0x28] sm:$0xff]
    %v2845 = vld [vmem:[%s2838 + $0x30] sm:$0xff]
    %v2846 = vld [vmem:[%s2838 + $0x38] sm:$0xff]
    %v2847 = vld [vmem:[%s2838 + $0x40] sm:$0xff]
    %v2848 = vld [vmem:[%s2838 + $0x48] sm:$0xff]
    %v2849 = vld [vmem:[%s2838 + $0x50] sm:$0xff]
    %v2850 = vld [vmem:[%s2838 + $0x58] sm:$0xff]
    %v2851 = vld [vmem:[%s2838 + $0x60] sm:$0xff]
    %v2852 = vld [vmem:[%s2838 + $0x68] sm:$0xff]
    %v2853 = vld [vmem:[%s2838 + $0x70] sm:$0xff]
    %v2854 = vld [vmem:[%s2838 + $0x78] sm:$0xff]
    %2855 = vmatprep.subr.mxu0 0.0
    %2856 = vmatpush1.msra.mxu0 %v2854
    %2857 = vmatprep.subr.mxu0 0.0
    %2858 = vmatpush1.msra.mxu0 %v2853
    %2859 = vmatprep.subr.mxu0 0.0
    %2860 = vmatpush1.msra.mxu0 %v2852
    %2861 = vmatprep.subr.mxu0 0.0
    %2862 = vmatpush1.msra.mxu0 %v2851
    %2863 = vmatprep.subr.mxu0 0.0
    %2864 = vmatpush1.msra.mxu0 %v2850
    %2865 = vmatprep.subr.mxu0 0.0
    %2866 = vmatpush1.msra.mxu0 %v2849
    %2867 = vmatprep.subr.mxu0 0.0
    %2868 = vmatpush1.msra.mxu0 %v2848
    %2869 = vmatprep.subr.mxu0 0.0
    %2870 = vmatpush1.msra.mxu0 %v2847
    %2871 = vmatprep.subr.mxu0 0.0
    %2872 = vmatpush1.msra.mxu0 %v2846
    %2873 = vmatprep.subr.mxu0 0.0
    %2874 = vmatpush1.msra.mxu0 %v2845
    %2875 = vmatprep.subr.mxu0 0.0
    %2876 = vmatpush1.msra.mxu0 %v2844
    %2877 = vmatprep.subr.mxu0 0.0
    %2878 = vmatpush1.msra.mxu0 %v2843
    %2879 = vmatprep.subr.mxu0 0.0
    %2880 = vmatpush1.msra.mxu0 %v2842
    %2881 = vmatprep.subr.mxu0 0.0
    %2882 = vmatpush1.msra.mxu0 %v2841
    %2883 = vmatprep.subr.mxu0 0.0
    %2884 = vmatpush1.msra.mxu0 %v2840
    %2885 = vmatprep.subr.mxu0 0.0
    %2886 = vmatpush1.msra.mxu0 %v2839
    %2887 = vmatprep.subr.mxu0 0.0
    %2888 = vmatpush2.msra.mxu0 0.0
    %2889 = vmatprep.subr.mxu0 0.0
    %2890 = vmatpush2.msra.mxu0 0.0
    %2891 = vmatprep.subr.mxu0 0.0
    %2892 = vmatpush2.msra.mxu0 0.0
    %2893 = vmatprep.subr.mxu0 0.0
    %2894 = vmatpush2.msra.mxu0 0.0
    %2895 = vmatprep.subr.mxu0 0.0
    %2896 = vmatpush2.msra.mxu0 0.0
    %2897 = vmatprep.subr.mxu0 0.0
    %2898 = vmatpush2.msra.mxu0 0.0
    %2899 = vmatprep.subr.mxu0 0.0
    %2900 = vmatpush2.msra.mxu0 0.0
    %2901 = vmatprep.subr.mxu0 0.0
    %2902 = vmatpush2.msra.mxu0 0.0
    %2903 = vmatprep.subr.mxu0 0.0
    %2904 = vmatpush2.msra.mxu0 0.0
    %2905 = vmatprep.subr.mxu0 0.0
    %2906 = vmatpush2.msra.mxu0 0.0
    %2907 = vmatprep.subr.mxu0 0.0
    %2908 = vmatpush2.msra.mxu0 0.0
    %2909 = vmatprep.subr.mxu0 0.0
    %2910 = vmatpush2.msra.mxu0 0.0
    %2911 = vmatprep.subr.mxu0 0.0
    %2912 = vmatpush2.msra.mxu0 0.0
    %2913 = vmatprep.subr.mxu0 0.0
    %2914 = vmatpush2.msra.mxu0 0.0
    %2915 = vmatprep.subr.mxu0 0.0
    %2916 = vmatpush2.msra.mxu0 0.0
    %2917 = vmatprep.subr.mxu0 0.0
    %2918 = vmatpush2.msra.mxu0 0.0
    %2919 = vmatprep.mubr.f32.mxu0 0.0
    %2920 = vmatmul.mubr.f32.gmra.mxu0 %v2224
    %v2921 = vpop.f32.mrf.mxu0
    %v2922 = vadd.f32 0.0, %v2921
    %v2923 = vpop.f32.mrf.mxu0
    %2924 = vdwg.mxu0
    %v2925 = vadd.f32 %v2837, %v2922
    %v2926 = vrot.slane %v2925, 2
    %v2927 = vadd.f32 %v2925, %v2926
    %v2928 = vrot.slane %v2927, 4
    %v2929 = vadd.f32 %v2927, %v2928
    %v2930 = vld [vmem:[#allocation9 + $0x35] sm:$0x1]
    %v2931 = vlaneseq
    %v2932 = vshrl.u32 %v2931, 7
    %v2933 = vsub.s32 0, %v2932
    %v2934 = vrot.slane %v2930, %v2933
    %v2935 = vadd.f32 %v2929, %v2934
    %vm2936 = vcmp.ge.f32.partialorder %v2935, 0.0
    %v2937 = vmul.f32 %v2935, 0.2
    %v2938 = vsel %vm2936, %v2935, %v2937
    %v2939 = vld [vmem:[#allocation9] sm:$0xff]
    %v2940 = vld [vmem:[#allocation9 + $0x8] sm:$0xff]
    %v2941 = vld [vmem:[#allocation9 + $0x10] sm:$0xff]
    %v2942 = vld [vmem:[#allocation9 + $0x18] sm:$0xff]
    %v2943 = vld [vmem:[#allocation9 + $0x20] sm:$0xff]
    %v2944 = vld [vmem:[#allocation9 + $0x28] sm:$0xff]
    %v2945 = vld [vmem:[#allocation9 + $0x30] sm:$0x3]
    %v2946 = vld [vmem:[#allocation9 + $0x32] sm:$0x1]
    %v2947 = vlaneseq
    %v2948 = vshrl.u32 %v2947, 7
    %v2949 = vsub.s32 0, %v2948
    %v2950 = vrot.slane %v2946, %v2949
    %vm2951 = vcmask 408576
    %v2953 = vsel %vm2951, %v2938, 0
    %vm2955 = vcmask 1041408
    %v2957 = vsel %vm2955, %v2945, 0
    %2959 = vmatprep.subr.mxu0 0.0
    %2960 = vmatpush1.msra.mxu0 0.0
    %2961 = vmatprep.subr.mxu0 0.0
    %2962 = vmatpush1.msra.mxu0 0.0
    %2963 = vmatprep.subr.mxu0 0.0
    %2964 = vmatpush1.msra.mxu0 0.0
    %2965 = vmatprep.subr.mxu0 0.0
    %2966 = vmatpush1.msra.mxu0 0.0
    %2967 = vmatprep.subr.mxu0 0.0
    %2968 = vmatpush1.msra.mxu0 0.0
    %2969 = vmatprep.subr.mxu0 0.0
    %2970 = vmatpush1.msra.mxu0 0.0
    %2971 = vmatprep.subr.mxu0 0.0
    %2972 = vmatpush1.msra.mxu0 0.0
    %2973 = vmatprep.subr.mxu0 0.0
    %2974 = vmatpush1.msra.mxu0 0.0
    %2975 = vmatprep.subr.mxu0 0.0
    %2976 = vmatpush1.msra.mxu0 0.0
    %2977 = vmatprep.subr.mxu0 0.0
    %2978 = vmatpush1.msra.mxu0 %v2957
    %2979 = vmatprep.subr.mxu0 0.0
    %2980 = vmatpush1.msra.mxu0 %v2944
    %2981 = vmatprep.subr.mxu0 0.0
    %2982 = vmatpush1.msra.mxu0 %v2943
    %2983 = vmatprep.subr.mxu0 0.0
    %2984 = vmatpush1.msra.mxu0 %v2942
    %2985 = vmatprep.subr.mxu0 0.0
    %2986 = vmatpush1.msra.mxu0 %v2941
    %2987 = vmatprep.subr.mxu0 0.0
    %2988 = vmatpush1.msra.mxu0 %v2940
    %2989 = vmatprep.subr.mxu0 0.0
    %2990 = vmatpush1.msra.mxu0 %v2939
    %2991 = vmatprep.subr.mxu0 0.0
    %2992 = vmatpush2.msra.mxu0 0.0
    %2993 = vmatprep.subr.mxu0 0.0
    %2994 = vmatpush2.msra.mxu0 0.0
    %2995 = vmatprep.subr.mxu0 0.0
    %2996 = vmatpush2.msra.mxu0 0.0
    %2997 = vmatprep.subr.mxu0 0.0
    %2998 = vmatpush2.msra.mxu0 0.0
    %2999 = vmatprep.subr.mxu0 0.0
    %3000 = vmatpush2.msra.mxu0 0.0
    %3001 = vmatprep.subr.mxu0 0.0
    %3002 = vmatpush2.msra.mxu0 0.0
    %3003 = vmatprep.subr.mxu0 0.0
    %3004 = vmatpush2.msra.mxu0 0.0
    %3005 = vmatprep.subr.mxu0 0.0
    %3006 = vmatpush2.msra.mxu0 0.0
    %3007 = vmatprep.subr.mxu0 0.0
    %3008 = vmatpush2.msra.mxu0 0.0
    %3009 = vmatprep.subr.mxu0 0.0
    %3010 = vmatpush2.msra.mxu0 0.0
    %3011 = vmatprep.subr.mxu0 0.0
    %3012 = vmatpush2.msra.mxu0 0.0
    %3013 = vmatprep.subr.mxu0 0.0
    %3014 = vmatpush2.msra.mxu0 0.0
    %3015 = vmatprep.subr.mxu0 0.0
    %3016 = vmatpush2.msra.mxu0 0.0
    %3017 = vmatprep.subr.mxu0 0.0
    %3018 = vmatpush2.msra.mxu0 0.0
    %3019 = vmatprep.subr.mxu0 0.0
    %3020 = vmatpush2.msra.mxu0 0.0
    %3021 = vmatprep.subr.mxu0 0.0
    %3022 = vmatpush2.msra.mxu0 0.0
    %3023 = vmatprep.mubr.f32.mxu0 0.0
    %3024 = vmatmul.mubr.f32.gmra.mxu0 %v2953
    %v3025 = vpop.f32.mrf.mxu0
    %v3026 = vadd.f32 %v2950, %v3025
    %v3027 = vpop.f32.mrf.mxu0
    %3028 = vdwg.mxu0
    %vm3029 = vcmp.ge.f32.partialorder %v3026, 0.0
    %v3030 = vmul.f32 %v3026, 0.2
    %v3031 = vsel %vm3029, %v3026, %v3030
    %v3032 = vld [vmem:[#allocation9 + $0x33] sm:$0x1]
    %v3033 = vlaneseq
    %v3034 = vshrl.u32 %v3033, 7
    %v3035 = vsub.s32 0, %v3034
    %v3036 = vrot.slane %v3032, %v3035
    %v3037 = vmul.f32 %v3031, %v3036
    %vm3038 = vcmask 115712
    %v3039 = vsel %vm3038, %v3037, 0.0
    %3040 = vadd.xlane.f32.xlu0 %v3039
    %v3041 = vpop.xlane.xlu0 %3040
    %v3042 = vld [vmem:[#allocation9 + $0x34] sm:$0x1]
    %v3043 = vlaneseq
    %v3044 = vshrl.u32 %v3043, 7
    %v3045 = vsub.s32 0, %v3044
    %v3046 = vrot.slane %v3042, %v3045
    %v3047 = vadd.f32 %v3041, %v3046
    %vm3048 = vcmask 1024
    %3049 = vst.msk [vmem:[%s6] sm:$0x3] %vm3048, %v3047
    // Predicated region
    $region46: #{forward.1} parent=1 // pred_check
      _
    $region47: #{forward.1} parent=1 // pred_check_branch
      %3051 = sbr.rel (0) target = $region49
    $region48: #{forward.1} parent=1 // pred_region
      _
    $region49: #{forward.1} parent=1 // pred_fallthru
      _
    // Predicated region
    $region50: #{forward.1} parent=1 // pred_check
      _
    $region51: #{forward.1} parent=1 // pred_check_branch
      %3053 = sbr.rel (0) target = $region53
    $region52: #{forward.1} parent=1 // pred_region
      _
    $region53: #{forward.1} parent=1 // pred_fallthru
      _
    %3054 = vsyncpa [#allocation3], 1
    %3055 = vsyncpa [#allocation5], 1
    %3056 = vsyncpa [#allocation8], 1

</llo_original>
